<compile_context>
chip_gen: v7x
topology: tpu7x:2x2x1
jax: 0.10.0
libtpu: 0.0.40
codegen_flags: <defaults>
</compile_context>

<pallas_src>
import functools

import jax
import jax.numpy as jnp
from jax import lax
from jax.experimental import pallas as pl
from jax.experimental.pallas import tpu as pltpu


# Conservative across generations: v7x has 64 MiB VMEM per TC (32 MiB scoped
# default), v5e/v6e have 128 MiB (16/32 MiB scoped default).
_VMEM_LIMIT_BYTES = 48 * 1024 * 1024
_BLOCK_BUDGET_BYTES = 20 * 1024 * 1024   # target for live, double-buffered blocks


def _round_up(x, m):
    return -(-x // m) * m


def _choose_time_chunk(T, Bp, Hp, budget_bytes=_BLOCK_BUDGET_BYTES):
    """Time chunk for the fused recurrence, sized from double-buffered VMEM."""
    # Per time step (both directions, bf16), double buffered:
    #   Z block: 2 * Bp * 4Hp * 2B,  hm block: 2 * Bp * Hp * 2B
    step_bytes = 2 * (2 * Bp * 4 * Hp * 2 + 2 * Bp * Hp * 2)
    # Resident: W_hh (2, Hp, 4Hp) bf16 + h (bf16) / c (f32) scratch.
    static_bytes = 2 * Hp * 4 * Hp * 2 + 2 * Bp * Hp * (2 + 4)
    avail = max(budget_bytes - static_bytes, step_bytes)
    return int(max(1, min(T, avail // step_bytes)))


def _choose_row_chunk(rows, k, n, budget_bytes=_BLOCK_BUDGET_BYTES):
    """Row chunk for the streaming dense phases (decoupled from the recurrence)."""
    per_row = 2 * (k * 2 + n * 2)            # double-buffered bf16 in + out rows
    static_bytes = k * n * 2 + n * 4          # resident weights + bias
    avail = max(budget_bytes - static_bytes, per_row * 8)
    rc = min(rows, int(avail // per_row))
    if rc >= 256:
        rc = (rc // 256) * 256                # MXU-friendly (256x256 on v6e/v7x)
    else:
        rc = max(8, (rc // 8) * 8)
    return int(min(rows, rc))


def _pad_gate_mat(w, rows_p, h, h_p):
    """w: (rows, 4*h) with gate blocks [i,f,g,o] -> zero-padded (rows_p, 4*h_p)."""
    rows = w.shape[0]
    w4 = w.reshape(rows, 4, h)
    w4 = jnp.pad(w4, ((0, rows_p - rows), (0, 0), (0, h_p - h)))
    return w4.reshape(rows_p, 4 * h_p)


def _pad_gate_bias(b, h, h_p):
    b4 = b.reshape(1, 4, h)
    b4 = jnp.pad(b4, ((0, 0), (0, 0), (0, h_p - h)))
    return b4.reshape(1, 4 * h_p)


# ----------------------------------------------------------------------------
# Kernel 1/3: batched matmul + bias (used for both the hoisted input projection
# X @ W_ih + b and the hoisted output projection H_masked @ W_p + b_p).
# Inputs are bf16, accumulation f32, output bf16 (halves HBM traffic).
# ----------------------------------------------------------------------------
def _proj_bias_kernel(x_ref, w_ref, b_ref, o_ref):
    acc = jnp.dot(x_ref[...], w_ref[...], preferred_element_type=jnp.float32)
    o_ref[...] = (acc + b_ref[...]).astype(o_ref.dtype)


def _dense_pair(x2, w2, b2, row_chunk):
    """x2: (2, rows, K) bf16, w2: (2, K, N) bf16, b2: (2, 1, N) f32 -> (2, rows, N) bf16."""
    _, rows, k = x2.shape
    n_cols = w2.shape[2]
    return pl.pallas_call(
        _proj_bias_kernel,
        out_shape=jax.ShapeDtypeStruct((2, rows, n_cols), jnp.bfloat16),
        grid=(2, pl.cdiv(rows, row_chunk)),
        in_specs=[
            pl.BlockSpec((None, row_chunk, k), lambda d, r: (d, r, 0)),
            pl.BlockSpec((None, k, n_cols), lambda d, r: (d, 0, 0)),
            pl.BlockSpec((None, 1, n_cols), lambda d, r: (d, 0, 0)),
        ],
        out_specs=pl.BlockSpec((None, row_chunk, n_cols), lambda d, r: (d, r, 0)),
        compiler_params=pltpu.CompilerParams(
            dimension_semantics=("parallel", "parallel"),
            vmem_limit_bytes=_VMEM_LIMIT_BYTES),
    )(x2, w2, b2)


# ----------------------------------------------------------------------------
# Kernel 2/3: the LSTM recurrence, both directions fused in one kernel body.
# Only the two small h @ W_hh matmuls and the gate math remain on the serial
# critical path; the two directions' independent chains interleave and fill
# each other's latency bubbles (big win on single-TC v5e/v6e, ~neutral on v7x).
# ----------------------------------------------------------------------------
def _fused_recurrence_kernel(maxlen_ref, minlen_ref, len_ref, z_ref, whh_ref,
                             hm_ref, hf_sc, cf_sc, hb_sc, cb_sc,
                             *, time_chunk, batch_p, hidden_p):
    Tc, Bp, Hp = time_chunk, batch_p, hidden_p
    chunk = pl.program_id(0)

    @pl.when(chunk == 0)
    def _():
        hf_sc[...] = jnp.zeros_like(hf_sc)
        cf_sc[...] = jnp.zeros_like(cf_sc)
        hb_sc[...] = jnp.zeros_like(hb_sc)
        cb_sc[...] = jnp.zeros_like(cb_sc)

    # Steps with t >= max(lengths) are skipped; their outputs are zero (the
    # projection then makes them equal the projection bias, as in PyTorch).
    n_valid = jnp.clip(maxlen_ref[0] - chunk * Tc, 0, Tc)
    # Steps with t < min(lengths) need no length mask at all.
    n_full = jnp.minimum(jnp.clip(minlen_ref[0] - chunk * Tc, 0, Tc), n_valid)

    @pl.when(n_valid < Tc)
    def _():
        hm_ref[...] = jnp.zeros_like(hm_ref)

    # Hoisted out of the loop.
    whh_f = whh_ref[0]            # (Hp, 4Hp) bf16
    whh_b = whh_ref[1]            # (Hp, 4Hp) bf16
    lengths = len_ref[...]        # (Bp, 1)   int32
    z_f = z_ref.at[0]             # (Tc*Bp, 4Hp) bf16 views (zero-cost)
    z_b = z_ref.at[1]
    hm_f = hm_ref.at[0]           # (Tc*Bp, Hp) bf16 views
    hm_b = hm_ref.at[1]

    def gates(z, c_prev):
        # gate order [i, f, g, o]; Hp is a multiple of 128 so slices are lane-aligned
        i_g = jax.nn.sigmoid(z[:, 0 * Hp:1 * Hp])
        f_g = jax.nn.sigmoid(z[:, 1 * Hp:2 * Hp])
        g_g = jnp.tanh(z[:, 2 * Hp:3 * Hp])
        o_g = jax.nn.sigmoid(z[:, 3 * Hp:4 * Hp])
        c_new = f_g * c_prev + i_g * g_g                  # f32 cell math
        h_new = (o_g * jnp.tanh(c_new)).astype(jnp.bfloat16)   # single bf16 cast
        return h_new, c_new

    def make_step(masked):
        def step(t, carry):
            row = pl.multiple_of(t * Bp, 8)
            # --- forward direction ---
            zf = z_f[pl.ds(row, Bp), :].astype(jnp.float32)
            zf = zf + jnp.dot(hf_sc[...], whh_f, preferred_element_type=jnp.float32)
            # --- backward direction (independent chain, interleaves with fwd) ---
            zb = z_b[pl.ds(row, Bp), :].astype(jnp.float32)
            zb = zb + jnp.dot(hb_sc[...], whh_b, preferred_element_type=jnp.float32)
            hf, cf = gates(zf, cf_sc[...])
            hb, cb = gates(zb, cb_sc[...])
            hf_sc[...] = hf
            cf_sc[...] = cf
            hb_sc[...] = hb
            cb_sc[...] = cb
            if masked:
                # pack/pad_packed equivalence: emitted hidden is zero at padded steps
                mask = (chunk * Tc + t) < lengths          # (Bp, 1) bool
                zero = jnp.zeros_like(hf)
                hf = jnp.where(mask, hf, zero)
                hb = jnp.where(mask, hb, zero)
            hm_f[pl.ds(row, Bp), :] = hf
            hm_b[pl.ds(row, Bp), :] = hb
            return carry
        return step

    lax.fori_loop(0, n_full, make_step(False), 0)          # mask-free steps
    lax.fori_loop(n_full, n_valid, make_step(True), 0)     # tail steps (length mask)


def _fused_recurrence(z2, whh2, len_col, max_len, min_len,
                      time_chunk, batch_p, hidden_p):
    rows = z2.shape[1]                                      # == T * batch_p
    n_chunks = pl.cdiv(rows // batch_p, time_chunk)
    kernel = functools.partial(_fused_recurrence_kernel, time_chunk=time_chunk,
                               batch_p=batch_p, hidden_p=hidden_p)
    return pl.pallas_call(
        kernel,
        out_shape=jax.ShapeDtypeStruct((2, rows, hidden_p), jnp.bfloat16),
        grid=(n_chunks,),
        in_specs=[
            pl.BlockSpec(memory_space=pltpu.MemorySpace.SMEM),      # max_len (1,)
            pl.BlockSpec(memory_space=pltpu.MemorySpace.SMEM),      # min_len (1,)
            pl.BlockSpec((batch_p, 1), lambda c: (0, 0)),           # lengths
            pl.BlockSpec((2, time_chunk * batch_p, 4 * hidden_p),
                         lambda c: (0, c, 0)),                      # Z (bf16)
            pl.BlockSpec((2, hidden_p, 4 * hidden_p),
                         lambda c: (0, 0, 0)),                      # W_hh
        ],
        out_specs=pl.BlockSpec((2, time_chunk * batch_p, hidden_p),
                               lambda c: (0, c, 0)),
        scratch_shapes=[pltpu.VMEM((batch_p, hidden_p), jnp.bfloat16),  # h fwd
                        pltpu.VMEM((batch_p, hidden_p), jnp.float32),   # c fwd
                        pltpu.VMEM((batch_p, hidden_p), jnp.bfloat16),  # h bwd
                        pltpu.VMEM((batch_p, hidden_p), jnp.float32)],  # c bwd
        compiler_params=pltpu.CompilerParams(
            dimension_semantics=("arbitrary",),
            vmem_limit_bytes=_VMEM_LIMIT_BYTES),
    )(max_len, min_len, len_col, z2, whh2)


# ----------------------------------------------------------------------------
# ELMo bidirectional stacked encoder (glue: padding, reversal gathers, layers).
# ----------------------------------------------------------------------------
def elmo_lstm_encoder_forward(params, inputs, lengths):
    B, T, D = inputs.shape
    H = params[0]['f'][1].shape[0]
    P = params[0]['f'][3].shape[1]
    assert P == D, "projection_dim == input_dim in ELMoLstmEncoder"

    Dp = _round_up(D, 128)
    Hp = _round_up(H, 128)
    Pp = _round_up(P, 128)                 # == Dp
    Bp = _round_up(B, 8)
    Tc = _choose_time_chunk(T, Bp, Hp)
    rows = T * Bp

    # Dense row chunks are sized independently of the recurrence chunk.
    rc_in = _choose_row_chunk(rows, Dp, 4 * Hp)    # phase 1 (Dp == Pp for all layers)
    rc_out = _choose_row_chunk(rows, Hp, Pp)       # phase 3

    lengths = lengths.astype(jnp.int32)
    # NOTE: as in the PyTorch module, the reversal gather assumes max(lengths) == T.
    t_idx = jnp.arange(T)[None, :]
    rev_idx = jnp.where(t_idx < lengths[:, None], lengths[:, None] - 1 - t_idx, t_idx)

    def time_reverse(x_btd):               # per-example within-length time reversal
        idx = jnp.broadcast_to(rev_idx[:, :, None], x_btd.shape)
        return jnp.take_along_axis(x_btd, idx, axis=1)

    def to_flat(x_btd):                    # (B, T, D) -> time-major flat (T*Bp, Dp) bf16
        x = jnp.transpose(x_btd, (1, 0, 2)).astype(jnp.bfloat16)
        x = jnp.pad(x, ((0, 0), (0, Bp - B), (0, Dp - D)))
        return x.reshape(rows, Dp)

    def from_flat(x_flat):                 # (T*Bp, Pp) bf16 -> (B, T, P) f32
        x = x_flat.reshape(T, Bp, Pp)[:, :B, :P]
        return jnp.transpose(x, (1, 0, 2)).astype(jnp.float32)

    # Transpose/pad once; activations stay time-major+flat+bf16 across the stack.
    x2 = jnp.stack([to_flat(inputs), to_flat(time_reverse(inputs))], axis=0)
    len_col = jnp.zeros((Bp, 1), jnp.int32).at[:B, 0].set(lengths)
    max_len = jnp.max(lengths).astype(jnp.int32).reshape(1)
    min_len = jnp.min(lengths).astype(jnp.int32).reshape(1)

    stacked_fwd, stacked_bwd = [], []
    for layer in params:
        w_ih2 = jnp.stack([_pad_gate_mat(layer[d][0], Dp, H, Hp)
                           for d in ('f', 'b')]).astype(jnp.bfloat16)
        w_hh2 = jnp.stack([_pad_gate_mat(layer[d][1], Hp, H, Hp)
                           for d in ('f', 'b')]).astype(jnp.bfloat16)
        b2 = jnp.stack([_pad_gate_bias(layer[d][2], H, Hp) for d in ('f', 'b')])
        w_p2 = jnp.stack([jnp.pad(layer[d][3], ((0, Hp - H), (0, Pp - P)))
                          for d in ('f', 'b')]).astype(jnp.bfloat16)
        b_p2 = jnp.stack([jnp.pad(layer[d][4], ((0, 0), (0, Pp - P)))
                          for d in ('f', 'b')])

        z2 = _dense_pair(x2, w_ih2, b2, rc_in)                       # (2,T*Bp,4Hp) bf16
        hm2 = _fused_recurrence(z2, w_hh2, len_col, max_len, min_len,
                                Tc, Bp, Hp)                          # (2,T*Bp,Hp) bf16
        y2 = _dense_pair(hm2, w_p2, b_p2, rc_out)                    # (2,T*Bp,Pp) bf16

        stacked_fwd.append(from_flat(y2[0]))
        stacked_bwd.append(time_reverse(from_flat(y2[1])))
        x2 = y2                                                      # feed forward in bf16
    return stacked_fwd, stacked_bwd


# ----------------------------------------------------------------------------
# Pure-JAX reference (correctness check only; mirrors the PyTorch module in f32).
# ----------------------------------------------------------------------------
def _lstm_proj_ref(x, lengths, w_ih, w_hh, b, w_p, b_p):
    B, T, _ = x.shape
    H = w_hh.shape[0]
    h = jnp.zeros((B, H), jnp.float32)
    c = jnp.zeros((B, H), jnp.float32)
    ys = []
    for t in range(T):
        z = x[:, t] @ w_ih + h @ w_hh + b[0]
        i = jax.nn.sigmoid(z[:, :H])
        f = jax.nn.sigmoid(z[:, H:2 * H])
        g = jnp.tanh(z[:, 2 * H:3 * H])
        o = jax.nn.sigmoid(z[:, 3 * H:])
        c = f * c + i * g
        h = o * jnp.tanh(c)
        mask = (t < lengths)[:, None].astype(jnp.float32)
        ys.append((h * mask) @ w_p + b_p[0])
    return jnp.stack(ys, axis=1)


def elmo_lstm_encoder_forward_ref(params, inputs, lengths):
    B, T, _ = inputs.shape
    t_idx = jnp.arange(T)[None, :]
    L = lengths.astype(jnp.int32)[:, None]
    rev_idx = jnp.where(t_idx < L, L - 1 - t_idx, t_idx)

    def time_gather(x):
        idx = jnp.broadcast_to(rev_idx[:, :, None], x.shape)
        return jnp.take_along_axis(x, idx, axis=1)

    fwd_in, bwd_in = inputs, time_gather(inputs)
    sf, sb = [], []
    for layer in params:
        yf = _lstm_proj_ref(fwd_in, lengths, *layer['f'])
        yb = _lstm_proj_ref(bwd_in, lengths, *layer['b'])
        sf.append(yf)
        sb.append(time_gather(yb))
        fwd_in, bwd_in = yf, yb
    return sf, sb


# ----------------------------------------------------------------------------
# Deterministic parameter initialization (shapes follow the PyTorch __init__).
# ----------------------------------------------------------------------------
def init_elmo_params(key, input_dim, hidden_dim, num_layers):
    params = []
    lstm_in = input_dim
    k = float(1.0 / hidden_dim ** 0.5)
    for _ in range(num_layers):
        layer = {}
        for d in ('f', 'b'):
            key, k1, k2, k3, k4, k5, k6 = jax.random.split(key, 7)
            w_ih = jax.random.uniform(k1, (lstm_in, 4 * hidden_dim), jnp.float32, -k, k)
            w_hh = jax.random.uniform(k2, (hidden_dim, 4 * hidden_dim), jnp.float32, -k, k)
            bias = (jax.random.uniform(k3, (1, 4 * hidden_dim), jnp.float32, -k, k)
                    + jax.random.uniform(k4, (1, 4 * hidden_dim), jnp.float32, -k, k))
            w_p = jax.random.uniform(k5, (hidden_dim, input_dim), jnp.float32, -k, k)
            b_p = jax.random.uniform(k6, (1, input_dim), jnp.float32, -k, k)
            layer[d] = (w_ih, w_hh, bias, w_p, b_p)
        params.append(layer)
        lstm_in = input_dim  # projection_dim == input_dim
    return params


if __name__ == "__main__":
    input_dim, hidden_dim, num_layers = 32, 32, 2
    batch, seq = 2, 8

    key = jax.random.PRNGKey(0)
    kp, kx = jax.random.split(key)
    params = init_elmo_params(kp, input_dim, hidden_dim, num_layers)
    inputs = jax.random.normal(kx, (batch, seq, input_dim), jnp.float32)
    # max(lengths) == seq (the PyTorch code implicitly assumes this for the gather)
    lengths = jnp.array([seq, 5], jnp.int32)
    assert int(jnp.max(lengths)) == seq, "reversal gather assumes max(lengths) == T"

    fwd, bwd = jax.jit(elmo_lstm_encoder_forward)(params, inputs, lengths)
    jax.block_until_ready((fwd, bwd))

    fwd_r, bwd_r = elmo_lstm_encoder_forward_ref(params, inputs, lengths)
    for got, want in zip(fwd + bwd, fwd_r + bwd_r):
        assert got.shape == want.shape
        # bf16 MXU operands / bf16 streamed activations (f32 accumulation and gate
        # math) -> loose tolerance vs the f32 reference
        assert jnp.allclose(got, want, atol=5e-2, rtol=5e-2), "mismatch vs reference"

    print("KERNEL_OK")
</pallas_src>

<mosaic_0001>
module attributes {stable_mosaic.version = 11 : i64} {
  func.func @_proj_bias_kernel(%arg0: i32, %arg1: i32, %arg2: memref<1x64x128xbf16, #tpu.memory_space<vmem>>, %arg3: memref<1x128x512xbf16, #tpu.memory_space<vmem>>, %arg4: memref<1x1x512xf32, #tpu.memory_space<vmem>>, %arg5: memref<1x64x512xbf16, #tpu.memory_space<vmem>>) attributes {dimension_semantics = [#tpu.dimension_semantics<parallel>, #tpu.dimension_semantics<parallel>], iteration_bounds = array<i64: 2, 1>, scalar_prefetch = 0 : i64, scratch_operands = 0 : i64, tpu.core_type = #tpu.core_type<tc>, window_params = [{transform_indices = @transform_0, window_bounds = array<i64: 1, 64, 128>}, {transform_indices = @transform_1, window_bounds = array<i64: 1, 128, 512>}, {transform_indices = @transform_2, window_bounds = array<i64: 1, 1, 512>}, {transform_indices = @transform_3, window_bounds = array<i64: 1, 64, 512>}]} {
    %c0 = arith.constant 0 : index
    %c0_0 = arith.constant 0 : index
    %c0_1 = arith.constant 0 : index
    %0 = vector.load %arg2[%c0, %c0_0, %c0_1] : memref<1x64x128xbf16, #tpu.memory_space<vmem>>, vector<1x64x128xbf16>
    %1 = vector.shape_cast %0 : vector<1x64x128xbf16> to vector<64x128xbf16>
    %c0_2 = arith.constant 0 : index
    %c0_3 = arith.constant 0 : index
    %c0_4 = arith.constant 0 : index
    %2 = vector.load %arg3[%c0_2, %c0_3, %c0_4] : memref<1x128x512xbf16, #tpu.memory_space<vmem>>, vector<1x128x512xbf16>
    %3 = vector.shape_cast %2 : vector<1x128x512xbf16> to vector<128x512xbf16>
    %cst = arith.constant dense<0.000000e+00> : vector<64x512xf32>
    %4 = tpu.matmul %1, %3, %cst {dimension_numbers = #tpu.dot_dimension_numbers<[1], [0], [0], [1], [0, 0, 1, 1], [], []>} : vector<64x128xbf16>, vector<128x512xbf16>, vector<64x512xf32> -> vector<64x512xf32>
    %c0_5 = arith.constant 0 : index
    %c0_6 = arith.constant 0 : index
    %c0_7 = arith.constant 0 : index
    %5 = vector.load %arg4[%c0_5, %c0_6, %c0_7] : memref<1x1x512xf32, #tpu.memory_space<vmem>>, vector<1x1x512xf32>
    %6 = vector.shape_cast %5 : vector<1x1x512xf32> to vector<1x512xf32>
    %7 = vector.broadcast %6 : vector<1x512xf32> to vector<64x512xf32>
    %8 = arith.addf %4, %7 : vector<64x512xf32>
    %9 = arith.truncf %8 : vector<64x512xf32> to vector<64x512xbf16>
    %c0_8 = arith.constant 0 : index
    %c0_9 = arith.constant 0 : index
    %c0_10 = arith.constant 0 : index
    %10 = vector.load %arg5[%c0_8, %c0_9, %c0_10] : memref<1x64x512xbf16, #tpu.memory_space<vmem>>, vector<1x64x512xbf16>
    %11 = vector.shape_cast %10 : vector<1x64x512xbf16> to vector<64x512xbf16>
    %12 = vector.shape_cast %9 : vector<64x512xbf16> to vector<1x64x512xbf16>
    tpu.vector_store %arg5[%c0_8, %c0_9, %c0_10], %12 {strides = array<i32>} : memref<1x64x512xbf16, #tpu.memory_space<vmem>>, vector<1x64x512xbf16>,
    return
  }
  func.func @transform_0(%arg0: i32, %arg1: i32) -> (i32, i32, i32) {
    %c0_i32 = arith.constant 0 : i32
    %c0_i32_0 = arith.constant 0 : i32
    return %arg0, %arg1, %c0_i32 : i32, i32, i32
  }
  func.func @transform_1(%arg0: i32, %arg1: i32) -> (i32, i32, i32) {
    %c0_i32 = arith.constant 0 : i32
    %c0_i32_0 = arith.constant 0 : i32
    %c0_i32_1 = arith.constant 0 : i32
    return %arg0, %c0_i32, %c0_i32_0 : i32, i32, i32
  }
  func.func @transform_2(%arg0: i32, %arg1: i32) -> (i32, i32, i32) {
    %c0_i32 = arith.constant 0 : i32
    %c0_i32_0 = arith.constant 0 : i32
    %c0_i32_1 = arith.constant 0 : i32
    return %arg0, %c0_i32, %c0_i32_0 : i32, i32, i32
  }
  func.func @transform_3(%arg0: i32, %arg1: i32) -> (i32, i32, i32) {
    %c0_i32 = arith.constant 0 : i32
    %c0_i32_0 = arith.constant 0 : i32
    return %arg0, %arg1, %c0_i32 : i32, i32, i32
  }
}

module attributes {stable_mosaic.version = 11 : i64} {
  func.func @_fused_recurrence_kernel(%arg0: i32, %arg1: memref<1xi32, #tpu.memory_space<smem>>, %arg2: memref<1xi32, #tpu.memory_space<smem>>, %arg3: memref<8x1xi32, #tpu.memory_space<vmem>>, %arg4: memref<2x64x512xbf16, #tpu.memory_space<vmem>>, %arg5: memref<2x128x512xbf16, #tpu.memory_space<vmem>>, %arg6: memref<2x64x128xbf16, #tpu.memory_space<vmem>>, %arg7: memref<8x128xbf16, #tpu.memory_space<vmem>>, %arg8: memref<8x128xf32, #tpu.memory_space<vmem>>, %arg9: memref<8x128xbf16, #tpu.memory_space<vmem>>, %arg10: memref<8x128xf32, #tpu.memory_space<vmem>>) attributes {dimension_semantics = [#tpu.dimension_semantics<arbitrary>], iteration_bounds = array<i64: 1>, scalar_prefetch = 0 : i64, scratch_operands = 4 : i64, tpu.core_type = #tpu.core_type<tc>, window_params = [{transform_indices = @transform_0, window_bounds = array<i64: 1>}, {transform_indices = @transform_1, window_bounds = array<i64: 1>}, {pipeline_mode = #tpu.pipeline_mode<synchronous>, transform_indices = @transform_2, window_bounds = array<i64: 8, 1>}, {transform_indices = @transform_3, window_bounds = array<i64: 2, 64, 512>}, {pipeline_mode = #tpu.pipeline_mode<synchronous>, transform_indices = @transform_4, window_bounds = array<i64: 2, 128, 512>}, {transform_indices = @transform_5, window_bounds = array<i64: 2, 64, 128>}]} {
    %c0_i32 = arith.constant 0 : i32
    %0 = arith.cmpi eq, %arg0, %c0_i32 : i32
    %1 = arith.extui %0 : i1 to i32
    %c0_i32_0 = arith.constant 0 : i32
    %2 = arith.cmpi ne, %1, %c0_i32_0 : i32
    scf.if %2 {
      %cst = arith.constant 0.000000e+00 : bf16
      %26 = vector.broadcast %cst : bf16 to vector<8x128xbf16>
      %c0_28 = arith.constant 0 : index
      %c0_29 = arith.constant 0 : index
      %27 = vector.load %arg7[%c0_28, %c0_29] : memref<8x128xbf16, #tpu.memory_space<vmem>>, vector<8x128xbf16>
      tpu.vector_store %arg7[%c0_28, %c0_29], %26 {strides = array<i32>} : memref<8x128xbf16, #tpu.memory_space<vmem>>, vector<8x128xbf16>,
      %cst_30 = arith.constant 0.000000e+00 : f32
      %28 = vector.broadcast %cst_30 : f32 to vector<8x128xf32>
      %c0_31 = arith.constant 0 : index
      %c0_32 = arith.constant 0 : index
      %29 = vector.load %arg8[%c0_31, %c0_32] : memref<8x128xf32, #tpu.memory_space<vmem>>, vector<8x128xf32>
      tpu.vector_store %arg8[%c0_31, %c0_32], %28 {strides = array<i32>} : memref<8x128xf32, #tpu.memory_space<vmem>>, vector<8x128xf32>,
      %cst_33 = arith.constant 0.000000e+00 : bf16
      %30 = vector.broadcast %cst_33 : bf16 to vector<8x128xbf16>
      %c0_34 = arith.constant 0 : index
      %c0_35 = arith.constant 0 : index
      %31 = vector.load %arg9[%c0_34, %c0_35] : memref<8x128xbf16, #tpu.memory_space<vmem>>, vector<8x128xbf16>
      tpu.vector_store %arg9[%c0_34, %c0_35], %30 {strides = array<i32>} : memref<8x128xbf16, #tpu.memory_space<vmem>>, vector<8x128xbf16>,
      %cst_36 = arith.constant 0.000000e+00 : f32
      %32 = vector.broadcast %cst_36 : f32 to vector<8x128xf32>
      %c0_37 = arith.constant 0 : index
      %c0_38 = arith.constant 0 : index
      %33 = vector.load %arg10[%c0_37, %c0_38] : memref<8x128xf32, #tpu.memory_space<vmem>>, vector<8x128xf32>
      tpu.vector_store %arg10[%c0_37, %c0_38], %32 {strides = array<i32>} : memref<8x128xf32, #tpu.memory_space<vmem>>, vector<8x128xf32>,
    } else {
    }
    %c0 = arith.constant 0 : index
    %3 = memref.load %arg1[%c0] : memref<1xi32, #tpu.memory_space<smem>>
    %c8_i32 = arith.constant 8 : i32
    %4 = arith.muli %arg0, %c8_i32 : i32
    %5 = arith.subi %3, %4 : i32
    %c0_i32_1 = arith.constant 0 : i32
    %c8_i32_2 = arith.constant 8 : i32
    %6 = arith.maxsi %c0_i32_1, %5 : i32
    %7 = arith.minsi %c8_i32_2, %6 : i32
    %c0_3 = arith.constant 0 : index
    %8 = memref.load %arg2[%c0_3] : memref<1xi32, #tpu.memory_space<smem>>
    %c8_i32_4 = arith.constant 8 : i32
    %9 = arith.muli %arg0, %c8_i32_4 : i32
    %10 = arith.subi %8, %9 : i32
    %c0_i32_5 = arith.constant 0 : i32
    %c8_i32_6 = arith.constant 8 : i32
    %11 = arith.maxsi %c0_i32_5, %10 : i32
    %12 = arith.minsi %c8_i32_6, %11 : i32
    %13 = arith.minsi %12, %7 : i32
    %c8_i32_7 = arith.constant 8 : i32
    %14 = arith.cmpi slt, %7, %c8_i32_7 : i32
    %15 = arith.extui %14 : i1 to i32
    %c0_i32_8 = arith.constant 0 : i32
    %16 = arith.cmpi ne, %15, %c0_i32_8 : i32
    scf.if %16 {
      %cst = arith.constant 0.000000e+00 : bf16
      %26 = vector.broadcast %cst : bf16 to vector<2x64x128xbf16>
      %c0_28 = arith.constant 0 : index
      %c0_29 = arith.constant 0 : index
      %c0_30 = arith.constant 0 : index
      %27 = vector.load %arg6[%c0_28, %c0_29, %c0_30] : memref<2x64x128xbf16, #tpu.memory_space<vmem>>, vector<2x64x128xbf16>
      tpu.vector_store %arg6[%c0_28, %c0_29, %c0_30], %26 {strides = array<i32>} : memref<2x64x128xbf16, #tpu.memory_space<vmem>>, vector<2x64x128xbf16>,
    } else {
    }
    %c0_9 = arith.constant 0 : index
    %c0_10 = arith.constant 0 : index
    %c0_11 = arith.constant 0 : index
    %17 = vector.load %arg5[%c0_9, %c0_10, %c0_11] : memref<2x128x512xbf16, #tpu.memory_space<vmem>>, vector<1x128x512xbf16>
    %18 = vector.shape_cast %17 : vector<1x128x512xbf16> to vector<128x512xbf16>
    %c1 = arith.constant 1 : index
    %c0_12 = arith.constant 0 : index
    %c0_13 = arith.constant 0 : index
    %19 = vector.load %arg5[%c1, %c0_12, %c0_13] : memref<2x128x512xbf16, #tpu.memory_space<vmem>>, vector<1x128x512xbf16>
    %20 = vector.shape_cast %19 : vector<1x128x512xbf16> to vector<128x512xbf16>
    %c0_14 = arith.constant 0 : index
    %c0_15 = arith.constant 0 : index
    %21 = vector.load %arg3[%c0_14, %c0_15] : memref<8x1xi32, #tpu.memory_space<vmem>>, vector<8x1xi32>
    %c0_i32_16 = arith.constant 0 : i32
    %c0_i32_17 = arith.constant 0 : i32
    %c1_i32 = arith.constant 1 : i32
    %c0_i32_18 = arith.constant 0 : i32
    %c1_i32_19 = arith.constant 1 : i32
    %c0_i32_20 = arith.constant 0 : i32
    %22 = arith.subi %13, %c0_i32_20 : i32
    %23 = arith.addi %c0_i32_20, %22 : i32
    %c1_i32_21 = arith.constant 1 : i32
    scf.for %arg11 = %c0_i32_20 to %23 step %c1_i32_21  : i32 {
      %c8_i32_28 = arith.constant 8 : i32
      %26 = arith.muli %arg11, %c8_i32_28 : i32
      %27 = tpu.assume_multiple %26, 8 : i32
      %c0_i32_29 = arith.constant 0 : i32
      %c0_i32_30 = arith.constant 0 : i32
      %28 = tpu.memref_slice %arg4[%c0_i32_17, %c0_i32_29, %c0_i32_30] : memref<2x64x512xbf16, #tpu.memory_space<vmem>> -> memref<1x64x512xbf16, #tpu.memory_space<vmem>>
      %29 = tpu.memref_squeeze %28 : memref<1x64x512xbf16, #tpu.memory_space<vmem>> -> memref<64x512xbf16, #tpu.memory_space<vmem>>
      %30 = arith.index_cast %27 : i32 to index
      %c0_31 = arith.constant 0 : index
      %31 = vector.load %29[%30, %c0_31] : memref<64x512xbf16, #tpu.memory_space<vmem>>, vector<8x512xbf16>
      %32 = arith.extf %31 : vector<8x512xbf16> to vector<8x512xf32>
      %c0_32 = arith.constant 0 : index
      %c0_33 = arith.constant 0 : index
      %33 = vector.load %arg7[%c0_32, %c0_33] : memref<8x128xbf16, #tpu.memory_space<vmem>>, vector<8x128xbf16>
      %cst = arith.constant dense<0.000000e+00> : vector<8x512xf32>
      %34 = tpu.matmul %33, %18, %cst {dimension_numbers = #tpu.dot_dimension_numbers<[1], [0], [0], [1], [0, 0, 1, 1], [], []>} : vector<8x128xbf16>, vector<128x512xbf16>, vector<8x512xf32> -> vector<8x512xf32>
      %35 = arith.addf %32, %34 : vector<8x512xf32>
      %c0_i32_34 = arith.constant 0 : i32
      %c0_i32_35 = arith.constant 0 : i32
      %36 = tpu.memref_slice %arg4[%c1_i32, %c0_i32_34, %c0_i32_35] : memref<2x64x512xbf16, #tpu.memory_space<vmem>> -> memref<1x64x512xbf16, #tpu.memory_space<vmem>>
      %37 = tpu.memref_squeeze %36 : memref<1x64x512xbf16, #tpu.memory_space<vmem>> -> memref<64x512xbf16, #tpu.memory_space<vmem>>
      %38 = arith.index_cast %27 : i32 to index
      %c0_36 = arith.constant 0 : index
      %39 = vector.load %37[%38, %c0_36] : memref<64x512xbf16, #tpu.memory_space<vmem>>, vector<8x512xbf16>
      %40 = arith.extf %39 : vector<8x512xbf16> to vector<8x512xf32>
      %c0_37 = arith.constant 0 : index
      %c0_38 = arith.constant 0 : index
      %41 = vector.load %arg9[%c0_37, %c0_38] : memref<8x128xbf16, #tpu.memory_space<vmem>>, vector<8x128xbf16>
      %cst_39 = arith.constant dense<0.000000e+00> : vector<8x512xf32>
      %42 = tpu.matmul %41, %20, %cst_39 {dimension_numbers = #tpu.dot_dimension_numbers<[1], [0], [0], [1], [0, 0, 1, 1], [], []>} : vector<8x128xbf16>, vector<128x512xbf16>, vector<8x512xf32> -> vector<8x512xf32>
      %43 = arith.addf %40, %42 : vector<8x512xf32>
      %c0_40 = arith.constant 0 : index
      %c0_41 = arith.constant 0 : index
      %44 = vector.load %arg8[%c0_40, %c0_41] : memref<8x128xf32, #tpu.memory_space<vmem>>, vector<8x128xf32>
      %45 = vector.extract_strided_slice %35 {offsets = [0, 0], sizes = [8, 128], strides = [1, 1]} : vector<8x512xf32> to vector<8x128xf32>
      %46 = arith.negf %45 : vector<8x128xf32>
      %47 = math.exp %46 : vector<8x128xf32>
      %cst_42 = arith.constant 1.000000e+00 : f32
      %48 = vector.broadcast %cst_42 : f32 to vector<8x128xf32>
      %49 = arith.addf %48, %47 : vector<8x128xf32>
      %50 = arith.divf %48, %49 : vector<8x128xf32>
      %51 = vector.extract_strided_slice %35 {offsets = [0, 128], sizes = [8, 128], strides = [1, 1]} : vector<8x512xf32> to vector<8x128xf32>
      %52 = arith.negf %51 : vector<8x128xf32>
      %53 = math.exp %52 : vector<8x128xf32>
      %cst_43 = arith.constant 1.000000e+00 : f32
      %54 = vector.broadcast %cst_43 : f32 to vector<8x128xf32>
      %55 = arith.addf %54, %53 : vector<8x128xf32>
      %56 = arith.divf %54, %55 : vector<8x128xf32>
      %57 = vector.extract_strided_slice %35 {offsets = [0, 256], sizes = [8, 128], strides = [1, 1]} : vector<8x512xf32> to vector<8x128xf32>
      %58 = math.tanh %57 : vector<8x128xf32>
      %59 = vector.extract_strided_slice %35 {offsets = [0, 384], sizes = [8, 128], strides = [1, 1]} : vector<8x512xf32> to vector<8x128xf32>
      %60 = arith.negf %59 : vector<8x128xf32>
      %61 = math.exp %60 : vector<8x128xf32>
      %cst_44 = arith.constant 1.000000e+00 : f32
      %62 = vector.broadcast %cst_44 : f32 to vector<8x128xf32>
      %63 = arith.addf %62, %61 : vector<8x128xf32>
      %64 = arith.divf %62, %63 : vector<8x128xf32>
      %65 = arith.mulf %56, %44 : vector<8x128xf32>
      %66 = arith.mulf %50, %58 : vector<8x128xf32>
      %67 = arith.addf %65, %66 : vector<8x128xf32>
      %68 = math.tanh %67 : vector<8x128xf32>
      %69 = arith.mulf %64, %68 : vector<8x128xf32>
      %70 = arith.truncf %69 : vector<8x128xf32> to vector<8x128xbf16>
      %c0_45 = arith.constant 0 : index
      %c0_46 = arith.constant 0 : index
      %71 = vector.load %arg10[%c0_45, %c0_46] : memref<8x128xf32, #tpu.memory_space<vmem>>, vector<8x128xf32>
      %72 = vector.extract_strided_slice %43 {offsets = [0, 0], sizes = [8, 128], strides = [1, 1]} : vector<8x512xf32> to vector<8x128xf32>
      %73 = arith.negf %72 : vector<8x128xf32>
      %74 = math.exp %73 : vector<8x128xf32>
      %cst_47 = arith.constant 1.000000e+00 : f32
      %75 = vector.broadcast %cst_47 : f32 to vector<8x128xf32>
      %76 = arith.addf %75, %74 : vector<8x128xf32>
      %77 = arith.divf %75, %76 : vector<8x128xf32>
      %78 = vector.extract_strided_slice %43 {offsets = [0, 128], sizes = [8, 128], strides = [1, 1]} : vector<8x512xf32> to vector<8x128xf32>
      %79 = arith.negf %78 : vector<8x128xf32>
      %80 = math.exp %79 : vector<8x128xf32>
      %cst_48 = arith.constant 1.000000e+00 : f32
      %81 = vector.broadcast %cst_48 : f32 to vector<8x128xf32>
      %82 = arith.addf %81, %80 : vector<8x128xf32>
      %83 = arith.divf %81, %82 : vector<8x128xf32>
      %84 = vector.extract_strided_slice %43 {offsets = [0, 256], sizes = [8, 128], strides = [1, 1]} : vector<8x512xf32> to vector<8x128xf32>
      %85 = math.tanh %84 : vector<8x128xf32>
      %86 = vector.extract_strided_slice %43 {offsets = [0, 384], sizes = [8, 128], strides = [1, 1]} : vector<8x512xf32> to vector<8x128xf32>
      %87 = arith.negf %86 : vector<8x128xf32>
      %88 = math.exp %87 : vector<8x128xf32>
      %cst_49 = arith.constant 1.000000e+00 : f32
      %89 = vector.broadcast %cst_49 : f32 to vector<8x128xf32>
      %90 = arith.addf %89, %88 : vector<8x128xf32>
      %91 = arith.divf %89, %90 : vector<8x128xf32>
      %92 = arith.mulf %83, %71 : vector<8x128xf32>
      %93 = arith.mulf %77, %85 : vector<8x128xf32>
      %94 = arith.addf %92, %93 : vector<8x128xf32>
      %95 = math.tanh %94 : vector<8x128xf32>
      %96 = arith.mulf %91, %95 : vector<8x128xf32>
      %97 = arith.truncf %96 : vector<8x128xf32> to vector<8x128xbf16>
      %c0_50 = arith.constant 0 : index
      %c0_51 = arith.constant 0 : index
      %98 = vector.load %arg7[%c0_50, %c0_51] : memref<8x128xbf16, #tpu.memory_space<vmem>>, vector<8x128xbf16>
      tpu.vector_store %arg7[%c0_50, %c0_51], %70 {strides = array<i32>} : memref<8x128xbf16, #tpu.memory_space<vmem>>, vector<8x128xbf16>,
      %c0_52 = arith.constant 0 : index
      %c0_53 = arith.constant 0 : index
      %99 = vector.load %arg8[%c0_52, %c0_53] : memref<8x128xf32, #tpu.memory_space<vmem>>, vector<8x128xf32>
      tpu.vector_store %arg8[%c0_52, %c0_53], %67 {strides = array<i32>} : memref<8x128xf32, #tpu.memory_space<vmem>>, vector<8x128xf32>,
      %c0_54 = arith.constant 0 : index
      %c0_55 = arith.constant 0 : index
      %100 = vector.load %arg9[%c0_54, %c0_55] : memref<8x128xbf16, #tpu.memory_space<vmem>>, vector<8x128xbf16>
      tpu.vector_store %arg9[%c0_54, %c0_55], %97 {strides = array<i32>} : memref<8x128xbf16, #tpu.memory_space<vmem>>, vector<8x128xbf16>,
      %c0_56 = arith.constant 0 : index
      %c0_57 = arith.constant 0 : index
      %101 = vector.load %arg10[%c0_56, %c0_57] : memref<8x128xf32, #tpu.memory_space<vmem>>, vector<8x128xf32>
      tpu.vector_store %arg10[%c0_56, %c0_57], %94 {strides = array<i32>} : memref<8x128xf32, #tpu.memory_space<vmem>>, vector<8x128xf32>,
      %c0_i32_58 = arith.constant 0 : i32
      %c0_i32_59 = arith.constant 0 : i32
      %102 = tpu.memref_slice %arg6[%c0_i32_18, %c0_i32_58, %c0_i32_59] : memref<2x64x128xbf16, #tpu.memory_space<vmem>> -> memref<1x64x128xbf16, #tpu.memory_space<vmem>>
      %103 = tpu.memref_squeeze %102 : memref<1x64x128xbf16, #tpu.memory_space<vmem>> -> memref<64x128xbf16, #tpu.memory_space<vmem>>
      %104 = arith.index_cast %27 : i32 to index
      %c0_60 = arith.constant 0 : index
      %105 = vector.load %103[%104, %c0_60] : memref<64x128xbf16, #tpu.memory_space<vmem>>, vector<8x128xbf16>
      tpu.vector_store %103[%104, %c0_60], %70 {strides = array<i32>} : memref<64x128xbf16, #tpu.memory_space<vmem>>, vector<8x128xbf16>,
      %c0_i32_61 = arith.constant 0 : i32
      %c0_i32_62 = arith.constant 0 : i32
      %106 = tpu.memref_slice %arg6[%c1_i32_19, %c0_i32_61, %c0_i32_62] : memref<2x64x128xbf16, #tpu.memory_space<vmem>> -> memref<1x64x128xbf16, #tpu.memory_space<vmem>>
      %107 = tpu.memref_squeeze %106 : memref<1x64x128xbf16, #tpu.memory_space<vmem>> -> memref<64x128xbf16, #tpu.memory_space<vmem>>
      %108 = arith.index_cast %27 : i32 to index
      %c0_63 = arith.constant 0 : index
      %109 = vector.load %107[%108, %c0_63] : memref<64x128xbf16, #tpu.memory_space<vmem>>, vector<8x128xbf16>
      tpu.vector_store %107[%108, %c0_63], %97 {strides = array<i32>} : memref<64x128xbf16, #tpu.memory_space<vmem>>, vector<8x128xbf16>,
    }
    %c0_i32_22 = arith.constant 0 : i32
    %c0_i32_23 = arith.constant 0 : i32
    %c1_i32_24 = arith.constant 1 : i32
    %c0_i32_25 = arith.constant 0 : i32
    %c1_i32_26 = arith.constant 1 : i32
    %24 = arith.subi %7, %13 : i32
    %25 = arith.addi %13, %24 : i32
    %c1_i32_27 = arith.constant 1 : i32
    scf.for %arg11 = %13 to %25 step %c1_i32_27  : i32 {
      %c8_i32_28 = arith.constant 8 : i32
      %26 = arith.muli %arg11, %c8_i32_28 : i32
      %27 = tpu.assume_multiple %26, 8 : i32
      %c0_i32_29 = arith.constant 0 : i32
      %c0_i32_30 = arith.constant 0 : i32
      %28 = tpu.memref_slice %arg4[%c0_i32_23, %c0_i32_29, %c0_i32_30] : memref<2x64x512xbf16, #tpu.memory_space<vmem>> -> memref<1x64x512xbf16, #tpu.memory_space<vmem>>
      %29 = tpu.memref_squeeze %28 : memref<1x64x512xbf16, #tpu.memory_space<vmem>> -> memref<64x512xbf16, #tpu.memory_space<vmem>>
      %30 = arith.index_cast %27 : i32 to index
      %c0_31 = arith.constant 0 : index
      %31 = vector.load %29[%30, %c0_31] : memref<64x512xbf16, #tpu.memory_space<vmem>>, vector<8x512xbf16>
      %32 = arith.extf %31 : vector<8x512xbf16> to vector<8x512xf32>
      %c0_32 = arith.constant 0 : index
      %c0_33 = arith.constant 0 : index
      %33 = vector.load %arg7[%c0_32, %c0_33] : memref<8x128xbf16, #tpu.memory_space<vmem>>, vector<8x128xbf16>
      %cst = arith.constant dense<0.000000e+00> : vector<8x512xf32>
      %34 = tpu.matmul %33, %18, %cst {dimension_numbers = #tpu.dot_dimension_numbers<[1], [0], [0], [1], [0, 0, 1, 1], [], []>} : vector<8x128xbf16>, vector<128x512xbf16>, vector<8x512xf32> -> vector<8x512xf32>
      %35 = arith.addf %32, %34 : vector<8x512xf32>
      %c0_i32_34 = arith.constant 0 : i32
      %c0_i32_35 = arith.constant 0 : i32
      %36 = tpu.memref_slice %arg4[%c1_i32_24, %c0_i32_34, %c0_i32_35] : memref<2x64x512xbf16, #tpu.memory_space<vmem>> -> memref<1x64x512xbf16, #tpu.memory_space<vmem>>
      %37 = tpu.memref_squeeze %36 : memref<1x64x512xbf16, #tpu.memory_space<vmem>> -> memref<64x512xbf16, #tpu.memory_space<vmem>>
      %38 = arith.index_cast %27 : i32 to index
      %c0_36 = arith.constant 0 : index
      %39 = vector.load %37[%38, %c0_36] : memref<64x512xbf16, #tpu.memory_space<vmem>>, vector<8x512xbf16>
      %40 = arith.extf %39 : vector<8x512xbf16> to vector<8x512xf32>
      %c0_37 = arith.constant 0 : index
      %c0_38 = arith.constant 0 : index
      %41 = vector.load %arg9[%c0_37, %c0_38] : memref<8x128xbf16, #tpu.memory_space<vmem>>, vector<8x128xbf16>
      %cst_39 = arith.constant dense<0.000000e+00> : vector<8x512xf32>
      %42 = tpu.matmul %41, %20, %cst_39 {dimension_numbers = #tpu.dot_dimension_numbers<[1], [0], [0], [1], [0, 0, 1, 1], [], []>} : vector<8x128xbf16>, vector<128x512xbf16>, vector<8x512xf32> -> vector<8x512xf32>
      %43 = arith.addf %40, %42 : vector<8x512xf32>
      %c0_40 = arith.constant 0 : index
      %c0_41 = arith.constant 0 : index
      %44 = vector.load %arg8[%c0_40, %c0_41] : memref<8x128xf32, #tpu.memory_space<vmem>>, vector<8x128xf32>
      %45 = vector.extract_strided_slice %35 {offsets = [0, 0], sizes = [8, 128], strides = [1, 1]} : vector<8x512xf32> to vector<8x128xf32>
      %46 = arith.negf %45 : vector<8x128xf32>
      %47 = math.exp %46 : vector<8x128xf32>
      %cst_42 = arith.constant 1.000000e+00 : f32
      %48 = vector.broadcast %cst_42 : f32 to vector<8x128xf32>
      %49 = arith.addf %48, %47 : vector<8x128xf32>
      %50 = arith.divf %48, %49 : vector<8x128xf32>
      %51 = vector.extract_strided_slice %35 {offsets = [0, 128], sizes = [8, 128], strides = [1, 1]} : vector<8x512xf32> to vector<8x128xf32>
      %52 = arith.negf %51 : vector<8x128xf32>
      %53 = math.exp %52 : vector<8x128xf32>
      %cst_43 = arith.constant 1.000000e+00 : f32
      %54 = vector.broadcast %cst_43 : f32 to vector<8x128xf32>
      %55 = arith.addf %54, %53 : vector<8x128xf32>
      %56 = arith.divf %54, %55 : vector<8x128xf32>
      %57 = vector.extract_strided_slice %35 {offsets = [0, 256], sizes = [8, 128], strides = [1, 1]} : vector<8x512xf32> to vector<8x128xf32>
      %58 = math.tanh %57 : vector<8x128xf32>
      %59 = vector.extract_strided_slice %35 {offsets = [0, 384], sizes = [8, 128], strides = [1, 1]} : vector<8x512xf32> to vector<8x128xf32>
      %60 = arith.negf %59 : vector<8x128xf32>
      %61 = math.exp %60 : vector<8x128xf32>
      %cst_44 = arith.constant 1.000000e+00 : f32
      %62 = vector.broadcast %cst_44 : f32 to vector<8x128xf32>
      %63 = arith.addf %62, %61 : vector<8x128xf32>
      %64 = arith.divf %62, %63 : vector<8x128xf32>
      %65 = arith.mulf %56, %44 : vector<8x128xf32>
      %66 = arith.mulf %50, %58 : vector<8x128xf32>
      %67 = arith.addf %65, %66 : vector<8x128xf32>
      %68 = math.tanh %67 : vector<8x128xf32>
      %69 = arith.mulf %64, %68 : vector<8x128xf32>
      %70 = arith.truncf %69 : vector<8x128xf32> to vector<8x128xbf16>
      %c0_45 = arith.constant 0 : index
      %c0_46 = arith.constant 0 : index
      %71 = vector.load %arg10[%c0_45, %c0_46] : memref<8x128xf32, #tpu.memory_space<vmem>>, vector<8x128xf32>
      %72 = vector.extract_strided_slice %43 {offsets = [0, 0], sizes = [8, 128], strides = [1, 1]} : vector<8x512xf32> to vector<8x128xf32>
      %73 = arith.negf %72 : vector<8x128xf32>
      %74 = math.exp %73 : vector<8x128xf32>
      %cst_47 = arith.constant 1.000000e+00 : f32
      %75 = vector.broadcast %cst_47 : f32 to vector<8x128xf32>
      %76 = arith.addf %75, %74 : vector<8x128xf32>
      %77 = arith.divf %75, %76 : vector<8x128xf32>
      %78 = vector.extract_strided_slice %43 {offsets = [0, 128], sizes = [8, 128], strides = [1, 1]} : vector<8x512xf32> to vector<8x128xf32>
      %79 = arith.negf %78 : vector<8x128xf32>
      %80 = math.exp %79 : vector<8x128xf32>
      %cst_48 = arith.constant 1.000000e+00 : f32
      %81 = vector.broadcast %cst_48 : f32 to vector<8x128xf32>
      %82 = arith.addf %81, %80 : vector<8x128xf32>
      %83 = arith.divf %81, %82 : vector<8x128xf32>
      %84 = vector.extract_strided_slice %43 {offsets = [0, 256], sizes = [8, 128], strides = [1, 1]} : vector<8x512xf32> to vector<8x128xf32>
      %85 = math.tanh %84 : vector<8x128xf32>
      %86 = vector.extract_strided_slice %43 {offsets = [0, 384], sizes = [8, 128], strides = [1, 1]} : vector<8x512xf32> to vector<8x128xf32>
      %87 = arith.negf %86 : vector<8x128xf32>
      %88 = math.exp %87 : vector<8x128xf32>
      %cst_49 = arith.constant 1.000000e+00 : f32
      %89 = vector.broadcast %cst_49 : f32 to vector<8x128xf32>
      %90 = arith.addf %89, %88 : vector<8x128xf32>
      %91 = arith.divf %89, %90 : vector<8x128xf32>
      %92 = arith.mulf %83, %71 : vector<8x128xf32>
      %93 = arith.mulf %77, %85 : vector<8x128xf32>
      %94 = arith.addf %92, %93 : vector<8x128xf32>
      %95 = math.tanh %94 : vector<8x128xf32>
      %96 = arith.mulf %91, %95 : vector<8x128xf32>
      %97 = arith.truncf %96 : vector<8x128xf32> to vector<8x128xbf16>
      %c0_50 = arith.constant 0 : index
      %c0_51 = arith.constant 0 : index
      %98 = vector.load %arg7[%c0_50, %c0_51] : memref<8x128xbf16, #tpu.memory_space<vmem>>, vector<8x128xbf16>
      tpu.vector_store %arg7[%c0_50, %c0_51], %70 {strides = array<i32>} : memref<8x128xbf16, #tpu.memory_space<vmem>>, vector<8x128xbf16>,
      %c0_52 = arith.constant 0 : index
      %c0_53 = arith.constant 0 : index
      %99 = vector.load %arg8[%c0_52, %c0_53] : memref<8x128xf32, #tpu.memory_space<vmem>>, vector<8x128xf32>
      tpu.vector_store %arg8[%c0_52, %c0_53], %67 {strides = array<i32>} : memref<8x128xf32, #tpu.memory_space<vmem>>, vector<8x128xf32>,
      %c0_54 = arith.constant 0 : index
      %c0_55 = arith.constant 0 : index
      %100 = vector.load %arg9[%c0_54, %c0_55] : memref<8x128xbf16, #tpu.memory_space<vmem>>, vector<8x128xbf16>
      tpu.vector_store %arg9[%c0_54, %c0_55], %97 {strides = array<i32>} : memref<8x128xbf16, #tpu.memory_space<vmem>>, vector<8x128xbf16>,
      %c0_56 = arith.constant 0 : index
      %c0_57 = arith.constant 0 : index
      %101 = vector.load %arg10[%c0_56, %c0_57] : memref<8x128xf32, #tpu.memory_space<vmem>>, vector<8x128xf32>
      tpu.vector_store %arg10[%c0_56, %c0_57], %94 {strides = array<i32>} : memref<8x128xf32, #tpu.memory_space<vmem>>, vector<8x128xf32>,
      %c8_i32_58 = arith.constant 8 : i32
      %102 = arith.muli %arg0, %c8_i32_58 : i32
      %103 = arith.addi %102, %arg11 : i32
      %104 = vector.broadcast %103 : i32 to vector<8x1xi32>
      %105 = arith.cmpi slt, %104, %21 : vector<8x1xi32>
      %cst_59 = arith.constant 0.000000e+00 : bf16
      %106 = vector.broadcast %cst_59 : bf16 to vector<8x128xbf16>
      %107 = vector.shape_cast %105 : vector<8x1xi1> to vector<8x1xi1>
      %108 = vector.broadcast %107 : vector<8x1xi1> to vector<8x128xi1>
      %109 = arith.select %108, %70, %106 : vector<8x128xi1>, vector<8x128xbf16>
      %110 = vector.shape_cast %105 : vector<8x1xi1> to vector<8x1xi1>
      %111 = vector.broadcast %110 : vector<8x1xi1> to vector<8x128xi1>
      %112 = arith.select %111, %97, %106 : vector<8x128xi1>, vector<8x128xbf16>
      %c0_i32_60 = arith.constant 0 : i32
      %c0_i32_61 = arith.constant 0 : i32
      %113 = tpu.memref_slice %arg6[%c0_i32_25, %c0_i32_60, %c0_i32_61] : memref<2x64x128xbf16, #tpu.memory_space<vmem>> -> memref<1x64x128xbf16, #tpu.memory_space<vmem>>
      %114 = tpu.memref_squeeze %113 : memref<1x64x128xbf16, #tpu.memory_space<vmem>> -> memref<64x128xbf16, #tpu.memory_space<vmem>>
      %115 = arith.index_cast %27 : i32 to index
      %c0_62 = arith.constant 0 : index
      %116 = vector.load %114[%115, %c0_62] : memref<64x128xbf16, #tpu.memory_space<vmem>>, vector<8x128xbf16>
      tpu.vector_store %114[%115, %c0_62], %109 {strides = array<i32>} : memref<64x128xbf16, #tpu.memory_space<vmem>>, vector<8x128xbf16>,
      %c0_i32_63 = arith.constant 0 : i32
      %c0_i32_64 = arith.constant 0 : i32
      %117 = tpu.memref_slice %arg6[%c1_i32_26, %c0_i32_63, %c0_i32_64] : memref<2x64x128xbf16, #tpu.memory_space<vmem>> -> memref<1x64x128xbf16, #tpu.memory_space<vmem>>
      %118 = tpu.memref_squeeze %117 : memref<1x64x128xbf16, #tpu.memory_space<vmem>> -> memref<64x128xbf16, #tpu.memory_space<vmem>>
      %119 = arith.index_cast %27 : i32 to index
      %c0_65 = arith.constant 0 : index
      %120 = vector.load %118[%119, %c0_65] : memref<64x128xbf16, #tpu.memory_space<vmem>>, vector<8x128xbf16>
      tpu.vector_store %118[%119, %c0_65], %112 {strides = array<i32>} : memref<64x128xbf16, #tpu.memory_space<vmem>>, vector<8x128xbf16>,
    }
    return
  }
  func.func @transform_0(%arg0: i32) -> i32 {
    %c0_i32 = arith.constant 0 : i32
    %c0_i32_0 = arith.constant 0 : i32
    return %c0_i32 : i32
  }
  func.func @transform_1(%arg0: i32) -> i32 {
    %c0_i32 = arith.constant 0 : i32
    %c0_i32_0 = arith.constant 0 : i32
    return %c0_i32 : i32
  }
  func.func @transform_2(%arg0: i32) -> (i32, i32) {
    %c0_i32 = arith.constant 0 : i32
    %c0_i32_0 = arith.constant 0 : i32
    %c0_i32_1 = arith.constant 0 : i32
    return %c0_i32, %c0_i32_0 : i32, i32
  }
  func.func @transform_3(%arg0: i32) -> (i32, i32, i32) {
    %c0_i32 = arith.constant 0 : i32
    %c0_i32_0 = arith.constant 0 : i32
    %c0_i32_1 = arith.constant 0 : i32
    return %c0_i32, %arg0, %c0_i32_0 : i32, i32, i32
  }
  func.func @transform_4(%arg0: i32) -> (i32, i32, i32) {
    %c0_i32 = arith.constant 0 : i32
    %c0_i32_0 = arith.constant 0 : i32
    %c0_i32_1 = arith.constant 0 : i32
    %c0_i32_2 = arith.constant 0 : i32
    return %c0_i32, %c0_i32_0, %c0_i32_1 : i32, i32, i32
  }
  func.func @transform_5(%arg0: i32) -> (i32, i32, i32) {
    %c0_i32 = arith.constant 0 : i32
    %c0_i32_0 = arith.constant 0 : i32
    %c0_i32_1 = arith.constant 0 : i32
    return %c0_i32, %arg0, %c0_i32_0 : i32, i32, i32
  }
}

module attributes {stable_mosaic.version = 11 : i64} {
  func.func @_proj_bias_kernel(%arg0: i32, %arg1: i32, %arg2: memref<1x64x128xbf16, #tpu.memory_space<vmem>>, %arg3: memref<1x128x128xbf16, #tpu.memory_space<vmem>>, %arg4: memref<1x1x128xf32, #tpu.memory_space<vmem>>, %arg5: memref<1x64x128xbf16, #tpu.memory_space<vmem>>) attributes {dimension_semantics = [#tpu.dimension_semantics<parallel>, #tpu.dimension_semantics<parallel>], iteration_bounds = array<i64: 2, 1>, scalar_prefetch = 0 : i64, scratch_operands = 0 : i64, tpu.core_type = #tpu.core_type<tc>, window_params = [{transform_indices = @transform_0, window_bounds = array<i64: 1, 64, 128>}, {transform_indices = @transform_1, window_bounds = array<i64: 1, 128, 128>}, {transform_indices = @transform_2, window_bounds = array<i64: 1, 1, 128>}, {transform_indices = @transform_3, window_bounds = array<i64: 1, 64, 128>}]} {
    %c0 = arith.constant 0 : index
    %c0_0 = arith.constant 0 : index
    %c0_1 = arith.constant 0 : index
    %0 = vector.load %arg2[%c0, %c0_0, %c0_1] : memref<1x64x128xbf16, #tpu.memory_space<vmem>>, vector<1x64x128xbf16>
    %1 = vector.shape_cast %0 : vector<1x64x128xbf16> to vector<64x128xbf16>
    %c0_2 = arith.constant 0 : index
    %c0_3 = arith.constant 0 : index
    %c0_4 = arith.constant 0 : index
    %2 = vector.load %arg3[%c0_2, %c0_3, %c0_4] : memref<1x128x128xbf16, #tpu.memory_space<vmem>>, vector<1x128x128xbf16>
    %3 = vector.shape_cast %2 : vector<1x128x128xbf16> to vector<128x128xbf16>
    %cst = arith.constant dense<0.000000e+00> : vector<64x128xf32>
    %4 = tpu.matmul %1, %3, %cst {dimension_numbers = #tpu.dot_dimension_numbers<[1], [0], [0], [1], [0, 0, 1, 1], [], []>} : vector<64x128xbf16>, vector<128x128xbf16>, vector<64x128xf32> -> vector<64x128xf32>
    %c0_5 = arith.constant 0 : index
    %c0_6 = arith.constant 0 : index
    %c0_7 = arith.constant 0 : index
    %5 = vector.load %arg4[%c0_5, %c0_6, %c0_7] : memref<1x1x128xf32, #tpu.memory_space<vmem>>, vector<1x1x128xf32>
    %6 = vector.shape_cast %5 : vector<1x1x128xf32> to vector<1x128xf32>
    %7 = vector.broadcast %6 : vector<1x128xf32> to vector<64x128xf32>
    %8 = arith.addf %4, %7 : vector<64x128xf32>
    %9 = arith.truncf %8 : vector<64x128xf32> to vector<64x128xbf16>
    %c0_8 = arith.constant 0 : index
    %c0_9 = arith.constant 0 : index
    %c0_10 = arith.constant 0 : index
    %10 = vector.load %arg5[%c0_8, %c0_9, %c0_10] : memref<1x64x128xbf16, #tpu.memory_space<vmem>>, vector<1x64x128xbf16>
    %11 = vector.shape_cast %10 : vector<1x64x128xbf16> to vector<64x128xbf16>
    %12 = vector.shape_cast %9 : vector<64x128xbf16> to vector<1x64x128xbf16>
    tpu.vector_store %arg5[%c0_8, %c0_9, %c0_10], %12 {strides = array<i32>} : memref<1x64x128xbf16, #tpu.memory_space<vmem>>, vector<1x64x128xbf16>,
    return
  }
  func.func @transform_0(%arg0: i32, %arg1: i32) -> (i32, i32, i32) {
    %c0_i32 = arith.constant 0 : i32
    %c0_i32_0 = arith.constant 0 : i32
    return %arg0, %arg1, %c0_i32 : i32, i32, i32
  }
  func.func @transform_1(%arg0: i32, %arg1: i32) -> (i32, i32, i32) {
    %c0_i32 = arith.constant 0 : i32
    %c0_i32_0 = arith.constant 0 : i32
    %c0_i32_1 = arith.constant 0 : i32
    return %arg0, %c0_i32, %c0_i32_0 : i32, i32, i32
  }
  func.func @transform_2(%arg0: i32, %arg1: i32) -> (i32, i32, i32) {
    %c0_i32 = arith.constant 0 : i32
    %c0_i32_0 = arith.constant 0 : i32
    %c0_i32_1 = arith.constant 0 : i32
    return %arg0, %c0_i32, %c0_i32_0 : i32, i32, i32
  }
  func.func @transform_3(%arg0: i32, %arg1: i32) -> (i32, i32, i32) {
    %c0_i32 = arith.constant 0 : i32
    %c0_i32_0 = arith.constant 0 : i32
    return %arg0, %arg1, %c0_i32 : i32, i32, i32
  }
}

</mosaic_0001>

<llo_original>
// kernel: elmo_lstm_encoder_forward.6
$region0: #{elmo_lstm_encoder_forward.6}
  #allocation0 [shape = 'u32[]', space=smem, size = 0x4, offset = 0x4, fixed_abs, tag = 'smem constant byte address 0x4 - core index']
  #allocation1 [shape = 'u32[144,128]{1,0:T(1,128)}', space=vmem, size = 0x12000, scoped, tag = 'internal scratch']
  %s0 = inlined_call_operand.vmem [shape: bf16[2,64,128], index: 0, kind: input, shape index: {}]
  %s1 = inlined_call_operand.vmem [shape: bf16[2,128,512], index: 1, kind: input, shape index: {}]
  %s2 = inlined_call_operand.vmem [shape: f32[2,1,512], index: 2, kind: input, shape index: {}]
  %s3 = inlined_call_operand.vmem [shape: bf16[2,64,512], index: 3, kind: output, shape index: {}]
  %s4 = sld [smem:[#allocation0]]
  $region45: #{elmo_lstm_encoder_forward.6} parent=0
    _
  %s6 = ssub.s32 1, %s4
  %s7 = scalar_select 0, %s6, %s4
  loop: start=0, step=1, limit=4
  $region2: #{elmo_lstm_encoder_forward.6} parent=0 // loop_pre_header
    _
  $region3: #{elmo_lstm_encoder_forward.6} parent=0 // loop_header
    %s9 = sphi 0, %s13
    %p10 = scmp.ge.s32.totalorder %s9, 4
    %s16 = sphi 0, %s28
    %s17 = sphi 0, %s24
    %s18 = sphi 0, %s16
    %s19 = sphi 0, %s17
    %s20 = sphi 0, %s18
    %s21 = sphi 0, %s19
    %s33 = sphi 0, %s35
    %s36 = sphi 0, %s33
    %s37 = sphi 0, %s36
    %s53 = sphi 0, %s37
    %s59 = sphi 0, %s61
    %s62 = sphi 0, %s59
    %s63 = sphi 0, %s62
    %s79 = sphi 0, %s63
    %s85 = sphi 0, %s87
    %s88 = sphi 0, %s85
    %s89 = sphi 0, %s88
    %s105 = sphi 0, %s89
    %s113 = sphi 0, %s115
    %s116 = sphi 0, %s113
    %s117 = sphi 0, %s116
    %s133 = sphi 0, %s117
  $region4: #{elmo_lstm_encoder_forward.6} parent=0 // loop_header_branch
    %12 = sbr.rel (%p10) target = $region8
  $region5: #{elmo_lstm_encoder_forward.6} parent=0 // loop_body
    %s14 = ssub.s32 %s9, 1
    %s15 = ssub.s32 %s9, 2
    %s22 = sadd.s32 1, %s17
    %p23 = scmp.ge.s32.totalorder %s22, 1
    %s24 = scalar_select %p23, 0, %s22
    %s25 = sadd.s32 1, %s16
    %s26 = scalar_select %p23, %s25, %s16
    %p27 = scmp.ge.s32.totalorder %s26, 2
    %s28 = scalar_select %p27, 0, %s26
    %s29 = ssub.s32 %s16, %s28
    %s30 = ssub.s32 %s17, %s24
    %s31 = sor.u32 %s29, %s30
    %p32 = scmp.eq.s32.totalorder %s31, 0
    %s34 = sadd.s32 %s33, 1
    %s35 = scalar_select %p32, %s33, %s34
    %p38 = pneg %p32
    %p39 = scmp.eq.s32.totalorder %s9, 1
    %p40 = por %p38, %p39
    %p41 = scmp.ne.s32.totalorder %s33, %s36
    %p42 = scmp.eq.s32.totalorder %s9, 0
    %p43 = por %p41, %p42
    %p44 = scmp.ne.s32.totalorder %s33, %s36
    %p45 = scmp.eq.s32.totalorder %s14, 1
    %p46 = por %p44, %p45
    %p47 = scmp.ne.s32.totalorder %s36, %s37
    %p48 = scmp.eq.s32.totalorder %s14, 0
    %p49 = por %p47, %p48
    %p50 = scmp.ne.s32.totalorder %s36, %s37
    %p51 = scmp.eq.s32.totalorder %s15, 1
    %p52 = por %p50, %p51
    %p54 = scmp.ne.s32.totalorder %s37, %s53
    %p55 = scmp.eq.s32.totalorder %s15, 0
    %p56 = por %p54, %p55
    %s57 = ssub.s32 %s16, %s28
    %p58 = scmp.eq.s32.totalorder %s57, 0
    %s60 = sadd.s32 %s59, 1
    %s61 = scalar_select %p58, %s59, %s60
    %p64 = pneg %p58
    %p65 = scmp.eq.s32.totalorder %s9, 1
    %p66 = por %p64, %p65
    %p67 = scmp.ne.s32.totalorder %s59, %s62
    %p68 = scmp.eq.s32.totalorder %s9, 0
    %p69 = por %p67, %p68
    %p70 = scmp.ne.s32.totalorder %s59, %s62
    %p71 = scmp.eq.s32.totalorder %s14, 1
    %p72 = por %p70, %p71
    %p73 = scmp.ne.s32.totalorder %s62, %s63
    %p74 = scmp.eq.s32.totalorder %s14, 0
    %p75 = por %p73, %p74
    %p76 = scmp.ne.s32.totalorder %s62, %s63
    %p77 = scmp.eq.s32.totalorder %s15, 1
    %p78 = por %p76, %p77
    %p80 = scmp.ne.s32.totalorder %s63, %s79
    %p81 = scmp.eq.s32.totalorder %s15, 0
    %p82 = por %p80, %p81
    %s83 = ssub.s32 %s16, %s28
    %p84 = scmp.eq.s32.totalorder %s83, 0
    %s86 = sadd.s32 %s85, 1
    %s87 = scalar_select %p84, %s85, %s86
    %p90 = pneg %p84
    %p91 = scmp.eq.s32.totalorder %s9, 1
    %p92 = por %p90, %p91
    %p93 = scmp.ne.s32.totalorder %s85, %s88
    %p94 = scmp.eq.s32.totalorder %s9, 0
    %p95 = por %p93, %p94
    %p96 = scmp.ne.s32.totalorder %s85, %s88
    %p97 = scmp.eq.s32.totalorder %s14, 1
    %p98 = por %p96, %p97
    %p99 = scmp.ne.s32.totalorder %s88, %s89
    %p100 = scmp.eq.s32.totalorder %s14, 0
    %p101 = por %p99, %p100
    %p102 = scmp.ne.s32.totalorder %s88, %s89
    %p103 = scmp.eq.s32.totalorder %s15, 1
    %p104 = por %p102, %p103
    %p106 = scmp.ne.s32.totalorder %s89, %s105
    %p107 = scmp.eq.s32.totalorder %s15, 0
    %p108 = por %p106, %p107
    %s109 = ssub.s32 %s16, %s28
    %s110 = ssub.s32 %s17, %s24
    %s111 = sor.u32 %s109, %s110
    %p112 = scmp.eq.s32.totalorder %s111, 0
    %s114 = sadd.s32 %s113, 1
    %s115 = scalar_select %p112, %s113, %s114
    %p118 = pneg %p112
    %p119 = scmp.eq.s32.totalorder %s9, 1
    %p120 = por %p118, %p119
    %p121 = scmp.ne.s32.totalorder %s113, %s116
    %p122 = scmp.eq.s32.totalorder %s9, 0
    %p123 = por %p121, %p122
    %p124 = scmp.ne.s32.totalorder %s113, %s116
    %p125 = scmp.eq.s32.totalorder %s14, 1
    %p126 = por %p124, %p125
    %p127 = scmp.ne.s32.totalorder %s116, %s117
    %p128 = scmp.eq.s32.totalorder %s14, 0
    %p129 = por %p127, %p128
    %p130 = scmp.ne.s32.totalorder %s116, %s117
    %p131 = scmp.eq.s32.totalorder %s15, 1
    %p132 = por %p130, %p131
    %p134 = scmp.ne.s32.totalorder %s117, %s133
    %p135 = scmp.eq.s32.totalorder %s15, 0
    %p136 = por %p134, %p135
    %p137 = scmp.le.s32.totalorder 1, %s9
    %p138 = scmp.lt.s32.totalorder %s9, 3
    %p139 = pnand %p137, %p138
    %p140 = pneg %p139
    // Predicated region
    $region9: #{elmo_lstm_encoder_forward.6} parent=5 // pred_check
      _
    $region10: #{elmo_lstm_encoder_forward.6} parent=5 // pred_check_branch
      %142 = sbr.rel (%p139) target = $region12
    $region11: #{elmo_lstm_encoder_forward.6} parent=5 // pred_region
      %s143 = ssub.s32 %s9, 1
    $region12: #{elmo_lstm_encoder_forward.6} parent=5 // pred_fallthru
      _
    %p144 = scmp.lt.s32.totalorder %s9, 2
    // Predicated region
    $region13: #{elmo_lstm_encoder_forward.6} parent=5 // pred_check
      %p145 = pneg %p144
    $region14: #{elmo_lstm_encoder_forward.6} parent=5 // pred_check_branch
      %147 = sbr.rel (%p145) target = $region16
    $region15: #{elmo_lstm_encoder_forward.6} parent=5 // pred_region
      // Predicated region
      $region17: #{elmo_lstm_encoder_forward.6} parent=15 // pred_check
        %p148 = pneg %p43
      $region18: #{elmo_lstm_encoder_forward.6} parent=15 // pred_check_branch
        %150 = sbr.rel (%p148) target = $region20
      $region19: #{elmo_lstm_encoder_forward.6} parent=15 // pred_region
        %s151 = smul.u32 8, %s17
        %p152 = scmp.lt.s32.totalorder %s16, 1
        %s153 = scalar_select %p152, %s16, 1
        %p154 = scmp.lt.s32.totalorder %s151, 7
        %s155 = scalar_select %p154, %s151, 7
        %s156 = smul.addr %s153, 8
        %s157 = sadd.s32 %s155, %s156
        %s158 = smul.addr %s157, 4
        %s159 = scalar_lea.vmem %s0, %s158
        %s160 = smul.u32 8, %s17
      $region20: #{elmo_lstm_encoder_forward.6} parent=15 // pred_fallthru
        _
      // Predicated region
      $region21: #{elmo_lstm_encoder_forward.6} parent=15 // pred_check
        %p161 = pneg %p69
      $region22: #{elmo_lstm_encoder_forward.6} parent=15 // pred_check_branch
        %163 = sbr.rel (%p161) target = $region24
      $region23: #{elmo_lstm_encoder_forward.6} parent=15 // pred_region
        %p164 = scmp.lt.s32.totalorder %s16, 1
        %s165 = scalar_select %p164, %s16, 1
        %s166 = smul.addr %s165, 64
        %s167 = smul.addr %s166, 4
        %s168 = scalar_lea.vmem %s1, %s167
      $region24: #{elmo_lstm_encoder_forward.6} parent=15 // pred_fallthru
        _
      // Predicated region
      $region25: #{elmo_lstm_encoder_forward.6} parent=15 // pred_check
        %p169 = pneg %p95
      $region26: #{elmo_lstm_encoder_forward.6} parent=15 // pred_check_branch
        %171 = sbr.rel (%p169) target = $region28
      $region27: #{elmo_lstm_encoder_forward.6} parent=15 // pred_region
        %p172 = scmp.lt.s32.totalorder %s16, 1
        %s173 = scalar_select %p172, %s16, 1
        %s174 = smul.addr %s173, 4
        %s175 = scalar_lea.vmem %s2, %s174
      $region28: #{elmo_lstm_encoder_forward.6} parent=15 // pred_fallthru
        _
    $region16: #{elmo_lstm_encoder_forward.6} parent=5 // pred_fallthru
      _
    %p176 = scmp.le.s32.totalorder 1, %s9
    %p177 = scmp.lt.s32.totalorder %s9, 3
    %p178 = pnand %p176, %p177
    %p179 = pneg %p178
    // Predicated region
    $region29: #{elmo_lstm_encoder_forward.6} parent=5 // pred_check
      _
    $region30: #{elmo_lstm_encoder_forward.6} parent=5 // pred_check_branch
      %181 = sbr.rel (%p178) target = $region32
    $region31: #{elmo_lstm_encoder_forward.6} parent=5 // pred_region
      %s182 = ssub.s32 %s9, 1
      %s183 = smul.u32 8, %s19
      %p184 = scmp.lt.s32.totalorder %s18, 1
      %s185 = scalar_select %p184, %s18, 1
      %p186 = scmp.lt.s32.totalorder %s183, 7
      %s187 = scalar_select %p186, %s183, 7
      %s188 = smul.addr %s185, 8
      %s189 = sadd.s32 %s187, %s188
      %s190 = smul.addr %s189, 4
      %s191 = scalar_lea.vmem %s0, %s190
      %p192 = pneg %p49
      %p193 = pneg %p46
      %p194 = scmp.lt.s32.totalorder %s18, 1
      %s195 = scalar_select %p194, %s18, 1
      %s196 = smul.addr %s195, 64
      %s197 = smul.addr %s196, 4
      %s198 = scalar_lea.vmem %s1, %s197
      %p199 = pneg %p75
      %p200 = pneg %p72
      %p201 = scmp.lt.s32.totalorder %s18, 1
      %s202 = scalar_select %p201, %s18, 1
      %s203 = smul.addr %s202, 4
      %s204 = scalar_lea.vmem %s2, %s203
      %p205 = pneg %p101
      %p206 = pneg %p98
      %p207 = pneg %p129
      %p208 = pneg %p126
      %s209 = smul.u32 8, %s19
      %p210 = scmp.lt.s32.totalorder %s18, 1
      %s211 = scalar_select %p210, %s18, 1
      %p212 = scmp.lt.s32.totalorder %s209, 7
      %s213 = scalar_select %p212, %s209, 7
      %s214 = smul.addr %s213, 4
      %s215 = smul.addr %s211, 32
      %s216 = sadd.s32 %s214, %s215
      %s217 = smul.addr %s216, 4
      %s218 = scalar_lea.vmem %s3, %s217
      %s219 = smul.u32 8, %s19
      %p220 = scmp.lt.s32.totalorder %s18, 1
      %s221 = scalar_select %p220, %s18, 1
      %p222 = scmp.lt.s32.totalorder %s219, 7
      %s223 = scalar_select %p222, %s219, 7
      %s224 = smul.addr %s221, 8
      %s225 = sadd.s32 %s223, %s224
      %s226 = smul.addr %s225, 4
      %s227 = scalar_lea.vmem %s0, %s226
      %s228 = smul.u32 8, %s19
      %p229 = scmp.lt.s32.totalorder %s18, 1
      %s230 = scalar_select %p229, %s18, 1
      %s231 = smul.addr %s230, 64
      %s232 = smul.addr %s231, 4
      %s233 = scalar_lea.vmem %s1, %s232
      %p234 = scmp.lt.s32.totalorder %s18, 1
      %s235 = scalar_select %p234, %s18, 1
      %s236 = smul.addr %s235, 4
      %s237 = scalar_lea.vmem %s2, %s236
      %s238 = smul.u32 8, %s19
      %p239 = scmp.lt.s32.totalorder %s18, 1
      %s240 = scalar_select %p239, %s18, 1
      %p241 = scmp.lt.s32.totalorder %s238, 7
      %s242 = scalar_select %p241, %s238, 7
      %s243 = smul.addr %s242, 4
      %s244 = smul.addr %s240, 32
      %s245 = sadd.s32 %s243, %s244
      %s246 = smul.addr %s245, 4
      %s247 = scalar_lea.vmem %s3, %s246
      %s248 = smul.u32 8, %s19
      %v250 = vld [vmem:[%s227] sm:$0xf]
      %v251 = vld [vmem:[%s227 + $0x4] sm:$0xf]
      %v252 = vld [vmem:[%s227 + $0x8] sm:$0xf]
      %v253 = vld [vmem:[%s227 + $0xc] sm:$0xf]
      %v254 = vld [vmem:[%s227 + $0x10] sm:$0xf]
      %v255 = vld [vmem:[%s227 + $0x14] sm:$0xf]
      %v256 = vld [vmem:[%s227 + $0x18] sm:$0xf]
      %v257 = vld [vmem:[%s227 + $0x1c] sm:$0xf]
      %v258 = vld [vmem:[%s233] sm:$0xff]
      %v259 = vld [vmem:[%s233 + $0x8] sm:$0xff]
      %v260 = vld [vmem:[%s233 + $0x10] sm:$0xff]
      %v261 = vld [vmem:[%s233 + $0x18] sm:$0xff]
      %v262 = vld [vmem:[%s233 + $0x20] sm:$0xff]
      %v263 = vld [vmem:[%s233 + $0x28] sm:$0xff]
      %v264 = vld [vmem:[%s233 + $0x30] sm:$0xff]
      %v265 = vld [vmem:[%s233 + $0x38] sm:$0xff]
      %v266 = vld [vmem:[%s233 + $0x40] sm:$0xff]
      %v267 = vld [vmem:[%s233 + $0x48] sm:$0xff]
      %v268 = vld [vmem:[%s233 + $0x50] sm:$0xff]
      %v269 = vld [vmem:[%s233 + $0x58] sm:$0xff]
      %v270 = vld [vmem:[%s233 + $0x60] sm:$0xff]
      %v271 = vld [vmem:[%s233 + $0x68] sm:$0xff]
      %v272 = vld [vmem:[%s233 + $0x70] sm:$0xff]
      %v273 = vld [vmem:[%s233 + $0x78] sm:$0xff]
      %v274 = vld [vmem:[%s233 + $0x80] sm:$0xff]
      %v275 = vld [vmem:[%s233 + $0x88] sm:$0xff]
      %v276 = vld [vmem:[%s233 + $0x90] sm:$0xff]
      %v277 = vld [vmem:[%s233 + $0x98] sm:$0xff]
      %v278 = vld [vmem:[%s233 + $0xa0] sm:$0xff]
      %v279 = vld [vmem:[%s233 + $0xa8] sm:$0xff]
      %v280 = vld [vmem:[%s233 + $0xb0] sm:$0xff]
      %v281 = vld [vmem:[%s233 + $0xb8] sm:$0xff]
      %v282 = vld [vmem:[%s233 + $0xc0] sm:$0xff]
      %v283 = vld [vmem:[%s233 + $0xc8] sm:$0xff]
      %v284 = vld [vmem:[%s233 + $0xd0] sm:$0xff]
      %v285 = vld [vmem:[%s233 + $0xd8] sm:$0xff]
      %v286 = vld [vmem:[%s233 + $0xe0] sm:$0xff]
      %v287 = vld [vmem:[%s233 + $0xe8] sm:$0xff]
      %v288 = vld [vmem:[%s233 + $0xf0] sm:$0xff]
      %v289 = vld [vmem:[%s233 + $0xf8] sm:$0xff]
      %v290 = vld [vmem:[%s237] sm:$0xf]
      %v292 = vlaneseq
      %v293 = vshrl.u32 %v292, 7
      %v294 = vsub.s32 0, %v293
      %v295 = vrot.slane %v290, %v294
      %v296 = vlaneseq
      %v297 = vshrl.u32 %v296, 7
      %v298 = vsub.s32 1, %v297
      %v299 = vrot.slane %v290, %v298
      %v300 = vlaneseq
      %v301 = vshrl.u32 %v300, 7
      %v302 = vsub.s32 2, %v301
      %v303 = vrot.slane %v290, %v302
      %v304 = vlaneseq
      %v305 = vshrl.u32 %v304, 7
      %v306 = vsub.s32 3, %v305
      %v307 = vrot.slane %v290, %v306
      %v320 = vunpack.c.l.b16 %v250
      %v321 = vunpack.c.l.b16 %v251
      %v322 = vunpack.c.l.b16 %v252
      %v323 = vunpack.c.l.b16 %v253
      %v324 = vunpack.c.l.b16 %v254
      %v325 = vunpack.c.l.b16 %v255
      %v326 = vunpack.c.l.b16 %v256
      %v327 = vunpack.c.l.b16 %v257
      %v328 = vpack.c.b16 %v321, %v320
      %v329 = vpack.c.b16 %v323, %v322
      %v330 = vpack.c.b16 %v325, %v324
      %v331 = vpack.c.b16 %v327, %v326
      %v368 = vunpack.c.l.b16 %v258
      %v369 = vunpack.c.h.b16 %v258
      %v370 = vunpack.c.l.b16 %v259
      %v371 = vunpack.c.h.b16 %v259
      %v372 = vunpack.c.l.b16 %v260
      %v373 = vunpack.c.h.b16 %v260
      %v374 = vunpack.c.l.b16 %v261
      %v375 = vunpack.c.h.b16 %v261
      %v376 = vunpack.c.l.b16 %v262
      %v377 = vunpack.c.h.b16 %v262
      %v378 = vunpack.c.l.b16 %v263
      %v379 = vunpack.c.h.b16 %v263
      %v380 = vunpack.c.l.b16 %v264
      %v381 = vunpack.c.h.b16 %v264
      %v382 = vunpack.c.l.b16 %v265
      %v383 = vunpack.c.h.b16 %v265
      %v384 = vunpack.c.l.b16 %v266
      %v385 = vunpack.c.h.b16 %v266
      %v386 = vunpack.c.l.b16 %v267
      %v387 = vunpack.c.h.b16 %v267
      %v388 = vunpack.c.l.b16 %v268
      %v389 = vunpack.c.h.b16 %v268
      %v390 = vunpack.c.l.b16 %v269
      %v391 = vunpack.c.h.b16 %v269
      %v392 = vunpack.c.l.b16 %v270
      %v393 = vunpack.c.h.b16 %v270
      %v394 = vunpack.c.l.b16 %v271
      %v395 = vunpack.c.h.b16 %v271
      %v396 = vunpack.c.l.b16 %v272
      %v397 = vunpack.c.h.b16 %v272
      %v398 = vunpack.c.l.b16 %v273
      %v399 = vunpack.c.h.b16 %v273
      %v400 = vunpack.c.l.b16 %v274
      %v401 = vunpack.c.h.b16 %v274
      %v402 = vunpack.c.l.b16 %v275
      %v403 = vunpack.c.h.b16 %v275
      %v404 = vunpack.c.l.b16 %v276
      %v405 = vunpack.c.h.b16 %v276
      %v406 = vunpack.c.l.b16 %v277
      %v407 = vunpack.c.h.b16 %v277
      %v408 = vunpack.c.l.b16 %v278
      %v409 = vunpack.c.h.b16 %v278
      %v410 = vunpack.c.l.b16 %v279
      %v411 = vunpack.c.h.b16 %v279
      %v412 = vunpack.c.l.b16 %v280
      %v413 = vunpack.c.h.b16 %v280
      %v414 = vunpack.c.l.b16 %v281
      %v415 = vunpack.c.h.b16 %v281
      %v416 = vunpack.c.l.b16 %v282
      %v417 = vunpack.c.h.b16 %v282
      %v418 = vunpack.c.l.b16 %v283
      %v419 = vunpack.c.h.b16 %v283
      %v420 = vunpack.c.l.b16 %v284
      %v421 = vunpack.c.h.b16 %v284
      %v422 = vunpack.c.l.b16 %v285
      %v423 = vunpack.c.h.b16 %v285
      %v424 = vunpack.c.l.b16 %v286
      %v425 = vunpack.c.h.b16 %v286
      %v426 = vunpack.c.l.b16 %v287
      %v427 = vunpack.c.h.b16 %v287
      %v428 = vunpack.c.l.b16 %v288
      %v429 = vunpack.c.h.b16 %v288
      %v430 = vunpack.c.l.b16 %v289
      %v431 = vunpack.c.h.b16 %v289
      %v432 = vpack.c.b16 %v372, %v368
      %v433 = vpack.c.b16 %v373, %v369
      %v434 = vpack.c.b16 %v374, %v370
      %v435 = vpack.c.b16 %v375, %v371
      %v436 = vpack.c.b16 %v380, %v376
      %v437 = vpack.c.b16 %v381, %v377
      %v438 = vpack.c.b16 %v382, %v378
      %v439 = vpack.c.b16 %v383, %v379
      %v440 = vpack.c.b16 %v388, %v384
      %v441 = vpack.c.b16 %v389, %v385
      %v442 = vpack.c.b16 %v390, %v386
      %v443 = vpack.c.b16 %v391, %v387
      %v444 = vpack.c.b16 %v396, %v392
      %v445 = vpack.c.b16 %v397, %v393
      %v446 = vpack.c.b16 %v398, %v394
      %v447 = vpack.c.b16 %v399, %v395
      %v448 = vpack.c.b16 %v404, %v400
      %v449 = vpack.c.b16 %v405, %v401
      %v450 = vpack.c.b16 %v406, %v402
      %v451 = vpack.c.b16 %v407, %v403
      %v452 = vpack.c.b16 %v412, %v408
      %v453 = vpack.c.b16 %v413, %v409
      %v454 = vpack.c.b16 %v414, %v410
      %v455 = vpack.c.b16 %v415, %v411
      %v456 = vpack.c.b16 %v420, %v416
      %v457 = vpack.c.b16 %v421, %v417
      %v458 = vpack.c.b16 %v422, %v418
      %v459 = vpack.c.b16 %v423, %v419
      %v460 = vpack.c.b16 %v428, %v424
      %v461 = vpack.c.b16 %v429, %v425
      %v462 = vpack.c.b16 %v430, %v426
      %v463 = vpack.c.b16 %v431, %v427
      %496 = vmatprep.subr.bf16.mxu0 %v433
      %497 = vmatpush1.bf16.msra.mxu0 %v432
      %498 = vmatprep.subr.bf16.mxu0 %v437
      %499 = vmatpush1.bf16.msra.mxu0 %v436
      %500 = vmatprep.subr.bf16.mxu0 %v441
      %501 = vmatpush1.bf16.msra.mxu0 %v440
      %502 = vmatprep.subr.bf16.mxu0 %v445
      %503 = vmatpush1.bf16.msra.mxu0 %v444
      %504 = vmatprep.subr.bf16.mxu0 %v449
      %505 = vmatpush1.bf16.msra.mxu0 %v448
      %506 = vmatprep.subr.bf16.mxu0 %v453
      %507 = vmatpush1.bf16.msra.mxu0 %v452
      %508 = vmatprep.subr.bf16.mxu0 %v457
      %509 = vmatpush1.bf16.msra.mxu0 %v456
      %510 = vmatprep.subr.bf16.mxu0 %v461
      %511 = vmatpush1.bf16.msra.mxu0 %v460
      %512 = vmatprep.subr.bf16.mxu0 0
      %513 = vmatpush1.bf16.msra.mxu0 0
      %514 = vmatprep.subr.bf16.mxu0 0
      %515 = vmatpush1.bf16.msra.mxu0 0
      %516 = vmatprep.subr.bf16.mxu0 0
      %517 = vmatpush1.bf16.msra.mxu0 0
      %518 = vmatprep.subr.bf16.mxu0 0
      %519 = vmatpush1.bf16.msra.mxu0 0
      %520 = vmatprep.subr.bf16.mxu0 0
      %521 = vmatpush1.bf16.msra.mxu0 0
      %522 = vmatprep.subr.bf16.mxu0 0
      %523 = vmatpush1.bf16.msra.mxu0 0
      %524 = vmatprep.subr.bf16.mxu0 0
      %525 = vmatpush1.bf16.msra.mxu0 0
      %526 = vmatprep.subr.bf16.mxu0 0
      %527 = vmatpush1.bf16.msra.mxu0 0
      %528 = vmatprep.mubr.bf16.mxu0 0
      %529 = vmatmul.mubr.bf16.gmra.mrb[0].mxu0 %v328
      %v530 = vpop.f32.mrb[0].mxu0
      %v531 = vadd.f32 %v295, %v530
      %v532 = vpop.f32.mrb[0].mxu0
      %v533 = vadd.f32 %v299, %v532
      %v534 = vpop.f32.mrb[0].mxu0
      %v535 = vadd.f32 %v295, %v534
      %v536 = vpop.f32.mrb[0].mxu0
      %v537 = vadd.f32 %v299, %v536
      %538 = vmatprep.mubr.bf16.mxu0 0
      %539 = vmatmul.mubr.bf16.gmra.mrb[0].mxu0 %v329
      %v540 = vpop.f32.mrb[0].mxu0
      %v541 = vadd.f32 %v295, %v540
      %v542 = vpop.f32.mrb[0].mxu0
      %v543 = vadd.f32 %v299, %v542
      %v544 = vpop.f32.mrb[0].mxu0
      %v545 = vadd.f32 %v295, %v544
      %v546 = vpop.f32.mrb[0].mxu0
      %v547 = vadd.f32 %v299, %v546
      %548 = vmatprep.mubr.bf16.mxu0 0
      %549 = vmatmul.mubr.bf16.gmra.mrb[0].mxu0 %v330
      %v550 = vpop.f32.mrb[0].mxu0
      %v551 = vadd.f32 %v295, %v550
      %v552 = vpop.f32.mrb[0].mxu0
      %v553 = vadd.f32 %v299, %v552
      %v554 = vpop.f32.mrb[0].mxu0
      %v555 = vadd.f32 %v295, %v554
      %v556 = vpop.f32.mrb[0].mxu0
      %v557 = vadd.f32 %v299, %v556
      %558 = vmatprep.mubr.bf16.mxu0 0
      %559 = vmatmul.mubr.bf16.gmra.mrb[0].mxu0 %v331
      %v560 = vpop.f32.mrb[0].mxu0
      %v561 = vadd.f32 %v295, %v560
      %v562 = vpop.f32.mrb[0].mxu0
      %v563 = vadd.f32 %v299, %v562
      %v564 = vpop.f32.mrb[0].mxu0
      %v565 = vadd.f32 %v295, %v564
      %v566 = vpop.f32.mrb[0].mxu0
      %v567 = vadd.f32 %v299, %v566
      %568 = vdwg.mxu0
      %569 = vmatprep.subr.bf16.mxu0 %v435
      %570 = vmatpush1.bf16.msra.mxu0 %v434
      %571 = vmatprep.subr.bf16.mxu0 %v439
      %572 = vmatpush1.bf16.msra.mxu0 %v438
      %573 = vmatprep.subr.bf16.mxu0 %v443
      %574 = vmatpush1.bf16.msra.mxu0 %v442
      %575 = vmatprep.subr.bf16.mxu0 %v447
      %576 = vmatpush1.bf16.msra.mxu0 %v446
      %577 = vmatprep.subr.bf16.mxu0 %v451
      %578 = vmatpush1.bf16.msra.mxu0 %v450
      %579 = vmatprep.subr.bf16.mxu0 %v455
      %580 = vmatpush1.bf16.msra.mxu0 %v454
      %581 = vmatprep.subr.bf16.mxu0 %v459
      %582 = vmatpush1.bf16.msra.mxu0 %v458
      %583 = vmatprep.subr.bf16.mxu0 %v463
      %584 = vmatpush1.bf16.msra.mxu0 %v462
      %585 = vmatprep.subr.bf16.mxu0 0
      %586 = vmatpush1.bf16.msra.mxu0 0
      %587 = vmatprep.subr.bf16.mxu0 0
      %588 = vmatpush1.bf16.msra.mxu0 0
      %589 = vmatprep.subr.bf16.mxu0 0
      %590 = vmatpush1.bf16.msra.mxu0 0
      %591 = vmatprep.subr.bf16.mxu0 0
      %592 = vmatpush1.bf16.msra.mxu0 0
      %593 = vmatprep.subr.bf16.mxu0 0
      %594 = vmatpush1.bf16.msra.mxu0 0
      %595 = vmatprep.subr.bf16.mxu0 0
      %596 = vmatpush1.bf16.msra.mxu0 0
      %597 = vmatprep.subr.bf16.mxu0 0
      %598 = vmatpush1.bf16.msra.mxu0 0
      %599 = vmatprep.subr.bf16.mxu0 0
      %600 = vmatpush1.bf16.msra.mxu0 0
      %601 = vmatprep.mubr.bf16.mxu0 0
      %602 = vmatmul.mubr.bf16.gmra.mrb[0].mxu0 %v328
      %v603 = vpop.f32.mrb[0].mxu0
      %v604 = vadd.f32 %v303, %v603
      %v605 = vpop.f32.mrb[0].mxu0
      %v606 = vadd.f32 %v307, %v605
      %v607 = vpop.f32.mrb[0].mxu0
      %v608 = vadd.f32 %v303, %v607
      %v609 = vpop.f32.mrb[0].mxu0
      %v610 = vadd.f32 %v307, %v609
      %611 = vmatprep.mubr.bf16.mxu0 0
      %612 = vmatmul.mubr.bf16.gmra.mrb[0].mxu0 %v329
      %v613 = vpop.f32.mrb[0].mxu0
      %v614 = vadd.f32 %v303, %v613
      %v615 = vpop.f32.mrb[0].mxu0
      %v616 = vadd.f32 %v307, %v615
      %v617 = vpop.f32.mrb[0].mxu0
      %v618 = vadd.f32 %v303, %v617
      %v619 = vpop.f32.mrb[0].mxu0
      %v620 = vadd.f32 %v307, %v619
      %621 = vmatprep.mubr.bf16.mxu0 0
      %622 = vmatmul.mubr.bf16.gmra.mrb[0].mxu0 %v330
      %v623 = vpop.f32.mrb[0].mxu0
      %v624 = vadd.f32 %v303, %v623
      %v625 = vpop.f32.mrb[0].mxu0
      %v626 = vadd.f32 %v307, %v625
      %v627 = vpop.f32.mrb[0].mxu0
      %v628 = vadd.f32 %v303, %v627
      %v629 = vpop.f32.mrb[0].mxu0
      %v630 = vadd.f32 %v307, %v629
      %631 = vmatprep.mubr.bf16.mxu0 0
      %632 = vmatmul.mubr.bf16.gmra.mrb[0].mxu0 %v331
      %v633 = vpop.f32.mrb[0].mxu0
      %v634 = vadd.f32 %v303, %v633
      %v635 = vpop.f32.mrb[0].mxu0
      %v636 = vadd.f32 %v307, %v635
      %v637 = vpop.f32.mrb[0].mxu0
      %v638 = vadd.f32 %v303, %v637
      %v639 = vpop.f32.mrb[0].mxu0
      %v640 = vadd.f32 %v307, %v639
      %641 = vdwg.mxu0
      %v642 = vpack.c.bf16 %v535, %v531
      %v643 = vpack.c.bf16 %v537, %v533
      %v644 = vpack.c.bf16 %v608, %v604
      %v645 = vpack.c.bf16 %v610, %v606
      %v646 = vpack.c.bf16 %v545, %v541
      %v647 = vpack.c.bf16 %v547, %v543
      %v648 = vpack.c.bf16 %v618, %v614
      %v649 = vpack.c.bf16 %v620, %v616
      %v650 = vpack.c.bf16 %v555, %v551
      %v651 = vpack.c.bf16 %v557, %v553
      %v652 = vpack.c.bf16 %v628, %v624
      %v653 = vpack.c.bf16 %v630, %v626
      %v654 = vpack.c.bf16 %v565, %v561
      %v655 = vpack.c.bf16 %v567, %v563
      %v656 = vpack.c.bf16 %v638, %v634
      %v657 = vpack.c.bf16 %v640, %v636
      %v674 = vunpack.c.l.b16 %v642
      %v675 = vunpack.c.l.b16 %v643
      %v676 = vunpack.c.l.b16 %v644
      %v677 = vunpack.c.l.b16 %v645
      %v678 = vunpack.c.h.b16 %v642
      %v679 = vunpack.c.h.b16 %v643
      %v680 = vunpack.c.h.b16 %v644
      %v681 = vunpack.c.h.b16 %v645
      %v682 = vunpack.c.l.b16 %v646
      %v683 = vunpack.c.l.b16 %v647
      %v684 = vunpack.c.l.b16 %v648
      %v685 = vunpack.c.l.b16 %v649
      %v686 = vunpack.c.h.b16 %v646
      %v687 = vunpack.c.h.b16 %v647
      %v688 = vunpack.c.h.b16 %v648
      %v689 = vunpack.c.h.b16 %v649
      %v690 = vunpack.c.l.b16 %v650
      %v691 = vunpack.c.l.b16 %v651
      %v692 = vunpack.c.l.b16 %v652
      %v693 = vunpack.c.l.b16 %v653
      %v694 = vunpack.c.h.b16 %v650
      %v695 = vunpack.c.h.b16 %v651
      %v696 = vunpack.c.h.b16 %v652
      %v697 = vunpack.c.h.b16 %v653
      %v698 = vunpack.c.l.b16 %v654
      %v699 = vunpack.c.l.b16 %v655
      %v700 = vunpack.c.l.b16 %v656
      %v701 = vunpack.c.l.b16 %v657
      %v702 = vunpack.c.h.b16 %v654
      %v703 = vunpack.c.h.b16 %v655
      %v704 = vunpack.c.h.b16 %v656
      %v705 = vunpack.c.h.b16 %v657
      %v706 = vpack.c.b16 %v675, %v674
      %v707 = vpack.c.b16 %v677, %v676
      %v708 = vpack.c.b16 %v679, %v678
      %v709 = vpack.c.b16 %v681, %v680
      %v710 = vpack.c.b16 %v683, %v682
      %v711 = vpack.c.b16 %v685, %v684
      %v712 = vpack.c.b16 %v687, %v686
      %v713 = vpack.c.b16 %v689, %v688
      %v714 = vpack.c.b16 %v691, %v690
      %v715 = vpack.c.b16 %v693, %v692
      %v716 = vpack.c.b16 %v695, %v694
      %v717 = vpack.c.b16 %v697, %v696
      %v718 = vpack.c.b16 %v699, %v698
      %v719 = vpack.c.b16 %v701, %v700
      %v720 = vpack.c.b16 %v703, %v702
      %v721 = vpack.c.b16 %v705, %v704
      %738 = vst [vmem:[%s247] sm:$0xff] %v706
      %739 = vst [vmem:[%s247 + $0x8] sm:$0xff] %v707
      %740 = vst [vmem:[%s247 + $0x10] sm:$0xff] %v708
      %741 = vst [vmem:[%s247 + $0x18] sm:$0xff] %v709
      %742 = vst [vmem:[%s247 + $0x20] sm:$0xff] %v710
      %743 = vst [vmem:[%s247 + $0x28] sm:$0xff] %v711
      %744 = vst [vmem:[%s247 + $0x30] sm:$0xff] %v712
      %745 = vst [vmem:[%s247 + $0x38] sm:$0xff] %v713
      %746 = vst [vmem:[%s247 + $0x40] sm:$0xff] %v714
      %747 = vst [vmem:[%s247 + $0x48] sm:$0xff] %v715
      %748 = vst [vmem:[%s247 + $0x50] sm:$0xff] %v716
      %749 = vst [vmem:[%s247 + $0x58] sm:$0xff] %v717
      %750 = vst [vmem:[%s247 + $0x60] sm:$0xff] %v718
      %751 = vst [vmem:[%s247 + $0x68] sm:$0xff] %v719
      %752 = vst [vmem:[%s247 + $0x70] sm:$0xff] %v720
      %753 = vst [vmem:[%s247 + $0x78] sm:$0xff] %v721
      %s754 = smul.u32 8, %s19
      %p755 = scmp.lt.s32.totalorder %s18, 1
      %s756 = scalar_select %p755, %s18, 1
      %p757 = scmp.lt.s32.totalorder %s754, 7
      %s758 = scalar_select %p757, %s754, 7
      %s759 = smul.addr %s758, 4
      %s760 = smul.addr %s756, 32
      %s761 = sadd.s32 %s759, %s760
      %s762 = smul.addr %s761, 4
      %s763 = scalar_lea.vmem %s3, %s762
      // Predicated region
      $region33: #{elmo_lstm_encoder_forward.6} parent=31 // pred_check
        %p764 = pneg %p126
      $region34: #{elmo_lstm_encoder_forward.6} parent=31 // pred_check_branch
        %766 = sbr.rel (%p764) target = $region36
      $region35: #{elmo_lstm_encoder_forward.6} parent=31 // pred_region
        %s767 = smul.u32 8, %s19
      $region36: #{elmo_lstm_encoder_forward.6} parent=31 // pred_fallthru
        _
    $region32: #{elmo_lstm_encoder_forward.6} parent=5 // pred_fallthru
      _
    %p768 = scmp.le.s32.totalorder 2, %s9
    // Predicated region
    $region37: #{elmo_lstm_encoder_forward.6} parent=5 // pred_check
      %p769 = pneg %p768
    $region38: #{elmo_lstm_encoder_forward.6} parent=5 // pred_check_branch
      %771 = sbr.rel (%p769) target = $region40
    $region39: #{elmo_lstm_encoder_forward.6} parent=5 // pred_region
      %s772 = ssub.s32 %s9, 2
      // Predicated region
      $region41: #{elmo_lstm_encoder_forward.6} parent=39 // pred_check
        %p773 = pneg %p132
      $region42: #{elmo_lstm_encoder_forward.6} parent=39 // pred_check_branch
        %775 = sbr.rel (%p773) target = $region44
      $region43: #{elmo_lstm_encoder_forward.6} parent=39 // pred_region
        %s776 = smul.u32 8, %s21
        %p777 = scmp.lt.s32.totalorder %s20, 1
        %s778 = scalar_select %p777, %s20, 1
        %p779 = scmp.lt.s32.totalorder %s776, 7
        %s780 = scalar_select %p779, %s776, 7
        %s781 = smul.addr %s780, 4
        %s782 = smul.addr %s778, 32
        %s783 = sadd.s32 %s781, %s782
        %s784 = smul.addr %s783, 4
        %s785 = scalar_lea.vmem %s3, %s784
      $region44: #{elmo_lstm_encoder_forward.6} parent=39 // pred_fallthru
        _
    $region40: #{elmo_lstm_encoder_forward.6} parent=5 // pred_fallthru
      _
  $region6: #{elmo_lstm_encoder_forward.6} parent=0 // loop_footer
    %s13 = sadd.s32 1, %s9
  $region7: #{elmo_lstm_encoder_forward.6} parent=0 // loop_footer_branch
    %8 = sbr.rel target = $region3
  $region8: #{elmo_lstm_encoder_forward.6} parent=0 // loop_exit
    _

// kernel: elmo_lstm_encoder_forward.8
$region0: #{elmo_lstm_encoder_forward.8}
  #allocation0 [shape = 'u32[]', space=smem, size = 0x4, offset = 0x4, fixed_abs, tag = 'smem constant byte address 0x4 - core index']
  #allocation1 [shape = 'u32[144,128]{1,0:T(1,128)}', space=vmem, size = 0x12000, scoped, tag = 'internal scratch']
  %s0 = inlined_call_operand.vmem [shape: bf16[2,64,128], index: 0, kind: input, shape index: {}]
  %s1 = inlined_call_operand.vmem [shape: bf16[2,128,128], index: 1, kind: input, shape index: {}]
  %s2 = inlined_call_operand.vmem [shape: f32[2,1,128], index: 2, kind: input, shape index: {}]
  %s3 = inlined_call_operand.vmem [shape: bf16[2,64,128], index: 3, kind: output, shape index: {}]
  %s4 = sld [smem:[#allocation0]]
  $region45: #{elmo_lstm_encoder_forward.8} parent=0
    _
  %s6 = ssub.s32 1, %s4
  %s7 = scalar_select 0, %s6, %s4
  loop: start=0, step=1, limit=4
  $region2: #{elmo_lstm_encoder_forward.8} parent=0 // loop_pre_header
    _
  $region3: #{elmo_lstm_encoder_forward.8} parent=0 // loop_header
    %s9 = sphi 0, %s13
    %p10 = scmp.ge.s32.totalorder %s9, 4
    %s16 = sphi 0, %s28
    %s17 = sphi 0, %s24
    %s18 = sphi 0, %s16
    %s19 = sphi 0, %s17
    %s20 = sphi 0, %s18
    %s21 = sphi 0, %s19
    %s33 = sphi 0, %s35
    %s36 = sphi 0, %s33
    %s37 = sphi 0, %s36
    %s53 = sphi 0, %s37
    %s59 = sphi 0, %s61
    %s62 = sphi 0, %s59
    %s63 = sphi 0, %s62
    %s79 = sphi 0, %s63
    %s85 = sphi 0, %s87
    %s88 = sphi 0, %s85
    %s89 = sphi 0, %s88
    %s105 = sphi 0, %s89
    %s113 = sphi 0, %s115
    %s116 = sphi 0, %s113
    %s117 = sphi 0, %s116
    %s133 = sphi 0, %s117
  $region4: #{elmo_lstm_encoder_forward.8} parent=0 // loop_header_branch
    %12 = sbr.rel (%p10) target = $region8
  $region5: #{elmo_lstm_encoder_forward.8} parent=0 // loop_body
    %s14 = ssub.s32 %s9, 1
    %s15 = ssub.s32 %s9, 2
    %s22 = sadd.s32 1, %s17
    %p23 = scmp.ge.s32.totalorder %s22, 1
    %s24 = scalar_select %p23, 0, %s22
    %s25 = sadd.s32 1, %s16
    %s26 = scalar_select %p23, %s25, %s16
    %p27 = scmp.ge.s32.totalorder %s26, 2
    %s28 = scalar_select %p27, 0, %s26
    %s29 = ssub.s32 %s16, %s28
    %s30 = ssub.s32 %s17, %s24
    %s31 = sor.u32 %s29, %s30
    %p32 = scmp.eq.s32.totalorder %s31, 0
    %s34 = sadd.s32 %s33, 1
    %s35 = scalar_select %p32, %s33, %s34
    %p38 = pneg %p32
    %p39 = scmp.eq.s32.totalorder %s9, 1
    %p40 = por %p38, %p39
    %p41 = scmp.ne.s32.totalorder %s33, %s36
    %p42 = scmp.eq.s32.totalorder %s9, 0
    %p43 = por %p41, %p42
    %p44 = scmp.ne.s32.totalorder %s33, %s36
    %p45 = scmp.eq.s32.totalorder %s14, 1
    %p46 = por %p44, %p45
    %p47 = scmp.ne.s32.totalorder %s36, %s37
    %p48 = scmp.eq.s32.totalorder %s14, 0
    %p49 = por %p47, %p48
    %p50 = scmp.ne.s32.totalorder %s36, %s37
    %p51 = scmp.eq.s32.totalorder %s15, 1
    %p52 = por %p50, %p51
    %p54 = scmp.ne.s32.totalorder %s37, %s53
    %p55 = scmp.eq.s32.totalorder %s15, 0
    %p56 = por %p54, %p55
    %s57 = ssub.s32 %s16, %s28
    %p58 = scmp.eq.s32.totalorder %s57, 0
    %s60 = sadd.s32 %s59, 1
    %s61 = scalar_select %p58, %s59, %s60
    %p64 = pneg %p58
    %p65 = scmp.eq.s32.totalorder %s9, 1
    %p66 = por %p64, %p65
    %p67 = scmp.ne.s32.totalorder %s59, %s62
    %p68 = scmp.eq.s32.totalorder %s9, 0
    %p69 = por %p67, %p68
    %p70 = scmp.ne.s32.totalorder %s59, %s62
    %p71 = scmp.eq.s32.totalorder %s14, 1
    %p72 = por %p70, %p71
    %p73 = scmp.ne.s32.totalorder %s62, %s63
    %p74 = scmp.eq.s32.totalorder %s14, 0
    %p75 = por %p73, %p74
    %p76 = scmp.ne.s32.totalorder %s62, %s63
    %p77 = scmp.eq.s32.totalorder %s15, 1
    %p78 = por %p76, %p77
    %p80 = scmp.ne.s32.totalorder %s63, %s79
    %p81 = scmp.eq.s32.totalorder %s15, 0
    %p82 = por %p80, %p81
    %s83 = ssub.s32 %s16, %s28
    %p84 = scmp.eq.s32.totalorder %s83, 0
    %s86 = sadd.s32 %s85, 1
    %s87 = scalar_select %p84, %s85, %s86
    %p90 = pneg %p84
    %p91 = scmp.eq.s32.totalorder %s9, 1
    %p92 = por %p90, %p91
    %p93 = scmp.ne.s32.totalorder %s85, %s88
    %p94 = scmp.eq.s32.totalorder %s9, 0
    %p95 = por %p93, %p94
    %p96 = scmp.ne.s32.totalorder %s85, %s88
    %p97 = scmp.eq.s32.totalorder %s14, 1
    %p98 = por %p96, %p97
    %p99 = scmp.ne.s32.totalorder %s88, %s89
    %p100 = scmp.eq.s32.totalorder %s14, 0
    %p101 = por %p99, %p100
    %p102 = scmp.ne.s32.totalorder %s88, %s89
    %p103 = scmp.eq.s32.totalorder %s15, 1
    %p104 = por %p102, %p103
    %p106 = scmp.ne.s32.totalorder %s89, %s105
    %p107 = scmp.eq.s32.totalorder %s15, 0
    %p108 = por %p106, %p107
    %s109 = ssub.s32 %s16, %s28
    %s110 = ssub.s32 %s17, %s24
    %s111 = sor.u32 %s109, %s110
    %p112 = scmp.eq.s32.totalorder %s111, 0
    %s114 = sadd.s32 %s113, 1
    %s115 = scalar_select %p112, %s113, %s114
    %p118 = pneg %p112
    %p119 = scmp.eq.s32.totalorder %s9, 1
    %p120 = por %p118, %p119
    %p121 = scmp.ne.s32.totalorder %s113, %s116
    %p122 = scmp.eq.s32.totalorder %s9, 0
    %p123 = por %p121, %p122
    %p124 = scmp.ne.s32.totalorder %s113, %s116
    %p125 = scmp.eq.s32.totalorder %s14, 1
    %p126 = por %p124, %p125
    %p127 = scmp.ne.s32.totalorder %s116, %s117
    %p128 = scmp.eq.s32.totalorder %s14, 0
    %p129 = por %p127, %p128
    %p130 = scmp.ne.s32.totalorder %s116, %s117
    %p131 = scmp.eq.s32.totalorder %s15, 1
    %p132 = por %p130, %p131
    %p134 = scmp.ne.s32.totalorder %s117, %s133
    %p135 = scmp.eq.s32.totalorder %s15, 0
    %p136 = por %p134, %p135
    %p137 = scmp.le.s32.totalorder 1, %s9
    %p138 = scmp.lt.s32.totalorder %s9, 3
    %p139 = pnand %p137, %p138
    %p140 = pneg %p139
    // Predicated region
    $region9: #{elmo_lstm_encoder_forward.8} parent=5 // pred_check
      _
    $region10: #{elmo_lstm_encoder_forward.8} parent=5 // pred_check_branch
      %142 = sbr.rel (%p139) target = $region12
    $region11: #{elmo_lstm_encoder_forward.8} parent=5 // pred_region
      %s143 = ssub.s32 %s9, 1
    $region12: #{elmo_lstm_encoder_forward.8} parent=5 // pred_fallthru
      _
    %p144 = scmp.lt.s32.totalorder %s9, 2
    // Predicated region
    $region13: #{elmo_lstm_encoder_forward.8} parent=5 // pred_check
      %p145 = pneg %p144
    $region14: #{elmo_lstm_encoder_forward.8} parent=5 // pred_check_branch
      %147 = sbr.rel (%p145) target = $region16
    $region15: #{elmo_lstm_encoder_forward.8} parent=5 // pred_region
      // Predicated region
      $region17: #{elmo_lstm_encoder_forward.8} parent=15 // pred_check
        %p148 = pneg %p43
      $region18: #{elmo_lstm_encoder_forward.8} parent=15 // pred_check_branch
        %150 = sbr.rel (%p148) target = $region20
      $region19: #{elmo_lstm_encoder_forward.8} parent=15 // pred_region
        %s151 = smul.u32 8, %s17
        %p152 = scmp.lt.s32.totalorder %s16, 1
        %s153 = scalar_select %p152, %s16, 1
        %p154 = scmp.lt.s32.totalorder %s151, 7
        %s155 = scalar_select %p154, %s151, 7
        %s156 = smul.addr %s153, 8
        %s157 = sadd.s32 %s155, %s156
        %s158 = smul.addr %s157, 4
        %s159 = scalar_lea.vmem %s0, %s158
        %s160 = smul.u32 8, %s17
      $region20: #{elmo_lstm_encoder_forward.8} parent=15 // pred_fallthru
        _
      // Predicated region
      $region21: #{elmo_lstm_encoder_forward.8} parent=15 // pred_check
        %p161 = pneg %p69
      $region22: #{elmo_lstm_encoder_forward.8} parent=15 // pred_check_branch
        %163 = sbr.rel (%p161) target = $region24
      $region23: #{elmo_lstm_encoder_forward.8} parent=15 // pred_region
        %p164 = scmp.lt.s32.totalorder %s16, 1
        %s165 = scalar_select %p164, %s16, 1
        %s166 = smul.addr %s165, 16
        %s167 = smul.addr %s166, 4
        %s168 = scalar_lea.vmem %s1, %s167
      $region24: #{elmo_lstm_encoder_forward.8} parent=15 // pred_fallthru
        _
      // Predicated region
      $region25: #{elmo_lstm_encoder_forward.8} parent=15 // pred_check
        %p169 = pneg %p95
      $region26: #{elmo_lstm_encoder_forward.8} parent=15 // pred_check_branch
        %171 = sbr.rel (%p169) target = $region28
      $region27: #{elmo_lstm_encoder_forward.8} parent=15 // pred_region
        %p172 = scmp.lt.s32.totalorder %s16, 1
        %s173 = scalar_select %p172, %s16, 1
        %s174 = scalar_lea.vmem %s2, %s173
      $region28: #{elmo_lstm_encoder_forward.8} parent=15 // pred_fallthru
        _
    $region16: #{elmo_lstm_encoder_forward.8} parent=5 // pred_fallthru
      _
    %p175 = scmp.le.s32.totalorder 1, %s9
    %p176 = scmp.lt.s32.totalorder %s9, 3
    %p177 = pnand %p175, %p176
    %p178 = pneg %p177
    // Predicated region
    $region29: #{elmo_lstm_encoder_forward.8} parent=5 // pred_check
      _
    $region30: #{elmo_lstm_encoder_forward.8} parent=5 // pred_check_branch
      %180 = sbr.rel (%p177) target = $region32
    $region31: #{elmo_lstm_encoder_forward.8} parent=5 // pred_region
      %s181 = ssub.s32 %s9, 1
      %s182 = smul.u32 8, %s19
      %p183 = scmp.lt.s32.totalorder %s18, 1
      %s184 = scalar_select %p183, %s18, 1
      %p185 = scmp.lt.s32.totalorder %s182, 7
      %s186 = scalar_select %p185, %s182, 7
      %s187 = smul.addr %s184, 8
      %s188 = sadd.s32 %s186, %s187
      %s189 = smul.addr %s188, 4
      %s190 = scalar_lea.vmem %s0, %s189
      %p191 = pneg %p49
      %p192 = pneg %p46
      %p193 = scmp.lt.s32.totalorder %s18, 1
      %s194 = scalar_select %p193, %s18, 1
      %s195 = smul.addr %s194, 16
      %s196 = smul.addr %s195, 4
      %s197 = scalar_lea.vmem %s1, %s196
      %p198 = pneg %p75
      %p199 = pneg %p72
      %p200 = scmp.lt.s32.totalorder %s18, 1
      %s201 = scalar_select %p200, %s18, 1
      %s202 = scalar_lea.vmem %s2, %s201
      %p203 = pneg %p101
      %p204 = pneg %p98
      %p205 = pneg %p129
      %p206 = pneg %p126
      %s207 = smul.u32 8, %s19
      %p208 = scmp.lt.s32.totalorder %s18, 1
      %s209 = scalar_select %p208, %s18, 1
      %p210 = scmp.lt.s32.totalorder %s207, 7
      %s211 = scalar_select %p210, %s207, 7
      %s212 = smul.addr %s209, 8
      %s213 = sadd.s32 %s211, %s212
      %s214 = smul.addr %s213, 4
      %s215 = scalar_lea.vmem %s3, %s214
      %s216 = smul.u32 8, %s19
      %p217 = scmp.lt.s32.totalorder %s18, 1
      %s218 = scalar_select %p217, %s18, 1
      %p219 = scmp.lt.s32.totalorder %s216, 7
      %s220 = scalar_select %p219, %s216, 7
      %s221 = smul.addr %s218, 8
      %s222 = sadd.s32 %s220, %s221
      %s223 = smul.addr %s222, 4
      %s224 = scalar_lea.vmem %s0, %s223
      %s225 = smul.u32 8, %s19
      %p226 = scmp.lt.s32.totalorder %s18, 1
      %s227 = scalar_select %p226, %s18, 1
      %s228 = smul.addr %s227, 16
      %s229 = smul.addr %s228, 4
      %s230 = scalar_lea.vmem %s1, %s229
      %p231 = scmp.lt.s32.totalorder %s18, 1
      %s232 = scalar_select %p231, %s18, 1
      %s233 = scalar_lea.vmem %s2, %s232
      %s234 = smul.u32 8, %s19
      %p235 = scmp.lt.s32.totalorder %s18, 1
      %s236 = scalar_select %p235, %s18, 1
      %p237 = scmp.lt.s32.totalorder %s234, 7
      %s238 = scalar_select %p237, %s234, 7
      %s239 = smul.addr %s236, 8
      %s240 = sadd.s32 %s238, %s239
      %s241 = smul.addr %s240, 4
      %s242 = scalar_lea.vmem %s3, %s241
      %s243 = smul.u32 8, %s19
      %v245 = vld [vmem:[%s224] sm:$0xf]
      %v246 = vld [vmem:[%s224 + $0x4] sm:$0xf]
      %v247 = vld [vmem:[%s224 + $0x8] sm:$0xf]
      %v248 = vld [vmem:[%s224 + $0xc] sm:$0xf]
      %v249 = vld [vmem:[%s224 + $0x10] sm:$0xf]
      %v250 = vld [vmem:[%s224 + $0x14] sm:$0xf]
      %v251 = vld [vmem:[%s224 + $0x18] sm:$0xf]
      %v252 = vld [vmem:[%s224 + $0x1c] sm:$0xf]
      %v253 = vld [vmem:[%s230] sm:$0xf]
      %v254 = vld [vmem:[%s230 + $0x4] sm:$0xf]
      %v255 = vld [vmem:[%s230 + $0x8] sm:$0xf]
      %v256 = vld [vmem:[%s230 + $0xc] sm:$0xf]
      %v257 = vld [vmem:[%s230 + $0x10] sm:$0xf]
      %v258 = vld [vmem:[%s230 + $0x14] sm:$0xf]
      %v259 = vld [vmem:[%s230 + $0x18] sm:$0xf]
      %v260 = vld [vmem:[%s230 + $0x1c] sm:$0xf]
      %v261 = vld [vmem:[%s230 + $0x20] sm:$0xf]
      %v262 = vld [vmem:[%s230 + $0x24] sm:$0xf]
      %v263 = vld [vmem:[%s230 + $0x28] sm:$0xf]
      %v264 = vld [vmem:[%s230 + $0x2c] sm:$0xf]
      %v265 = vld [vmem:[%s230 + $0x30] sm:$0xf]
      %v266 = vld [vmem:[%s230 + $0x34] sm:$0xf]
      %v267 = vld [vmem:[%s230 + $0x38] sm:$0xf]
      %v268 = vld [vmem:[%s230 + $0x3c] sm:$0xf]
      %v269 = vld [vmem:[%s233] sm:$0x1]
      %v271 = vlaneseq
      %v272 = vshrl.u32 %v271, 7
      %v273 = vsub.s32 0, %v272
      %v274 = vrot.slane %v269, %v273
      %v284 = vunpack.c.l.b16 %v245
      %v285 = vunpack.c.l.b16 %v246
      %v286 = vunpack.c.l.b16 %v247
      %v287 = vunpack.c.l.b16 %v248
      %v288 = vunpack.c.l.b16 %v249
      %v289 = vunpack.c.l.b16 %v250
      %v290 = vunpack.c.l.b16 %v251
      %v291 = vunpack.c.l.b16 %v252
      %v292 = vpack.c.b16 %v285, %v284
      %v293 = vpack.c.b16 %v287, %v286
      %v294 = vpack.c.b16 %v289, %v288
      %v295 = vpack.c.b16 %v291, %v290
      %v316 = vunpack.c.l.b16 %v253
      %v317 = vunpack.c.l.b16 %v254
      %v318 = vunpack.c.l.b16 %v255
      %v319 = vunpack.c.l.b16 %v256
      %v320 = vunpack.c.l.b16 %v257
      %v321 = vunpack.c.l.b16 %v258
      %v322 = vunpack.c.l.b16 %v259
      %v323 = vunpack.c.l.b16 %v260
      %v324 = vunpack.c.l.b16 %v261
      %v325 = vunpack.c.l.b16 %v262
      %v326 = vunpack.c.l.b16 %v263
      %v327 = vunpack.c.l.b16 %v264
      %v328 = vunpack.c.l.b16 %v265
      %v329 = vunpack.c.l.b16 %v266
      %v330 = vunpack.c.l.b16 %v267
      %v331 = vunpack.c.l.b16 %v268
      %v332 = vpack.c.b16 %v317, %v316
      %v333 = vpack.c.b16 %v319, %v318
      %v334 = vpack.c.b16 %v321, %v320
      %v335 = vpack.c.b16 %v323, %v322
      %v336 = vpack.c.b16 %v325, %v324
      %v337 = vpack.c.b16 %v327, %v326
      %v338 = vpack.c.b16 %v329, %v328
      %v339 = vpack.c.b16 %v331, %v330
      %348 = vmatprep.subr.bf16.mxu0 0
      %349 = vmatpush1.bf16.msra.mxu0 %v332
      %350 = vmatprep.subr.bf16.mxu0 0
      %351 = vmatpush1.bf16.msra.mxu0 %v333
      %352 = vmatprep.subr.bf16.mxu0 0
      %353 = vmatpush1.bf16.msra.mxu0 %v334
      %354 = vmatprep.subr.bf16.mxu0 0
      %355 = vmatpush1.bf16.msra.mxu0 %v335
      %356 = vmatprep.subr.bf16.mxu0 0
      %357 = vmatpush1.bf16.msra.mxu0 %v336
      %358 = vmatprep.subr.bf16.mxu0 0
      %359 = vmatpush1.bf16.msra.mxu0 %v337
      %360 = vmatprep.subr.bf16.mxu0 0
      %361 = vmatpush1.bf16.msra.mxu0 %v338
      %362 = vmatprep.subr.bf16.mxu0 0
      %363 = vmatpush1.bf16.msra.mxu0 %v339
      %364 = vmatprep.subr.bf16.mxu0 0
      %365 = vmatpush1.bf16.msra.mxu0 0
      %366 = vmatprep.subr.bf16.mxu0 0
      %367 = vmatpush1.bf16.msra.mxu0 0
      %368 = vmatprep.subr.bf16.mxu0 0
      %369 = vmatpush1.bf16.msra.mxu0 0
      %370 = vmatprep.subr.bf16.mxu0 0
      %371 = vmatpush1.bf16.msra.mxu0 0
      %372 = vmatprep.subr.bf16.mxu0 0
      %373 = vmatpush1.bf16.msra.mxu0 0
      %374 = vmatprep.subr.bf16.mxu0 0
      %375 = vmatpush1.bf16.msra.mxu0 0
      %376 = vmatprep.subr.bf16.mxu0 0
      %377 = vmatpush1.bf16.msra.mxu0 0
      %378 = vmatprep.subr.bf16.mxu0 0
      %379 = vmatpush1.bf16.msra.mxu0 0
      %380 = vmatprep.mubr.bf16.mxu0 0
      %381 = vmatmul.mubr.bf16.gmra.mrb[0].mxu0 %v292
      %v382 = vpop.f32.mrb[0].mxu0
      %v383 = vadd.f32 %v274, %v382
      %v384 = vpop.f32.mrb[0].mxu0
      %v385 = vpop.f32.mrb[0].mxu0
      %v386 = vadd.f32 %v274, %v385
      %v387 = vpop.f32.mrb[0].mxu0
      %388 = vmatprep.mubr.bf16.mxu0 0
      %389 = vmatmul.mubr.bf16.gmra.mrb[0].mxu0 %v293
      %v390 = vpop.f32.mrb[0].mxu0
      %v391 = vadd.f32 %v274, %v390
      %v392 = vpop.f32.mrb[0].mxu0
      %v393 = vpop.f32.mrb[0].mxu0
      %v394 = vadd.f32 %v274, %v393
      %v395 = vpop.f32.mrb[0].mxu0
      %396 = vmatprep.mubr.bf16.mxu0 0
      %397 = vmatmul.mubr.bf16.gmra.mrb[0].mxu0 %v294
      %v398 = vpop.f32.mrb[0].mxu0
      %v399 = vadd.f32 %v274, %v398
      %v400 = vpop.f32.mrb[0].mxu0
      %v401 = vpop.f32.mrb[0].mxu0
      %v402 = vadd.f32 %v274, %v401
      %v403 = vpop.f32.mrb[0].mxu0
      %404 = vmatprep.mubr.bf16.mxu0 0
      %405 = vmatmul.mubr.bf16.gmra.mrb[0].mxu0 %v295
      %v406 = vpop.f32.mrb[0].mxu0
      %v407 = vadd.f32 %v274, %v406
      %v408 = vpop.f32.mrb[0].mxu0
      %v409 = vpop.f32.mrb[0].mxu0
      %v410 = vadd.f32 %v274, %v409
      %v411 = vpop.f32.mrb[0].mxu0
      %412 = vdwg.mxu0
      %v413 = vpack.c.bf16 %v386, %v383
      %v414 = vpack.c.bf16 %v394, %v391
      %v415 = vpack.c.bf16 %v402, %v399
      %v416 = vpack.c.bf16 %v410, %v407
      %v421 = vunpack.c.l.b16 %v413
      %v422 = vunpack.c.h.b16 %v413
      %v423 = vunpack.c.l.b16 %v414
      %v424 = vunpack.c.h.b16 %v414
      %v425 = vunpack.c.l.b16 %v415
      %v426 = vunpack.c.h.b16 %v415
      %v427 = vunpack.c.l.b16 %v416
      %v428 = vunpack.c.h.b16 %v416
      %v429 = vpack.c.b16 %v421, %v421
      %v430 = vpack.c.b16 %v422, %v422
      %v431 = vpack.c.b16 %v423, %v423
      %v432 = vpack.c.b16 %v424, %v424
      %v433 = vpack.c.b16 %v425, %v425
      %v434 = vpack.c.b16 %v426, %v426
      %v435 = vpack.c.b16 %v427, %v427
      %v436 = vpack.c.b16 %v428, %v428
      %445 = vst [vmem:[%s242] sm:$0xf] %v429
      %446 = vst [vmem:[%s242 + $0x4] sm:$0xf] %v430
      %447 = vst [vmem:[%s242 + $0x8] sm:$0xf] %v431
      %448 = vst [vmem:[%s242 + $0xc] sm:$0xf] %v432
      %449 = vst [vmem:[%s242 + $0x10] sm:$0xf] %v433
      %450 = vst [vmem:[%s242 + $0x14] sm:$0xf] %v434
      %451 = vst [vmem:[%s242 + $0x18] sm:$0xf] %v435
      %452 = vst [vmem:[%s242 + $0x1c] sm:$0xf] %v436
      %s453 = smul.u32 8, %s19
      %p454 = scmp.lt.s32.totalorder %s18, 1
      %s455 = scalar_select %p454, %s18, 1
      %p456 = scmp.lt.s32.totalorder %s453, 7
      %s457 = scalar_select %p456, %s453, 7
      %s458 = smul.addr %s455, 8
      %s459 = sadd.s32 %s457, %s458
      %s460 = smul.addr %s459, 4
      %s461 = scalar_lea.vmem %s3, %s460
      // Predicated region
      $region33: #{elmo_lstm_encoder_forward.8} parent=31 // pred_check
        %p462 = pneg %p126
      $region34: #{elmo_lstm_encoder_forward.8} parent=31 // pred_check_branch
        %464 = sbr.rel (%p462) target = $region36
      $region35: #{elmo_lstm_encoder_forward.8} parent=31 // pred_region
        %s465 = smul.u32 8, %s19
      $region36: #{elmo_lstm_encoder_forward.8} parent=31 // pred_fallthru
        _
    $region32: #{elmo_lstm_encoder_forward.8} parent=5 // pred_fallthru
      _
    %p466 = scmp.le.s32.totalorder 2, %s9
    // Predicated region
    $region37: #{elmo_lstm_encoder_forward.8} parent=5 // pred_check
      %p467 = pneg %p466
    $region38: #{elmo_lstm_encoder_forward.8} parent=5 // pred_check_branch
      %469 = sbr.rel (%p467) target = $region40
    $region39: #{elmo_lstm_encoder_forward.8} parent=5 // pred_region
      %s470 = ssub.s32 %s9, 2
      // Predicated region
      $region41: #{elmo_lstm_encoder_forward.8} parent=39 // pred_check
        %p471 = pneg %p132
      $region42: #{elmo_lstm_encoder_forward.8} parent=39 // pred_check_branch
        %473 = sbr.rel (%p471) target = $region44
      $region43: #{elmo_lstm_encoder_forward.8} parent=39 // pred_region
        %s474 = smul.u32 8, %s21
        %p475 = scmp.lt.s32.totalorder %s20, 1
        %s476 = scalar_select %p475, %s20, 1
        %p477 = scmp.lt.s32.totalorder %s474, 7
        %s478 = scalar_select %p477, %s474, 7
        %s479 = smul.addr %s476, 8
        %s480 = sadd.s32 %s478, %s479
        %s481 = smul.addr %s480, 4
        %s482 = scalar_lea.vmem %s3, %s481
      $region44: #{elmo_lstm_encoder_forward.8} parent=39 // pred_fallthru
        _
    $region40: #{elmo_lstm_encoder_forward.8} parent=5 // pred_fallthru
      _
  $region6: #{elmo_lstm_encoder_forward.8} parent=0 // loop_footer
    %s13 = sadd.s32 1, %s9
  $region7: #{elmo_lstm_encoder_forward.8} parent=0 // loop_footer_branch
    %8 = sbr.rel target = $region3
  $region8: #{elmo_lstm_encoder_forward.8} parent=0 // loop_exit
    _

// kernel: elmo_lstm_encoder_forward.7
$region0: #{elmo_lstm_encoder_forward.7}
  #allocation0 [shape = 'u32[]', space=smem, size = 0x4, offset = 0x4, fixed_abs, tag = 'smem constant byte address 0x4 - core index']
  #allocation1 [shape = 'u32[144,128]{1,0:T(1,128)}', space=vmem, size = 0x12000, scoped, tag = 'internal scratch']
  #allocation2 [shape = 'bf16[8,128]{1,0:T(8,128)(2,1)}', space=vmem, size = 0x800, scoped, tag = 'scratch operand']
  #allocation3 [shape = 'f32[8,128]{1,0:T(8,128)}', space=vmem, size = 0x1000, scoped, tag = 'scratch operand']
  #allocation4 [shape = 'bf16[8,128]{1,0:T(8,128)(2,1)}', space=vmem, size = 0x800, scoped, tag = 'scratch operand']
  #allocation5 [shape = 'f32[8,128]{1,0:T(8,128)}', space=vmem, size = 0x1000, scoped, tag = 'scratch operand']
  #allocation6 [shape = 's32[1]{0:T(128)S(6)}', space=smem, size = 0x200, scoped, tag = 'scoped memory for elmo_lstm_encoder_forward.7']
  #allocation7 [shape = 's32[1]{0:T(128)S(6)}', space=smem, size = 0x200, scoped, tag = 'scoped memory for elmo_lstm_encoder_forward.7']
  %s0 = inlined_call_operand.<no memory space> [shape: s32[1], index: 0, kind: input, shape index: {}]
  %s1 = inlined_call_operand.<no memory space> [shape: s32[1], index: 1, kind: input, shape index: {}]
  %s2 = inlined_call_operand.vmem [shape: s32[8,1], index: 2, kind: input, shape index: {}]
  %s3 = inlined_call_operand.vmem [shape: bf16[2,64,512], index: 3, kind: input, shape index: {}]
  %s4 = inlined_call_operand.vmem [shape: bf16[2,128,512], index: 4, kind: input, shape index: {}]
  %s5 = inlined_call_operand.vmem [shape: bf16[2,64,128], index: 5, kind: output, shape index: {}]
  %s6 = sld [smem:[#allocation0]]
  $region52: #{elmo_lstm_encoder_forward.7} parent=0
    _
  %s8 = ssub.s32 1, %s6
  %s9 = scalar_select 0, %s8, %s6
  %10 = sst [smem:[#allocation6]] %s0
  %11 = sst [smem:[#allocation7]] %s1
  // Predicated region
  $region2: #{elmo_lstm_encoder_forward.7} parent=0 // pred_check
    _
  $region3: #{elmo_lstm_encoder_forward.7} parent=0 // pred_check_branch
    %13 = sbr.rel (0) target = $region5
  $region4: #{elmo_lstm_encoder_forward.7} parent=0 // pred_region
    _
  $region5: #{elmo_lstm_encoder_forward.7} parent=0 // pred_fallthru
    _
  // Predicated region
  $region6: #{elmo_lstm_encoder_forward.7} parent=0 // pred_check
    _
  $region7: #{elmo_lstm_encoder_forward.7} parent=0 // pred_check_branch
    %15 = sbr.rel (0) target = $region9
  $region8: #{elmo_lstm_encoder_forward.7} parent=0 // pred_region
    _
  $region9: #{elmo_lstm_encoder_forward.7} parent=0 // pred_fallthru
    _
  // Predicated region
  $region10: #{elmo_lstm_encoder_forward.7} parent=0 // pred_check
    _
  $region11: #{elmo_lstm_encoder_forward.7} parent=0 // pred_check_branch
    %17 = sbr.rel (0) target = $region13
  $region12: #{elmo_lstm_encoder_forward.7} parent=0 // pred_region
    _
  $region13: #{elmo_lstm_encoder_forward.7} parent=0 // pred_fallthru
    _
  // Predicated region
  $region14: #{elmo_lstm_encoder_forward.7} parent=0 // pred_check
    _
  $region15: #{elmo_lstm_encoder_forward.7} parent=0 // pred_check_branch
    %19 = sbr.rel (0) target = $region17
  $region16: #{elmo_lstm_encoder_forward.7} parent=0 // pred_region
    _
  $region17: #{elmo_lstm_encoder_forward.7} parent=0 // pred_fallthru
    _
  // Predicated region
  $region18: #{elmo_lstm_encoder_forward.7} parent=0 // pred_check
    _
  $region19: #{elmo_lstm_encoder_forward.7} parent=0 // pred_check_branch
    %21 = sbr.rel (0) target = $region21
  $region20: #{elmo_lstm_encoder_forward.7} parent=0 // pred_region
    _
  $region21: #{elmo_lstm_encoder_forward.7} parent=0 // pred_fallthru
    _
  %p23 = scmp.eq.s32.totalorder 0, 0
  // Predicated region
  $region22: #{elmo_lstm_encoder_forward.7} parent=0 // pred_check
    %p24 = pneg %p23
  $region23: #{elmo_lstm_encoder_forward.7} parent=0 // pred_check_branch
    %26 = sbr.rel (%p24) target = $region25
  $region24: #{elmo_lstm_encoder_forward.7} parent=0 // pred_region
    %27 = vst [vmem:[#allocation2] sm:$0xf] 0
    %28 = vst [vmem:[#allocation3] sm:$0xff] 0.0
    %29 = vst [vmem:[#allocation4] sm:$0xf] 0
    %30 = vst [vmem:[#allocation5] sm:$0xff] 0.0
  $region25: #{elmo_lstm_encoder_forward.7} parent=0 // pred_fallthru
    _
  %s31 = sld [smem:[#allocation6]]
  %s32 = smul.u32 0, 8
  %s33 = ssub.s32 %s31, %s32
  %p34 = scmp.gt.s32.totalorder %s33, 0
  %s35 = scalar_select %p34, %s33, 0
  %p36 = scmp.lt.s32.totalorder %s35, 8
  %s37 = scalar_select %p36, %s35, 8
  %s38 = sld [smem:[#allocation7]]
  %s39 = ssub.s32 %s38, %s32
  %p40 = scmp.gt.s32.totalorder %s39, 0
  %s41 = scalar_select %p40, %s39, 0
  %p42 = scmp.lt.s32.totalorder %s41, 8
  %s43 = scalar_select %p42, %s41, 8
  %p44 = scmp.lt.s32.totalorder %s43, %s37
  %s45 = scalar_select %p44, %s43, %s37
  %p46 = scmp.lt.s32.totalorder %s37, 8
  // Predicated region
  $region26: #{elmo_lstm_encoder_forward.7} parent=0 // pred_check
    %p47 = pneg %p46
  $region27: #{elmo_lstm_encoder_forward.7} parent=0 // pred_check_branch
    %49 = sbr.rel (%p47) target = $region29
  $region28: #{elmo_lstm_encoder_forward.7} parent=0 // pred_region
    %50 = vst [vmem:[%s5] sm:$0xf] 0
    %51 = vst [vmem:[%s5 + $0x4] sm:$0xf] 0
    %52 = vst [vmem:[%s5 + $0x8] sm:$0xf] 0
    %53 = vst [vmem:[%s5 + $0xc] sm:$0xf] 0
    %54 = vst [vmem:[%s5 + $0x10] sm:$0xf] 0
    %55 = vst [vmem:[%s5 + $0x14] sm:$0xf] 0
    %56 = vst [vmem:[%s5 + $0x18] sm:$0xf] 0
    %57 = vst [vmem:[%s5 + $0x1c] sm:$0xf] 0
    %58 = vst [vmem:[%s5 + $0x20] sm:$0xf] 0
    %59 = vst [vmem:[%s5 + $0x24] sm:$0xf] 0
    %60 = vst [vmem:[%s5 + $0x28] sm:$0xf] 0
    %61 = vst [vmem:[%s5 + $0x2c] sm:$0xf] 0
    %62 = vst [vmem:[%s5 + $0x30] sm:$0xf] 0
    %63 = vst [vmem:[%s5 + $0x34] sm:$0xf] 0
    %64 = vst [vmem:[%s5 + $0x38] sm:$0xf] 0
    %65 = vst [vmem:[%s5 + $0x3c] sm:$0xf] 0
  $region29: #{elmo_lstm_encoder_forward.7} parent=0 // pred_fallthru
    _
  %v66 = vld [vmem:[%s4] sm:$0xff]
  %v67 = vld [vmem:[%s4 + $0x8] sm:$0xff]
  %v68 = vld [vmem:[%s4 + $0x10] sm:$0xff]
  %v69 = vld [vmem:[%s4 + $0x18] sm:$0xff]
  %v70 = vld [vmem:[%s4 + $0x20] sm:$0xff]
  %v71 = vld [vmem:[%s4 + $0x28] sm:$0xff]
  %v72 = vld [vmem:[%s4 + $0x30] sm:$0xff]
  %v73 = vld [vmem:[%s4 + $0x38] sm:$0xff]
  %v74 = vld [vmem:[%s4 + $0x40] sm:$0xff]
  %v75 = vld [vmem:[%s4 + $0x48] sm:$0xff]
  %v76 = vld [vmem:[%s4 + $0x50] sm:$0xff]
  %v77 = vld [vmem:[%s4 + $0x58] sm:$0xff]
  %v78 = vld [vmem:[%s4 + $0x60] sm:$0xff]
  %v79 = vld [vmem:[%s4 + $0x68] sm:$0xff]
  %v80 = vld [vmem:[%s4 + $0x70] sm:$0xff]
  %v81 = vld [vmem:[%s4 + $0x78] sm:$0xff]
  %v82 = vld [vmem:[%s4 + $0x80] sm:$0xff]
  %v83 = vld [vmem:[%s4 + $0x88] sm:$0xff]
  %v84 = vld [vmem:[%s4 + $0x90] sm:$0xff]
  %v85 = vld [vmem:[%s4 + $0x98] sm:$0xff]
  %v86 = vld [vmem:[%s4 + $0xa0] sm:$0xff]
  %v87 = vld [vmem:[%s4 + $0xa8] sm:$0xff]
  %v88 = vld [vmem:[%s4 + $0xb0] sm:$0xff]
  %v89 = vld [vmem:[%s4 + $0xb8] sm:$0xff]
  %v90 = vld [vmem:[%s4 + $0xc0] sm:$0xff]
  %v91 = vld [vmem:[%s4 + $0xc8] sm:$0xff]
  %v92 = vld [vmem:[%s4 + $0xd0] sm:$0xff]
  %v93 = vld [vmem:[%s4 + $0xd8] sm:$0xff]
  %v94 = vld [vmem:[%s4 + $0xe0] sm:$0xff]
  %v95 = vld [vmem:[%s4 + $0xe8] sm:$0xff]
  %v96 = vld [vmem:[%s4 + $0xf0] sm:$0xff]
  %v97 = vld [vmem:[%s4 + $0xf8] sm:$0xff]
  %s98 = scalar_lea.vmem %s4, 256
  %v99 = vld [vmem:[%s98] sm:$0xff]
  %v100 = vld [vmem:[%s98 + $0x8] sm:$0xff]
  %v101 = vld [vmem:[%s98 + $0x10] sm:$0xff]
  %v102 = vld [vmem:[%s98 + $0x18] sm:$0xff]
  %v103 = vld [vmem:[%s98 + $0x20] sm:$0xff]
  %v104 = vld [vmem:[%s98 + $0x28] sm:$0xff]
  %v105 = vld [vmem:[%s98 + $0x30] sm:$0xff]
  %v106 = vld [vmem:[%s98 + $0x38] sm:$0xff]
  %v107 = vld [vmem:[%s98 + $0x40] sm:$0xff]
  %v108 = vld [vmem:[%s98 + $0x48] sm:$0xff]
  %v109 = vld [vmem:[%s98 + $0x50] sm:$0xff]
  %v110 = vld [vmem:[%s98 + $0x58] sm:$0xff]
  %v111 = vld [vmem:[%s98 + $0x60] sm:$0xff]
  %v112 = vld [vmem:[%s98 + $0x68] sm:$0xff]
  %v113 = vld [vmem:[%s98 + $0x70] sm:$0xff]
  %v114 = vld [vmem:[%s98 + $0x78] sm:$0xff]
  %v115 = vld [vmem:[%s98 + $0x80] sm:$0xff]
  %v116 = vld [vmem:[%s98 + $0x88] sm:$0xff]
  %v117 = vld [vmem:[%s98 + $0x90] sm:$0xff]
  %v118 = vld [vmem:[%s98 + $0x98] sm:$0xff]
  %v119 = vld [vmem:[%s98 + $0xa0] sm:$0xff]
  %v120 = vld [vmem:[%s98 + $0xa8] sm:$0xff]
  %v121 = vld [vmem:[%s98 + $0xb0] sm:$0xff]
  %v122 = vld [vmem:[%s98 + $0xb8] sm:$0xff]
  %v123 = vld [vmem:[%s98 + $0xc0] sm:$0xff]
  %v124 = vld [vmem:[%s98 + $0xc8] sm:$0xff]
  %v125 = vld [vmem:[%s98 + $0xd0] sm:$0xff]
  %v126 = vld [vmem:[%s98 + $0xd8] sm:$0xff]
  %v127 = vld [vmem:[%s98 + $0xe0] sm:$0xff]
  %v128 = vld [vmem:[%s98 + $0xe8] sm:$0xff]
  %v129 = vld [vmem:[%s98 + $0xf0] sm:$0xff]
  %v130 = vld [vmem:[%s98 + $0xf8] sm:$0xff]
  %v131 = vld [vmem:[%s2] sm:$0xff]
  // While loop
  $region30: #{elmo_lstm_encoder_forward.7} parent=0 // loop_pre_header
    _
  $region31: #{elmo_lstm_encoder_forward.7} parent=0 // loop_header
    %s133 = sphi 0, %s135
    %p134 = scmp.ge.s32.totalorder %s133, %s45
  $region32: #{elmo_lstm_encoder_forward.7} parent=0 // loop_header_branch
    %137 = sbr.rel (%p134) target = $region36
  $region33: #{elmo_lstm_encoder_forward.7} parent=0 // loop_body
    %s138 = smul.u32 %s133, 8
    %s139 = sshra.s32 %s138, 3
    %s140 = sand.u32 %s138, 7
    %s141 = smul.u32 %s139, 4
    %s142 = smul.addr %s141, 4
    %s143 = scalar_lea.vmem %s3, %s142
    %v144 = vld [vmem:[%s143] sm:$0xff]
    %v145 = vld [vmem:[%s143 + $0x8] sm:$0xff]
    %v146 = vunpack.c.l.bf16 %v144
    %v147 = vunpack.c.h.bf16 %v144
    %v148 = vunpack.c.l.bf16 %v145
    %v149 = vunpack.c.h.bf16 %v145
    %v150 = vld [vmem:[#allocation2] sm:$0xf]
    %v183 = vunpack.c.l.b16 %v66
    %v184 = vunpack.c.h.b16 %v66
    %v185 = vunpack.c.l.b16 %v67
    %v186 = vunpack.c.h.b16 %v67
    %v187 = vunpack.c.l.b16 %v68
    %v188 = vunpack.c.h.b16 %v68
    %v189 = vunpack.c.l.b16 %v69
    %v190 = vunpack.c.h.b16 %v69
    %v191 = vunpack.c.l.b16 %v70
    %v192 = vunpack.c.h.b16 %v70
    %v193 = vunpack.c.l.b16 %v71
    %v194 = vunpack.c.h.b16 %v71
    %v195 = vunpack.c.l.b16 %v72
    %v196 = vunpack.c.h.b16 %v72
    %v197 = vunpack.c.l.b16 %v73
    %v198 = vunpack.c.h.b16 %v73
    %v199 = vunpack.c.l.b16 %v74
    %v200 = vunpack.c.h.b16 %v74
    %v201 = vunpack.c.l.b16 %v75
    %v202 = vunpack.c.h.b16 %v75
    %v203 = vunpack.c.l.b16 %v76
    %v204 = vunpack.c.h.b16 %v76
    %v205 = vunpack.c.l.b16 %v77
    %v206 = vunpack.c.h.b16 %v77
    %v207 = vunpack.c.l.b16 %v78
    %v208 = vunpack.c.h.b16 %v78
    %v209 = vunpack.c.l.b16 %v79
    %v210 = vunpack.c.h.b16 %v79
    %v211 = vunpack.c.l.b16 %v80
    %v212 = vunpack.c.h.b16 %v80
    %v213 = vunpack.c.l.b16 %v81
    %v214 = vunpack.c.h.b16 %v81
    %v215 = vunpack.c.l.b16 %v82
    %v216 = vunpack.c.h.b16 %v82
    %v217 = vunpack.c.l.b16 %v83
    %v218 = vunpack.c.h.b16 %v83
    %v219 = vunpack.c.l.b16 %v84
    %v220 = vunpack.c.h.b16 %v84
    %v221 = vunpack.c.l.b16 %v85
    %v222 = vunpack.c.h.b16 %v85
    %v223 = vunpack.c.l.b16 %v86
    %v224 = vunpack.c.h.b16 %v86
    %v225 = vunpack.c.l.b16 %v87
    %v226 = vunpack.c.h.b16 %v87
    %v227 = vunpack.c.l.b16 %v88
    %v228 = vunpack.c.h.b16 %v88
    %v229 = vunpack.c.l.b16 %v89
    %v230 = vunpack.c.h.b16 %v89
    %v231 = vunpack.c.l.b16 %v90
    %v232 = vunpack.c.h.b16 %v90
    %v233 = vunpack.c.l.b16 %v91
    %v234 = vunpack.c.h.b16 %v91
    %v235 = vunpack.c.l.b16 %v92
    %v236 = vunpack.c.h.b16 %v92
    %v237 = vunpack.c.l.b16 %v93
    %v238 = vunpack.c.h.b16 %v93
    %v239 = vunpack.c.l.b16 %v94
    %v240 = vunpack.c.h.b16 %v94
    %v241 = vunpack.c.l.b16 %v95
    %v242 = vunpack.c.h.b16 %v95
    %v243 = vunpack.c.l.b16 %v96
    %v244 = vunpack.c.h.b16 %v96
    %v245 = vunpack.c.l.b16 %v97
    %v246 = vunpack.c.h.b16 %v97
    %v247 = vpack.c.b16 %v187, %v183
    %v248 = vpack.c.b16 %v188, %v184
    %v249 = vpack.c.b16 %v189, %v185
    %v250 = vpack.c.b16 %v190, %v186
    %v251 = vpack.c.b16 %v195, %v191
    %v252 = vpack.c.b16 %v196, %v192
    %v253 = vpack.c.b16 %v197, %v193
    %v254 = vpack.c.b16 %v198, %v194
    %v255 = vpack.c.b16 %v203, %v199
    %v256 = vpack.c.b16 %v204, %v200
    %v257 = vpack.c.b16 %v205, %v201
    %v258 = vpack.c.b16 %v206, %v202
    %v259 = vpack.c.b16 %v211, %v207
    %v260 = vpack.c.b16 %v212, %v208
    %v261 = vpack.c.b16 %v213, %v209
    %v262 = vpack.c.b16 %v214, %v210
    %v263 = vpack.c.b16 %v219, %v215
    %v264 = vpack.c.b16 %v220, %v216
    %v265 = vpack.c.b16 %v221, %v217
    %v266 = vpack.c.b16 %v222, %v218
    %v267 = vpack.c.b16 %v227, %v223
    %v268 = vpack.c.b16 %v228, %v224
    %v269 = vpack.c.b16 %v229, %v225
    %v270 = vpack.c.b16 %v230, %v226
    %v271 = vpack.c.b16 %v235, %v231
    %v272 = vpack.c.b16 %v236, %v232
    %v273 = vpack.c.b16 %v237, %v233
    %v274 = vpack.c.b16 %v238, %v234
    %v275 = vpack.c.b16 %v243, %v239
    %v276 = vpack.c.b16 %v244, %v240
    %v277 = vpack.c.b16 %v245, %v241
    %v278 = vpack.c.b16 %v246, %v242
    %311 = vmatprep.subr.bf16.mxu0 %v248
    %312 = vmatpush1.bf16.msra.mxu0 %v247
    %313 = vmatprep.subr.bf16.mxu0 %v252
    %314 = vmatpush1.bf16.msra.mxu0 %v251
    %315 = vmatprep.subr.bf16.mxu0 %v256
    %316 = vmatpush1.bf16.msra.mxu0 %v255
    %317 = vmatprep.subr.bf16.mxu0 %v260
    %318 = vmatpush1.bf16.msra.mxu0 %v259
    %319 = vmatprep.subr.bf16.mxu0 %v264
    %320 = vmatpush1.bf16.msra.mxu0 %v263
    %321 = vmatprep.subr.bf16.mxu0 %v268
    %322 = vmatpush1.bf16.msra.mxu0 %v267
    %323 = vmatprep.subr.bf16.mxu0 %v272
    %324 = vmatpush1.bf16.msra.mxu0 %v271
    %325 = vmatprep.subr.bf16.mxu0 %v276
    %326 = vmatpush1.bf16.msra.mxu0 %v275
    %327 = vmatprep.subr.bf16.mxu0 0
    %328 = vmatpush1.bf16.msra.mxu0 0
    %329 = vmatprep.subr.bf16.mxu0 0
    %330 = vmatpush1.bf16.msra.mxu0 0
    %331 = vmatprep.subr.bf16.mxu0 0
    %332 = vmatpush1.bf16.msra.mxu0 0
    %333 = vmatprep.subr.bf16.mxu0 0
    %334 = vmatpush1.bf16.msra.mxu0 0
    %335 = vmatprep.subr.bf16.mxu0 0
    %336 = vmatpush1.bf16.msra.mxu0 0
    %337 = vmatprep.subr.bf16.mxu0 0
    %338 = vmatpush1.bf16.msra.mxu0 0
    %339 = vmatprep.subr.bf16.mxu0 0
    %340 = vmatpush1.bf16.msra.mxu0 0
    %341 = vmatprep.subr.bf16.mxu0 0
    %342 = vmatpush1.bf16.msra.mxu0 0
    %343 = vmatprep.mubr.bf16.mxu0 0
    %344 = vmatmul.mubr.bf16.gmra.mrb[0].mxu0 %v150
    %v345 = vpop.f32.mrb[0].mxu0
    %v346 = vadd.f32 0.0, %v345
    %v347 = vpop.f32.mrb[0].mxu0
    %v348 = vadd.f32 0.0, %v347
    %v349 = vpop.f32.mrb[0].mxu0
    %v350 = vpop.f32.mrb[0].mxu0
    %351 = vdwg.mxu0
    %352 = vmatprep.subr.bf16.mxu0 %v250
    %353 = vmatpush1.bf16.msra.mxu0 %v249
    %354 = vmatprep.subr.bf16.mxu0 %v254
    %355 = vmatpush1.bf16.msra.mxu0 %v253
    %356 = vmatprep.subr.bf16.mxu0 %v258
    %357 = vmatpush1.bf16.msra.mxu0 %v257
    %358 = vmatprep.subr.bf16.mxu0 %v262
    %359 = vmatpush1.bf16.msra.mxu0 %v261
    %360 = vmatprep.subr.bf16.mxu0 %v266
    %361 = vmatpush1.bf16.msra.mxu0 %v265
    %362 = vmatprep.subr.bf16.mxu0 %v270
    %363 = vmatpush1.bf16.msra.mxu0 %v269
    %364 = vmatprep.subr.bf16.mxu0 %v274
    %365 = vmatpush1.bf16.msra.mxu0 %v273
    %366 = vmatprep.subr.bf16.mxu0 %v278
    %367 = vmatpush1.bf16.msra.mxu0 %v277
    %368 = vmatprep.subr.bf16.mxu0 0
    %369 = vmatpush1.bf16.msra.mxu0 0
    %370 = vmatprep.subr.bf16.mxu0 0
    %371 = vmatpush1.bf16.msra.mxu0 0
    %372 = vmatprep.subr.bf16.mxu0 0
    %373 = vmatpush1.bf16.msra.mxu0 0
    %374 = vmatprep.subr.bf16.mxu0 0
    %375 = vmatpush1.bf16.msra.mxu0 0
    %376 = vmatprep.subr.bf16.mxu0 0
    %377 = vmatpush1.bf16.msra.mxu0 0
    %378 = vmatprep.subr.bf16.mxu0 0
    %379 = vmatpush1.bf16.msra.mxu0 0
    %380 = vmatprep.subr.bf16.mxu0 0
    %381 = vmatpush1.bf16.msra.mxu0 0
    %382 = vmatprep.subr.bf16.mxu0 0
    %383 = vmatpush1.bf16.msra.mxu0 0
    %384 = vmatprep.mubr.bf16.mxu0 0
    %385 = vmatmul.mubr.bf16.gmra.mrb[0].mxu0 %v150
    %v386 = vpop.f32.mrb[0].mxu0
    %v387 = vadd.f32 0.0, %v386
    %v388 = vpop.f32.mrb[0].mxu0
    %v389 = vadd.f32 0.0, %v388
    %v390 = vpop.f32.mrb[0].mxu0
    %v391 = vpop.f32.mrb[0].mxu0
    %392 = vdwg.mxu0
    %v393 = vadd.f32 %v146, %v346
    %v394 = vadd.f32 %v147, %v348
    %v395 = vadd.f32 %v148, %v387
    %v396 = vadd.f32 %v149, %v389
    %s397 = scalar_lea.vmem %s3, 128
    %s398 = smul.addr %s141, 4
    %s399 = scalar_lea.vmem %s397, %s398
    %v400 = vld [vmem:[%s399] sm:$0xff]
    %v401 = vld [vmem:[%s399 + $0x8] sm:$0xff]
    %v402 = vunpack.c.l.bf16 %v400
    %v403 = vunpack.c.h.bf16 %v400
    %v404 = vunpack.c.l.bf16 %v401
    %v405 = vunpack.c.h.bf16 %v401
    %v406 = vld [vmem:[#allocation4] sm:$0xf]
    %v439 = vunpack.c.l.b16 %v99
    %v440 = vunpack.c.h.b16 %v99
    %v441 = vunpack.c.l.b16 %v100
    %v442 = vunpack.c.h.b16 %v100
    %v443 = vunpack.c.l.b16 %v101
    %v444 = vunpack.c.h.b16 %v101
    %v445 = vunpack.c.l.b16 %v102
    %v446 = vunpack.c.h.b16 %v102
    %v447 = vunpack.c.l.b16 %v103
    %v448 = vunpack.c.h.b16 %v103
    %v449 = vunpack.c.l.b16 %v104
    %v450 = vunpack.c.h.b16 %v104
    %v451 = vunpack.c.l.b16 %v105
    %v452 = vunpack.c.h.b16 %v105
    %v453 = vunpack.c.l.b16 %v106
    %v454 = vunpack.c.h.b16 %v106
    %v455 = vunpack.c.l.b16 %v107
    %v456 = vunpack.c.h.b16 %v107
    %v457 = vunpack.c.l.b16 %v108
    %v458 = vunpack.c.h.b16 %v108
    %v459 = vunpack.c.l.b16 %v109
    %v460 = vunpack.c.h.b16 %v109
    %v461 = vunpack.c.l.b16 %v110
    %v462 = vunpack.c.h.b16 %v110
    %v463 = vunpack.c.l.b16 %v111
    %v464 = vunpack.c.h.b16 %v111
    %v465 = vunpack.c.l.b16 %v112
    %v466 = vunpack.c.h.b16 %v112
    %v467 = vunpack.c.l.b16 %v113
    %v468 = vunpack.c.h.b16 %v113
    %v469 = vunpack.c.l.b16 %v114
    %v470 = vunpack.c.h.b16 %v114
    %v471 = vunpack.c.l.b16 %v115
    %v472 = vunpack.c.h.b16 %v115
    %v473 = vunpack.c.l.b16 %v116
    %v474 = vunpack.c.h.b16 %v116
    %v475 = vunpack.c.l.b16 %v117
    %v476 = vunpack.c.h.b16 %v117
    %v477 = vunpack.c.l.b16 %v118
    %v478 = vunpack.c.h.b16 %v118
    %v479 = vunpack.c.l.b16 %v119
    %v480 = vunpack.c.h.b16 %v119
    %v481 = vunpack.c.l.b16 %v120
    %v482 = vunpack.c.h.b16 %v120
    %v483 = vunpack.c.l.b16 %v121
    %v484 = vunpack.c.h.b16 %v121
    %v485 = vunpack.c.l.b16 %v122
    %v486 = vunpack.c.h.b16 %v122
    %v487 = vunpack.c.l.b16 %v123
    %v488 = vunpack.c.h.b16 %v123
    %v489 = vunpack.c.l.b16 %v124
    %v490 = vunpack.c.h.b16 %v124
    %v491 = vunpack.c.l.b16 %v125
    %v492 = vunpack.c.h.b16 %v125
    %v493 = vunpack.c.l.b16 %v126
    %v494 = vunpack.c.h.b16 %v126
    %v495 = vunpack.c.l.b16 %v127
    %v496 = vunpack.c.h.b16 %v127
    %v497 = vunpack.c.l.b16 %v128
    %v498 = vunpack.c.h.b16 %v128
    %v499 = vunpack.c.l.b16 %v129
    %v500 = vunpack.c.h.b16 %v129
    %v501 = vunpack.c.l.b16 %v130
    %v502 = vunpack.c.h.b16 %v130
    %v503 = vpack.c.b16 %v443, %v439
    %v504 = vpack.c.b16 %v444, %v440
    %v505 = vpack.c.b16 %v445, %v441
    %v506 = vpack.c.b16 %v446, %v442
    %v507 = vpack.c.b16 %v451, %v447
    %v508 = vpack.c.b16 %v452, %v448
    %v509 = vpack.c.b16 %v453, %v449
    %v510 = vpack.c.b16 %v454, %v450
    %v511 = vpack.c.b16 %v459, %v455
    %v512 = vpack.c.b16 %v460, %v456
    %v513 = vpack.c.b16 %v461, %v457
    %v514 = vpack.c.b16 %v462, %v458
    %v515 = vpack.c.b16 %v467, %v463
    %v516 = vpack.c.b16 %v468, %v464
    %v517 = vpack.c.b16 %v469, %v465
    %v518 = vpack.c.b16 %v470, %v466
    %v519 = vpack.c.b16 %v475, %v471
    %v520 = vpack.c.b16 %v476, %v472
    %v521 = vpack.c.b16 %v477, %v473
    %v522 = vpack.c.b16 %v478, %v474
    %v523 = vpack.c.b16 %v483, %v479
    %v524 = vpack.c.b16 %v484, %v480
    %v525 = vpack.c.b16 %v485, %v481
    %v526 = vpack.c.b16 %v486, %v482
    %v527 = vpack.c.b16 %v491, %v487
    %v528 = vpack.c.b16 %v492, %v488
    %v529 = vpack.c.b16 %v493, %v489
    %v530 = vpack.c.b16 %v494, %v490
    %v531 = vpack.c.b16 %v499, %v495
    %v532 = vpack.c.b16 %v500, %v496
    %v533 = vpack.c.b16 %v501, %v497
    %v534 = vpack.c.b16 %v502, %v498
    %567 = vmatprep.subr.bf16.mxu0 %v504
    %568 = vmatpush1.bf16.msra.mxu0 %v503
    %569 = vmatprep.subr.bf16.mxu0 %v508
    %570 = vmatpush1.bf16.msra.mxu0 %v507
    %571 = vmatprep.subr.bf16.mxu0 %v512
    %572 = vmatpush1.bf16.msra.mxu0 %v511
    %573 = vmatprep.subr.bf16.mxu0 %v516
    %574 = vmatpush1.bf16.msra.mxu0 %v515
    %575 = vmatprep.subr.bf16.mxu0 %v520
    %576 = vmatpush1.bf16.msra.mxu0 %v519
    %577 = vmatprep.subr.bf16.mxu0 %v524
    %578 = vmatpush1.bf16.msra.mxu0 %v523
    %579 = vmatprep.subr.bf16.mxu0 %v528
    %580 = vmatpush1.bf16.msra.mxu0 %v527
    %581 = vmatprep.subr.bf16.mxu0 %v532
    %582 = vmatpush1.bf16.msra.mxu0 %v531
    %583 = vmatprep.subr.bf16.mxu0 0
    %584 = vmatpush1.bf16.msra.mxu0 0
    %585 = vmatprep.subr.bf16.mxu0 0
    %586 = vmatpush1.bf16.msra.mxu0 0
    %587 = vmatprep.subr.bf16.mxu0 0
    %588 = vmatpush1.bf16.msra.mxu0 0
    %589 = vmatprep.subr.bf16.mxu0 0
    %590 = vmatpush1.bf16.msra.mxu0 0
    %591 = vmatprep.subr.bf16.mxu0 0
    %592 = vmatpush1.bf16.msra.mxu0 0
    %593 = vmatprep.subr.bf16.mxu0 0
    %594 = vmatpush1.bf16.msra.mxu0 0
    %595 = vmatprep.subr.bf16.mxu0 0
    %596 = vmatpush1.bf16.msra.mxu0 0
    %597 = vmatprep.subr.bf16.mxu0 0
    %598 = vmatpush1.bf16.msra.mxu0 0
    %599 = vmatprep.mubr.bf16.mxu0 0
    %600 = vmatmul.mubr.bf16.gmra.mrb[0].mxu0 %v406
    %v601 = vpop.f32.mrb[0].mxu0
    %v602 = vadd.f32 0.0, %v601
    %v603 = vpop.f32.mrb[0].mxu0
    %v604 = vadd.f32 0.0, %v603
    %v605 = vpop.f32.mrb[0].mxu0
    %v606 = vpop.f32.mrb[0].mxu0
    %607 = vdwg.mxu0
    %608 = vmatprep.subr.bf16.mxu0 %v506
    %609 = vmatpush1.bf16.msra.mxu0 %v505
    %610 = vmatprep.subr.bf16.mxu0 %v510
    %611 = vmatpush1.bf16.msra.mxu0 %v509
    %612 = vmatprep.subr.bf16.mxu0 %v514
    %613 = vmatpush1.bf16.msra.mxu0 %v513
    %614 = vmatprep.subr.bf16.mxu0 %v518
    %615 = vmatpush1.bf16.msra.mxu0 %v517
    %616 = vmatprep.subr.bf16.mxu0 %v522
    %617 = vmatpush1.bf16.msra.mxu0 %v521
    %618 = vmatprep.subr.bf16.mxu0 %v526
    %619 = vmatpush1.bf16.msra.mxu0 %v525
    %620 = vmatprep.subr.bf16.mxu0 %v530
    %621 = vmatpush1.bf16.msra.mxu0 %v529
    %622 = vmatprep.subr.bf16.mxu0 %v534
    %623 = vmatpush1.bf16.msra.mxu0 %v533
    %624 = vmatprep.subr.bf16.mxu0 0
    %625 = vmatpush1.bf16.msra.mxu0 0
    %626 = vmatprep.subr.bf16.mxu0 0
    %627 = vmatpush1.bf16.msra.mxu0 0
    %628 = vmatprep.subr.bf16.mxu0 0
    %629 = vmatpush1.bf16.msra.mxu0 0
    %630 = vmatprep.subr.bf16.mxu0 0
    %631 = vmatpush1.bf16.msra.mxu0 0
    %632 = vmatprep.subr.bf16.mxu0 0
    %633 = vmatpush1.bf16.msra.mxu0 0
    %634 = vmatprep.subr.bf16.mxu0 0
    %635 = vmatpush1.bf16.msra.mxu0 0
    %636 = vmatprep.subr.bf16.mxu0 0
    %637 = vmatpush1.bf16.msra.mxu0 0
    %638 = vmatprep.subr.bf16.mxu0 0
    %639 = vmatpush1.bf16.msra.mxu0 0
    %640 = vmatprep.mubr.bf16.mxu0 0
    %641 = vmatmul.mubr.bf16.gmra.mrb[0].mxu0 %v406
    %v642 = vpop.f32.mrb[0].mxu0
    %v643 = vadd.f32 0.0, %v642
    %v644 = vpop.f32.mrb[0].mxu0
    %v645 = vadd.f32 0.0, %v644
    %v646 = vpop.f32.mrb[0].mxu0
    %v647 = vpop.f32.mrb[0].mxu0
    %648 = vdwg.mxu0
    %v649 = vadd.f32 %v402, %v602
    %v650 = vadd.f32 %v403, %v604
    %v651 = vadd.f32 %v404, %v643
    %v652 = vadd.f32 %v405, %v645
    %v653 = vld [vmem:[#allocation3] sm:$0xff]
    %v654 = vxor.u32 %v393, 2147483648
    %v655 = vmul.f32 %v654, 1.442695
    %v656 = vpow.pop %v655
    %v657 = vadd.f32 %v656, 1.0
    %v658 = vrcp.pop %v657
    %v659 = vmul.f32 1.0, %v658
    %v660 = vxor.u32 %v394, 2147483648
    %v661 = vmul.f32 %v660, 1.442695
    %v662 = vpow.pop %v661
    %v663 = vadd.f32 %v662, 1.0
    %v664 = vrcp.pop %v663
    %v665 = vmul.f32 1.0, %v664
    %v666 = vtanh.pop %v395
    %v667 = vxor.u32 %v396, 2147483648
    %v668 = vmul.f32 %v667, 1.442695
    %v669 = vpow.pop %v668
    %v670 = vadd.f32 %v669, 1.0
    %v671 = vrcp.pop %v670
    %v672 = vmul.f32 1.0, %v671
    %v673 = vmul.f32 %v665, %v653
    %v674 = vmul.f32 %v659, %v666
    %v675 = vadd.f32 %v673, %v674
    %v676 = vtanh.pop %v675
    %v677 = vmul.f32 %v672, %v676
    %v678 = vpack.c.bf16 %v677, %v677
    %v679 = vld [vmem:[#allocation5] sm:$0xff]
    %v680 = vxor.u32 %v649, 2147483648
    %v681 = vmul.f32 %v680, 1.442695
    %v682 = vpow.pop %v681
    %v683 = vadd.f32 %v682, 1.0
    %v684 = vrcp.pop %v683
    %v685 = vmul.f32 1.0, %v684
    %v686 = vxor.u32 %v650, 2147483648
    %v687 = vmul.f32 %v686, 1.442695
    %v688 = vpow.pop %v687
    %v689 = vadd.f32 %v688, 1.0
    %v690 = vrcp.pop %v689
    %v691 = vmul.f32 1.0, %v690
    %v692 = vtanh.pop %v651
    %v693 = vxor.u32 %v652, 2147483648
    %v694 = vmul.f32 %v693, 1.442695
    %v695 = vpow.pop %v694
    %v696 = vadd.f32 %v695, 1.0
    %v697 = vrcp.pop %v696
    %v698 = vmul.f32 1.0, %v697
    %v699 = vmul.f32 %v691, %v679
    %v700 = vmul.f32 %v685, %v692
    %v701 = vadd.f32 %v699, %v700
    %v702 = vtanh.pop %v701
    %v703 = vmul.f32 %v698, %v702
    %v704 = vpack.c.bf16 %v703, %v703
    %705 = vst [vmem:[#allocation2] sm:$0xf] %v678
    %706 = vst [vmem:[#allocation3] sm:$0xff] %v675
    %707 = vst [vmem:[#allocation4] sm:$0xf] %v704
    %708 = vst [vmem:[#allocation5] sm:$0xff] %v701
    %s709 = smul.addr %s139, 4
    %s710 = scalar_lea.vmem %s5, %s709
    %711 = vst [vmem:[%s710] sm:$0xf] %v678
    %s712 = scalar_lea.vmem %s5, 32
    %s713 = smul.addr %s139, 4
    %s714 = scalar_lea.vmem %s712, %s713
    %715 = vst [vmem:[%s714] sm:$0xf] %v704
  $region34: #{elmo_lstm_encoder_forward.7} parent=0 // loop_footer
    %s135 = sadd.s32 %s133, 1
  $region35: #{elmo_lstm_encoder_forward.7} parent=0 // loop_footer_branch
    %132 = sbr.rel target = $region31
  $region36: #{elmo_lstm_encoder_forward.7} parent=0 // loop_exit
    _
  // While loop
  $region37: #{elmo_lstm_encoder_forward.7} parent=0 // loop_pre_header
    _
  $region38: #{elmo_lstm_encoder_forward.7} parent=0 // loop_header
    %s717 = sphi %s45, %s719
    %p718 = scmp.ge.s32.totalorder %s717, %s37
  $region39: #{elmo_lstm_encoder_forward.7} parent=0 // loop_header_branch
    %721 = sbr.rel (%p718) target = $region43
  $region40: #{elmo_lstm_encoder_forward.7} parent=0 // loop_body
    %s722 = smul.u32 %s717, 8
    %s723 = sshra.s32 %s722, 3
    %s724 = sand.u32 %s722, 7
    %s725 = smul.u32 %s723, 4
    %s726 = smul.addr %s725, 4
    %s727 = scalar_lea.vmem %s3, %s726
    %v728 = vld [vmem:[%s727] sm:$0xff]
    %v729 = vld [vmem:[%s727 + $0x8] sm:$0xff]
    %v730 = vunpack.c.l.bf16 %v728
    %v731 = vunpack.c.h.bf16 %v728
    %v732 = vunpack.c.l.bf16 %v729
    %v733 = vunpack.c.h.bf16 %v729
    %v734 = vld [vmem:[#allocation2] sm:$0xf]
    %v767 = vunpack.c.l.b16 %v66
    %v768 = vunpack.c.h.b16 %v66
    %v769 = vunpack.c.l.b16 %v67
    %v770 = vunpack.c.h.b16 %v67
    %v771 = vunpack.c.l.b16 %v68
    %v772 = vunpack.c.h.b16 %v68
    %v773 = vunpack.c.l.b16 %v69
    %v774 = vunpack.c.h.b16 %v69
    %v775 = vunpack.c.l.b16 %v70
    %v776 = vunpack.c.h.b16 %v70
    %v777 = vunpack.c.l.b16 %v71
    %v778 = vunpack.c.h.b16 %v71
    %v779 = vunpack.c.l.b16 %v72
    %v780 = vunpack.c.h.b16 %v72
    %v781 = vunpack.c.l.b16 %v73
    %v782 = vunpack.c.h.b16 %v73
    %v783 = vunpack.c.l.b16 %v74
    %v784 = vunpack.c.h.b16 %v74
    %v785 = vunpack.c.l.b16 %v75
    %v786 = vunpack.c.h.b16 %v75
    %v787 = vunpack.c.l.b16 %v76
    %v788 = vunpack.c.h.b16 %v76
    %v789 = vunpack.c.l.b16 %v77
    %v790 = vunpack.c.h.b16 %v77
    %v791 = vunpack.c.l.b16 %v78
    %v792 = vunpack.c.h.b16 %v78
    %v793 = vunpack.c.l.b16 %v79
    %v794 = vunpack.c.h.b16 %v79
    %v795 = vunpack.c.l.b16 %v80
    %v796 = vunpack.c.h.b16 %v80
    %v797 = vunpack.c.l.b16 %v81
    %v798 = vunpack.c.h.b16 %v81
    %v799 = vunpack.c.l.b16 %v82
    %v800 = vunpack.c.h.b16 %v82
    %v801 = vunpack.c.l.b16 %v83
    %v802 = vunpack.c.h.b16 %v83
    %v803 = vunpack.c.l.b16 %v84
    %v804 = vunpack.c.h.b16 %v84
    %v805 = vunpack.c.l.b16 %v85
    %v806 = vunpack.c.h.b16 %v85
    %v807 = vunpack.c.l.b16 %v86
    %v808 = vunpack.c.h.b16 %v86
    %v809 = vunpack.c.l.b16 %v87
    %v810 = vunpack.c.h.b16 %v87
    %v811 = vunpack.c.l.b16 %v88
    %v812 = vunpack.c.h.b16 %v88
    %v813 = vunpack.c.l.b16 %v89
    %v814 = vunpack.c.h.b16 %v89
    %v815 = vunpack.c.l.b16 %v90
    %v816 = vunpack.c.h.b16 %v90
    %v817 = vunpack.c.l.b16 %v91
    %v818 = vunpack.c.h.b16 %v91
    %v819 = vunpack.c.l.b16 %v92
    %v820 = vunpack.c.h.b16 %v92
    %v821 = vunpack.c.l.b16 %v93
    %v822 = vunpack.c.h.b16 %v93
    %v823 = vunpack.c.l.b16 %v94
    %v824 = vunpack.c.h.b16 %v94
    %v825 = vunpack.c.l.b16 %v95
    %v826 = vunpack.c.h.b16 %v95
    %v827 = vunpack.c.l.b16 %v96
    %v828 = vunpack.c.h.b16 %v96
    %v829 = vunpack.c.l.b16 %v97
    %v830 = vunpack.c.h.b16 %v97
    %v831 = vpack.c.b16 %v771, %v767
    %v832 = vpack.c.b16 %v772, %v768
    %v833 = vpack.c.b16 %v773, %v769
    %v834 = vpack.c.b16 %v774, %v770
    %v835 = vpack.c.b16 %v779, %v775
    %v836 = vpack.c.b16 %v780, %v776
    %v837 = vpack.c.b16 %v781, %v777
    %v838 = vpack.c.b16 %v782, %v778
    %v839 = vpack.c.b16 %v787, %v783
    %v840 = vpack.c.b16 %v788, %v784
    %v841 = vpack.c.b16 %v789, %v785
    %v842 = vpack.c.b16 %v790, %v786
    %v843 = vpack.c.b16 %v795, %v791
    %v844 = vpack.c.b16 %v796, %v792
    %v845 = vpack.c.b16 %v797, %v793
    %v846 = vpack.c.b16 %v798, %v794
    %v847 = vpack.c.b16 %v803, %v799
    %v848 = vpack.c.b16 %v804, %v800
    %v849 = vpack.c.b16 %v805, %v801
    %v850 = vpack.c.b16 %v806, %v802
    %v851 = vpack.c.b16 %v811, %v807
    %v852 = vpack.c.b16 %v812, %v808
    %v853 = vpack.c.b16 %v813, %v809
    %v854 = vpack.c.b16 %v814, %v810
    %v855 = vpack.c.b16 %v819, %v815
    %v856 = vpack.c.b16 %v820, %v816
    %v857 = vpack.c.b16 %v821, %v817
    %v858 = vpack.c.b16 %v822, %v818
    %v859 = vpack.c.b16 %v827, %v823
    %v860 = vpack.c.b16 %v828, %v824
    %v861 = vpack.c.b16 %v829, %v825
    %v862 = vpack.c.b16 %v830, %v826
    %895 = vmatprep.subr.bf16.mxu0 %v832
    %896 = vmatpush1.bf16.msra.mxu0 %v831
    %897 = vmatprep.subr.bf16.mxu0 %v836
    %898 = vmatpush1.bf16.msra.mxu0 %v835
    %899 = vmatprep.subr.bf16.mxu0 %v840
    %900 = vmatpush1.bf16.msra.mxu0 %v839
    %901 = vmatprep.subr.bf16.mxu0 %v844
    %902 = vmatpush1.bf16.msra.mxu0 %v843
    %903 = vmatprep.subr.bf16.mxu0 %v848
    %904 = vmatpush1.bf16.msra.mxu0 %v847
    %905 = vmatprep.subr.bf16.mxu0 %v852
    %906 = vmatpush1.bf16.msra.mxu0 %v851
    %907 = vmatprep.subr.bf16.mxu0 %v856
    %908 = vmatpush1.bf16.msra.mxu0 %v855
    %909 = vmatprep.subr.bf16.mxu0 %v860
    %910 = vmatpush1.bf16.msra.mxu0 %v859
    %911 = vmatprep.subr.bf16.mxu0 0
    %912 = vmatpush1.bf16.msra.mxu0 0
    %913 = vmatprep.subr.bf16.mxu0 0
    %914 = vmatpush1.bf16.msra.mxu0 0
    %915 = vmatprep.subr.bf16.mxu0 0
    %916 = vmatpush1.bf16.msra.mxu0 0
    %917 = vmatprep.subr.bf16.mxu0 0
    %918 = vmatpush1.bf16.msra.mxu0 0
    %919 = vmatprep.subr.bf16.mxu0 0
    %920 = vmatpush1.bf16.msra.mxu0 0
    %921 = vmatprep.subr.bf16.mxu0 0
    %922 = vmatpush1.bf16.msra.mxu0 0
    %923 = vmatprep.subr.bf16.mxu0 0
    %924 = vmatpush1.bf16.msra.mxu0 0
    %925 = vmatprep.subr.bf16.mxu0 0
    %926 = vmatpush1.bf16.msra.mxu0 0
    %927 = vmatprep.mubr.bf16.mxu0 0
    %928 = vmatmul.mubr.bf16.gmra.mrb[0].mxu0 %v734
    %v929 = vpop.f32.mrb[0].mxu0
    %v930 = vadd.f32 0.0, %v929
    %v931 = vpop.f32.mrb[0].mxu0
    %v932 = vadd.f32 0.0, %v931
    %v933 = vpop.f32.mrb[0].mxu0
    %v934 = vpop.f32.mrb[0].mxu0
    %935 = vdwg.mxu0
    %936 = vmatprep.subr.bf16.mxu0 %v834
    %937 = vmatpush1.bf16.msra.mxu0 %v833
    %938 = vmatprep.subr.bf16.mxu0 %v838
    %939 = vmatpush1.bf16.msra.mxu0 %v837
    %940 = vmatprep.subr.bf16.mxu0 %v842
    %941 = vmatpush1.bf16.msra.mxu0 %v841
    %942 = vmatprep.subr.bf16.mxu0 %v846
    %943 = vmatpush1.bf16.msra.mxu0 %v845
    %944 = vmatprep.subr.bf16.mxu0 %v850
    %945 = vmatpush1.bf16.msra.mxu0 %v849
    %946 = vmatprep.subr.bf16.mxu0 %v854
    %947 = vmatpush1.bf16.msra.mxu0 %v853
    %948 = vmatprep.subr.bf16.mxu0 %v858
    %949 = vmatpush1.bf16.msra.mxu0 %v857
    %950 = vmatprep.subr.bf16.mxu0 %v862
    %951 = vmatpush1.bf16.msra.mxu0 %v861
    %952 = vmatprep.subr.bf16.mxu0 0
    %953 = vmatpush1.bf16.msra.mxu0 0
    %954 = vmatprep.subr.bf16.mxu0 0
    %955 = vmatpush1.bf16.msra.mxu0 0
    %956 = vmatprep.subr.bf16.mxu0 0
    %957 = vmatpush1.bf16.msra.mxu0 0
    %958 = vmatprep.subr.bf16.mxu0 0
    %959 = vmatpush1.bf16.msra.mxu0 0
    %960 = vmatprep.subr.bf16.mxu0 0
    %961 = vmatpush1.bf16.msra.mxu0 0
    %962 = vmatprep.subr.bf16.mxu0 0
    %963 = vmatpush1.bf16.msra.mxu0 0
    %964 = vmatprep.subr.bf16.mxu0 0
    %965 = vmatpush1.bf16.msra.mxu0 0
    %966 = vmatprep.subr.bf16.mxu0 0
    %967 = vmatpush1.bf16.msra.mxu0 0
    %968 = vmatprep.mubr.bf16.mxu0 0
    %969 = vmatmul.mubr.bf16.gmra.mrb[0].mxu0 %v734
    %v970 = vpop.f32.mrb[0].mxu0
    %v971 = vadd.f32 0.0, %v970
    %v972 = vpop.f32.mrb[0].mxu0
    %v973 = vadd.f32 0.0, %v972
    %v974 = vpop.f32.mrb[0].mxu0
    %v975 = vpop.f32.mrb[0].mxu0
    %976 = vdwg.mxu0
    %v977 = vadd.f32 %v730, %v930
    %v978 = vadd.f32 %v731, %v932
    %v979 = vadd.f32 %v732, %v971
    %v980 = vadd.f32 %v733, %v973
    %s981 = scalar_lea.vmem %s3, 128
    %s982 = smul.addr %s725, 4
    %s983 = scalar_lea.vmem %s981, %s982
    %v984 = vld [vmem:[%s983] sm:$0xff]
    %v985 = vld [vmem:[%s983 + $0x8] sm:$0xff]
    %v986 = vunpack.c.l.bf16 %v984
    %v987 = vunpack.c.h.bf16 %v984
    %v988 = vunpack.c.l.bf16 %v985
    %v989 = vunpack.c.h.bf16 %v985
    %v990 = vld [vmem:[#allocation4] sm:$0xf]
    %v1023 = vunpack.c.l.b16 %v99
    %v1024 = vunpack.c.h.b16 %v99
    %v1025 = vunpack.c.l.b16 %v100
    %v1026 = vunpack.c.h.b16 %v100
    %v1027 = vunpack.c.l.b16 %v101
    %v1028 = vunpack.c.h.b16 %v101
    %v1029 = vunpack.c.l.b16 %v102
    %v1030 = vunpack.c.h.b16 %v102
    %v1031 = vunpack.c.l.b16 %v103
    %v1032 = vunpack.c.h.b16 %v103
    %v1033 = vunpack.c.l.b16 %v104
    %v1034 = vunpack.c.h.b16 %v104
    %v1035 = vunpack.c.l.b16 %v105
    %v1036 = vunpack.c.h.b16 %v105
    %v1037 = vunpack.c.l.b16 %v106
    %v1038 = vunpack.c.h.b16 %v106
    %v1039 = vunpack.c.l.b16 %v107
    %v1040 = vunpack.c.h.b16 %v107
    %v1041 = vunpack.c.l.b16 %v108
    %v1042 = vunpack.c.h.b16 %v108
    %v1043 = vunpack.c.l.b16 %v109
    %v1044 = vunpack.c.h.b16 %v109
    %v1045 = vunpack.c.l.b16 %v110
    %v1046 = vunpack.c.h.b16 %v110
    %v1047 = vunpack.c.l.b16 %v111
    %v1048 = vunpack.c.h.b16 %v111
    %v1049 = vunpack.c.l.b16 %v112
    %v1050 = vunpack.c.h.b16 %v112
    %v1051 = vunpack.c.l.b16 %v113
    %v1052 = vunpack.c.h.b16 %v113
    %v1053 = vunpack.c.l.b16 %v114
    %v1054 = vunpack.c.h.b16 %v114
    %v1055 = vunpack.c.l.b16 %v115
    %v1056 = vunpack.c.h.b16 %v115
    %v1057 = vunpack.c.l.b16 %v116
    %v1058 = vunpack.c.h.b16 %v116
    %v1059 = vunpack.c.l.b16 %v117
    %v1060 = vunpack.c.h.b16 %v117
    %v1061 = vunpack.c.l.b16 %v118
    %v1062 = vunpack.c.h.b16 %v118
    %v1063 = vunpack.c.l.b16 %v119
    %v1064 = vunpack.c.h.b16 %v119
    %v1065 = vunpack.c.l.b16 %v120
    %v1066 = vunpack.c.h.b16 %v120
    %v1067 = vunpack.c.l.b16 %v121
    %v1068 = vunpack.c.h.b16 %v121
    %v1069 = vunpack.c.l.b16 %v122
    %v1070 = vunpack.c.h.b16 %v122
    %v1071 = vunpack.c.l.b16 %v123
    %v1072 = vunpack.c.h.b16 %v123
    %v1073 = vunpack.c.l.b16 %v124
    %v1074 = vunpack.c.h.b16 %v124
    %v1075 = vunpack.c.l.b16 %v125
    %v1076 = vunpack.c.h.b16 %v125
    %v1077 = vunpack.c.l.b16 %v126
    %v1078 = vunpack.c.h.b16 %v126
    %v1079 = vunpack.c.l.b16 %v127
    %v1080 = vunpack.c.h.b16 %v127
    %v1081 = vunpack.c.l.b16 %v128
    %v1082 = vunpack.c.h.b16 %v128
    %v1083 = vunpack.c.l.b16 %v129
    %v1084 = vunpack.c.h.b16 %v129
    %v1085 = vunpack.c.l.b16 %v130
    %v1086 = vunpack.c.h.b16 %v130
    %v1087 = vpack.c.b16 %v1027, %v1023
    %v1088 = vpack.c.b16 %v1028, %v1024
    %v1089 = vpack.c.b16 %v1029, %v1025
    %v1090 = vpack.c.b16 %v1030, %v1026
    %v1091 = vpack.c.b16 %v1035, %v1031
    %v1092 = vpack.c.b16 %v1036, %v1032
    %v1093 = vpack.c.b16 %v1037, %v1033
    %v1094 = vpack.c.b16 %v1038, %v1034
    %v1095 = vpack.c.b16 %v1043, %v1039
    %v1096 = vpack.c.b16 %v1044, %v1040
    %v1097 = vpack.c.b16 %v1045, %v1041
    %v1098 = vpack.c.b16 %v1046, %v1042
    %v1099 = vpack.c.b16 %v1051, %v1047
    %v1100 = vpack.c.b16 %v1052, %v1048
    %v1101 = vpack.c.b16 %v1053, %v1049
    %v1102 = vpack.c.b16 %v1054, %v1050
    %v1103 = vpack.c.b16 %v1059, %v1055
    %v1104 = vpack.c.b16 %v1060, %v1056
    %v1105 = vpack.c.b16 %v1061, %v1057
    %v1106 = vpack.c.b16 %v1062, %v1058
    %v1107 = vpack.c.b16 %v1067, %v1063
    %v1108 = vpack.c.b16 %v1068, %v1064
    %v1109 = vpack.c.b16 %v1069, %v1065
    %v1110 = vpack.c.b16 %v1070, %v1066
    %v1111 = vpack.c.b16 %v1075, %v1071
    %v1112 = vpack.c.b16 %v1076, %v1072
    %v1113 = vpack.c.b16 %v1077, %v1073
    %v1114 = vpack.c.b16 %v1078, %v1074
    %v1115 = vpack.c.b16 %v1083, %v1079
    %v1116 = vpack.c.b16 %v1084, %v1080
    %v1117 = vpack.c.b16 %v1085, %v1081
    %v1118 = vpack.c.b16 %v1086, %v1082
    %1151 = vmatprep.subr.bf16.mxu0 %v1088
    %1152 = vmatpush1.bf16.msra.mxu0 %v1087
    %1153 = vmatprep.subr.bf16.mxu0 %v1092
    %1154 = vmatpush1.bf16.msra.mxu0 %v1091
    %1155 = vmatprep.subr.bf16.mxu0 %v1096
    %1156 = vmatpush1.bf16.msra.mxu0 %v1095
    %1157 = vmatprep.subr.bf16.mxu0 %v1100
    %1158 = vmatpush1.bf16.msra.mxu0 %v1099
    %1159 = vmatprep.subr.bf16.mxu0 %v1104
    %1160 = vmatpush1.bf16.msra.mxu0 %v1103
    %1161 = vmatprep.subr.bf16.mxu0 %v1108
    %1162 = vmatpush1.bf16.msra.mxu0 %v1107
    %1163 = vmatprep.subr.bf16.mxu0 %v1112
    %1164 = vmatpush1.bf16.msra.mxu0 %v1111
    %1165 = vmatprep.subr.bf16.mxu0 %v1116
    %1166 = vmatpush1.bf16.msra.mxu0 %v1115
    %1167 = vmatprep.subr.bf16.mxu0 0
    %1168 = vmatpush1.bf16.msra.mxu0 0
    %1169 = vmatprep.subr.bf16.mxu0 0
    %1170 = vmatpush1.bf16.msra.mxu0 0
    %1171 = vmatprep.subr.bf16.mxu0 0
    %1172 = vmatpush1.bf16.msra.mxu0 0
    %1173 = vmatprep.subr.bf16.mxu0 0
    %1174 = vmatpush1.bf16.msra.mxu0 0
    %1175 = vmatprep.subr.bf16.mxu0 0
    %1176 = vmatpush1.bf16.msra.mxu0 0
    %1177 = vmatprep.subr.bf16.mxu0 0
    %1178 = vmatpush1.bf16.msra.mxu0 0
    %1179 = vmatprep.subr.bf16.mxu0 0
    %1180 = vmatpush1.bf16.msra.mxu0 0
    %1181 = vmatprep.subr.bf16.mxu0 0
    %1182 = vmatpush1.bf16.msra.mxu0 0
    %1183 = vmatprep.mubr.bf16.mxu0 0
    %1184 = vmatmul.mubr.bf16.gmra.mrb[0].mxu0 %v990
    %v1185 = vpop.f32.mrb[0].mxu0
    %v1186 = vadd.f32 0.0, %v1185
    %v1187 = vpop.f32.mrb[0].mxu0
    %v1188 = vadd.f32 0.0, %v1187
    %v1189 = vpop.f32.mrb[0].mxu0
    %v1190 = vpop.f32.mrb[0].mxu0
    %1191 = vdwg.mxu0
    %1192 = vmatprep.subr.bf16.mxu0 %v1090
    %1193 = vmatpush1.bf16.msra.mxu0 %v1089
    %1194 = vmatprep.subr.bf16.mxu0 %v1094
    %1195 = vmatpush1.bf16.msra.mxu0 %v1093
    %1196 = vmatprep.subr.bf16.mxu0 %v1098
    %1197 = vmatpush1.bf16.msra.mxu0 %v1097
    %1198 = vmatprep.subr.bf16.mxu0 %v1102
    %1199 = vmatpush1.bf16.msra.mxu0 %v1101
    %1200 = vmatprep.subr.bf16.mxu0 %v1106
    %1201 = vmatpush1.bf16.msra.mxu0 %v1105
    %1202 = vmatprep.subr.bf16.mxu0 %v1110
    %1203 = vmatpush1.bf16.msra.mxu0 %v1109
    %1204 = vmatprep.subr.bf16.mxu0 %v1114
    %1205 = vmatpush1.bf16.msra.mxu0 %v1113
    %1206 = vmatprep.subr.bf16.mxu0 %v1118
    %1207 = vmatpush1.bf16.msra.mxu0 %v1117
    %1208 = vmatprep.subr.bf16.mxu0 0
    %1209 = vmatpush1.bf16.msra.mxu0 0
    %1210 = vmatprep.subr.bf16.mxu0 0
    %1211 = vmatpush1.bf16.msra.mxu0 0
    %1212 = vmatprep.subr.bf16.mxu0 0
    %1213 = vmatpush1.bf16.msra.mxu0 0
    %1214 = vmatprep.subr.bf16.mxu0 0
    %1215 = vmatpush1.bf16.msra.mxu0 0
    %1216 = vmatprep.subr.bf16.mxu0 0
    %1217 = vmatpush1.bf16.msra.mxu0 0
    %1218 = vmatprep.subr.bf16.mxu0 0
    %1219 = vmatpush1.bf16.msra.mxu0 0
    %1220 = vmatprep.subr.bf16.mxu0 0
    %1221 = vmatpush1.bf16.msra.mxu0 0
    %1222 = vmatprep.subr.bf16.mxu0 0
    %1223 = vmatpush1.bf16.msra.mxu0 0
    %1224 = vmatprep.mubr.bf16.mxu0 0
    %1225 = vmatmul.mubr.bf16.gmra.mrb[0].mxu0 %v990
    %v1226 = vpop.f32.mrb[0].mxu0
    %v1227 = vadd.f32 0.0, %v1226
    %v1228 = vpop.f32.mrb[0].mxu0
    %v1229 = vadd.f32 0.0, %v1228
    %v1230 = vpop.f32.mrb[0].mxu0
    %v1231 = vpop.f32.mrb[0].mxu0
    %1232 = vdwg.mxu0
    %v1233 = vadd.f32 %v986, %v1186
    %v1234 = vadd.f32 %v987, %v1188
    %v1235 = vadd.f32 %v988, %v1227
    %v1236 = vadd.f32 %v989, %v1229
    %v1237 = vld [vmem:[#allocation3] sm:$0xff]
    %v1238 = vxor.u32 %v977, 2147483648
    %v1239 = vmul.f32 %v1238, 1.442695
    %v1240 = vpow.pop %v1239
    %v1241 = vadd.f32 %v1240, 1.0
    %v1242 = vrcp.pop %v1241
    %v1243 = vmul.f32 1.0, %v1242
    %v1244 = vxor.u32 %v978, 2147483648
    %v1245 = vmul.f32 %v1244, 1.442695
    %v1246 = vpow.pop %v1245
    %v1247 = vadd.f32 %v1246, 1.0
    %v1248 = vrcp.pop %v1247
    %v1249 = vmul.f32 1.0, %v1248
    %v1250 = vtanh.pop %v979
    %v1251 = vxor.u32 %v980, 2147483648
    %v1252 = vmul.f32 %v1251, 1.442695
    %v1253 = vpow.pop %v1252
    %v1254 = vadd.f32 %v1253, 1.0
    %v1255 = vrcp.pop %v1254
    %v1256 = vmul.f32 1.0, %v1255
    %v1257 = vmul.f32 %v1249, %v1237
    %v1258 = vmul.f32 %v1243, %v1250
    %v1259 = vadd.f32 %v1257, %v1258
    %v1260 = vtanh.pop %v1259
    %v1261 = vmul.f32 %v1256, %v1260
    %v1262 = vpack.c.bf16 %v1261, %v1261
    %v1263 = vld [vmem:[#allocation5] sm:$0xff]
    %v1264 = vxor.u32 %v1233, 2147483648
    %v1265 = vmul.f32 %v1264, 1.442695
    %v1266 = vpow.pop %v1265
    %v1267 = vadd.f32 %v1266, 1.0
    %v1268 = vrcp.pop %v1267
    %v1269 = vmul.f32 1.0, %v1268
    %v1270 = vxor.u32 %v1234, 2147483648
    %v1271 = vmul.f32 %v1270, 1.442695
    %v1272 = vpow.pop %v1271
    %v1273 = vadd.f32 %v1272, 1.0
    %v1274 = vrcp.pop %v1273
    %v1275 = vmul.f32 1.0, %v1274
    %v1276 = vtanh.pop %v1235
    %v1277 = vxor.u32 %v1236, 2147483648
    %v1278 = vmul.f32 %v1277, 1.442695
    %v1279 = vpow.pop %v1278
    %v1280 = vadd.f32 %v1279, 1.0
    %v1281 = vrcp.pop %v1280
    %v1282 = vmul.f32 1.0, %v1281
    %v1283 = vmul.f32 %v1275, %v1263
    %v1284 = vmul.f32 %v1269, %v1276
    %v1285 = vadd.f32 %v1283, %v1284
    %v1286 = vtanh.pop %v1285
    %v1287 = vmul.f32 %v1282, %v1286
    %v1288 = vpack.c.bf16 %v1287, %v1287
    %1289 = vst [vmem:[#allocation2] sm:$0xf] %v1262
    %1290 = vst [vmem:[#allocation3] sm:$0xff] %v1259
    %1291 = vst [vmem:[#allocation4] sm:$0xf] %v1288
    %1292 = vst [vmem:[#allocation5] sm:$0xff] %v1285
    %s1293 = sadd.s32 %s32, %s717
    %v1294 = vstv %s1293
    %vm1295 = vcmp.lt.s32.totalorder %v1294, %v131
    %v1296 = vsel %vm1295, 1, 0
    %1297 = vset.pattern.permute.xlu0 0
    %1298 = vperm.xlu0 %1297, %v1296
    %v1299 = vpop.permute.xlu0 %1298
    %vm1300 = vcmp.eq.s32.totalorder %v1299, 1
    %vm1301 = vmpackc.low %vm1300, %vm1300
    %v1302 = vsel %vm1301, %v1262, 0
    %v1303 = vsel %vm1301, %v1288, 0
    %s1304 = smul.addr %s723, 4
    %s1305 = scalar_lea.vmem %s5, %s1304
    %1306 = vst [vmem:[%s1305] sm:$0xf] %v1302
    %s1307 = scalar_lea.vmem %s5, 32
    %s1308 = smul.addr %s723, 4
    %s1309 = scalar_lea.vmem %s1307, %s1308
    %1310 = vst [vmem:[%s1309] sm:$0xf] %v1303
  $region41: #{elmo_lstm_encoder_forward.7} parent=0 // loop_footer
    %s719 = sadd.s32 %s717, 1
  $region42: #{elmo_lstm_encoder_forward.7} parent=0 // loop_footer_branch
    %716 = sbr.rel target = $region38
  $region43: #{elmo_lstm_encoder_forward.7} parent=0 // loop_exit
    _
  // Predicated region
  $region44: #{elmo_lstm_encoder_forward.7} parent=0 // pred_check
    _
  $region45: #{elmo_lstm_encoder_forward.7} parent=0 // pred_check_branch
    %1312 = sbr.rel (0) target = $region47
  $region46: #{elmo_lstm_encoder_forward.7} parent=0 // pred_region
    _
  $region47: #{elmo_lstm_encoder_forward.7} parent=0 // pred_fallthru
    _
  // Predicated region
  $region48: #{elmo_lstm_encoder_forward.7} parent=0 // pred_check
    _
  $region49: #{elmo_lstm_encoder_forward.7} parent=0 // pred_check_branch
    %1314 = sbr.rel (0) target = $region51
  $region50: #{elmo_lstm_encoder_forward.7} parent=0 // pred_region
    _
  $region51: #{elmo_lstm_encoder_forward.7} parent=0 // pred_fallthru
    _

</llo_original>
